<compile_context>
chip_gen: v6e
topology: v6e:2x2x1
jax: 0.10.0
libtpu: 0.0.40
codegen_flags: <defaults>
</compile_context>

<pallas_src>
import functools

import jax
import jax.numpy as jnp
from jax.experimental import pallas as pl
from jax.experimental.pallas import tpu as pltpu

NUM_TARGETS = 50   # the reference loops over 50 target slots per image
GT_CHUNK = 8       # GT slots per inner step (8 -> full 8-sublane vregs)


def _round_up(x, m):
    return ((x + m - 1) // m) * m


def _anchor_tiling(n_anchors, max_tile):
    """Largest lane tile (multiple of 128, <= max_tile) and padded extent."""
    tile = min(max(128, (max_tile // 128) * 128), _round_up(n_anchors, 128))
    padded = _round_up(n_anchors, tile)
    return padded, tile


def _pad_last(x, n_pad):
    if x.shape[-1] == n_pad:
        return x
    pads = [(0, 0)] * x.ndim
    pads[-1] = (0, n_pad - x.shape[-1])
    return jnp.pad(x, pads)


# ---------------------------------------------------------------------------
# Pallas kernel 1: max IoU of every predicted box against every valid GT box.
# Replaces the `cur_ious = max(cur_ious, bbox_iou(pred, gt))` loop.
#   pred_ref: (1, 4, TILE)      lane-dense [px, py, pw, ph] for one batch row
#   gt_ref:   (1, 56, 6)        [xlo, xhi, ylo, yhi, area, valid]  (tiny)
#   out_ref:  (1, 1, TILE)      max IoU per anchor
# ---------------------------------------------------------------------------
def _iou_max_kernel(pred_ref, gt_ref, out_ref, *, gt_chunk):
    _, _, ta = pred_ref.shape
    px = pred_ref[:, 0:1, :]            # (1, 1, TA)
    py = pred_ref[:, 1:2, :]
    pw = pred_ref[:, 2:3, :]
    ph = pred_ref[:, 3:4, :]
    # chunk-invariant pred corners / area hoisted above the GT loop
    px_lo = px - 0.5 * pw
    px_hi = px + 0.5 * pw
    py_lo = py - 0.5 * ph
    py_hi = py + 0.5 * ph
    p_area = pw * ph

    cur = jnp.zeros((1, 1, ta), jnp.float32)
    n_slots = gt_ref.shape[1]
    for c0 in range(0, n_slots, gt_chunk):
        sl = gt_ref[:, c0:c0 + gt_chunk, :]        # (1, 8, 6)
        gxl = sl[:, :, 0:1]                        # (1, 8, 1) -> lane broadcast
        gxh = sl[:, :, 1:2]
        gyl = sl[:, :, 2:3]
        gyh = sl[:, :, 3:4]
        ga = sl[:, :, 4:5]
        vd = sl[:, :, 5:6]
        # TODO(synk): bbox_iou was not provided with the module; assuming the
        # standard YOLO center-format (cx, cy, w, h) IoU with xywh=True.
        iw = jnp.maximum(jnp.minimum(px_hi, gxh) - jnp.maximum(px_lo, gxl), 0.0)
        ih = jnp.maximum(jnp.minimum(py_hi, gyh) - jnp.maximum(py_lo, gyl), 0.0)
        inter = iw * ih                            # (1, 8, TA)
        union = p_area + ga - inter
        iou = inter / jnp.maximum(union, 1e-12)    # exact divide (threshold-safe)
        iou = jnp.where(vd > 0.0, iou, 0.0)
        cur = jnp.maximum(cur, jnp.max(iou, axis=1, keepdims=True))
    out_ref[...] = cur                             # cur_ious starts at 0


def iou_max_pallas(boxes_t, gt_pack, max_tile):
    """boxes_t: (nB, 4, nAnch) f32, gt_pack: (nB, 56, 6) f32 -> (nB, nAnch)."""
    nB, _, n_anch = boxes_t.shape
    n_slots = gt_pack.shape[1]
    a_pad, tile = _anchor_tiling(n_anch, max_tile)
    # bound the (GT_CHUNK, tile) live intermediates so they stay in vregs
    while tile > 128 and GT_CHUNK * tile > 8192:
        tile -= 128
    a_pad = _round_up(n_anch, tile)
    boxes_p = _pad_last(boxes_t, a_pad)
    out = pl.pallas_call(
        functools.partial(_iou_max_kernel, gt_chunk=GT_CHUNK),
        out_shape=jax.ShapeDtypeStruct((nB, 1, a_pad), jnp.float32),
        grid=(nB, a_pad // tile),
        in_specs=[pl.BlockSpec((1, 4, tile), lambda b, a: (b, 0, a)),
                  pl.BlockSpec((1, n_slots, 6), lambda b, a: (b, 0, 0))],
        out_specs=pl.BlockSpec((1, 1, tile), lambda b, a: (b, 0, a)),
        compiler_params=pltpu.CompilerParams(
            dimension_semantics=("parallel", "parallel")),
    )(boxes_p, gt_pack)
    return out[:, 0, :n_anch]


# ---------------------------------------------------------------------------
# Pallas kernel 2: per-scale loss, tiled over anchors (lane dim), one
# lane-dense (1, 1, tile) partial per tile (grid is parallel; wrapper sums).
#   coord_ref: (nB, 8, TILE)   [px, py, pw, ph, tx, ty, tw, th]
#   row_ref:   (nB, 4, TILE)   [conf, tconf, coord_mask, conf_mask]
#   cls_ref:   (nB, nC, TILE)  class probabilities
# Partial = 0.5*sum(((p-t)*coord_mask)^2) + 0.5*sum(((conf-tconf)*conf_mask)^2)
#           - sum(max(log(1-c), -100))           (BCE base; one-hot correction
#                                                 is added back in JAX glue)
# ---------------------------------------------------------------------------
def _loss_kernel(coord_ref, row_ref, cls_ref, out_ref, *, cls_chunk):
    coords = coord_ref[...]                             # (nB, 8, TA)
    rows = row_ref[...]                                 # (nB, 4, TA)
    cm = rows[:, 2:3, :]                                # coord_mask (nB,1,TA)
    d = (coords[:, 0:4, :] - coords[:, 4:8, :]) * cm    # (nB, 4, TA)
    dc = (rows[:, 0:1, :] - rows[:, 1:2, :]) * rows[:, 3:4, :]   # (nB, 1, TA)
    acc = jnp.sum(d * d, axis=(0, 1), keepdims=True)    # (1, 1, TA)
    acc = acc + jnp.sum(dc * dc, axis=(0, 1), keepdims=True)
    acc = 0.5 * acc

    # class BCE base (-sum log(1-c)); chunk the class axis to bound temporaries
    n_cls = cls_ref.shape[1]
    for c0 in range(0, n_cls, cls_chunk):
        c1 = min(c0 + cls_chunk, n_cls)
        c = cls_ref[:, c0:c1, :]                        # (nB, <=8, TA)
        l1c = jnp.maximum(jnp.log(1.0 - c), -100.0)     # BCELoss clamps at -100
        acc = acc - jnp.sum(l1c, axis=(0, 1), keepdims=True)

    out_ref[...] = acc                                  # lane-dense partial


def scale_loss_pallas(coord_slab, row_slab, cls_slab, max_tile):
    nB, _, n_anch = coord_slab.shape
    n_cls = cls_slab.shape[1]
    a_pad, tile = _anchor_tiling(n_anch, max_tile)
    # keep the double-buffered input working set comfortably inside scoped VMEM
    vmem_budget = 12 * 1024 * 1024
    while tile > 128 and 2 * 4 * nB * (12 + n_cls) * tile > vmem_budget:
        tile -= 128
    a_pad = _round_up(n_anch, tile)
    n_tiles = a_pad // tile
    # zero padding contributes 0 to every term (masks and cls pad to 0)
    coord_p = _pad_last(coord_slab, a_pad).astype(jnp.float32)
    row_p = _pad_last(row_slab, a_pad).astype(jnp.float32)
    cls_p = _pad_last(cls_slab, a_pad).astype(jnp.float32)
    out = pl.pallas_call(
        functools.partial(_loss_kernel, cls_chunk=8),
        out_shape=jax.ShapeDtypeStruct((n_tiles, 1, tile), jnp.float32),
        grid=(n_tiles,),
        in_specs=[pl.BlockSpec((nB, 8, tile), lambda a: (0, 0, a)),
                  pl.BlockSpec((nB, 4, tile), lambda a: (0, 0, a)),
                  pl.BlockSpec((nB, n_cls, tile), lambda a: (0, 0, a))],
        out_specs=pl.BlockSpec((1, 1, tile), lambda a: (a, 0, 0)),
        compiler_params=pltpu.CompilerParams(dimension_semantics=("parallel",)),
    )(coord_p, row_p, cls_p)
    return jnp.sum(out)


# ---------------------------------------------------------------------------
# build_targets (seen < 12800, anchor_step == 2 path) -- batched JAX glue +
# the Pallas IoU kernel.  Returns the target tensors plus the scalar BCE
# correction that replaces the one-hot tcls.
# ---------------------------------------------------------------------------
def _iou_xywh(x1, y1, w1, h1, x2, y2, w2, h2):
    iw = jnp.maximum(jnp.minimum(x1 + w1 / 2, x2 + w2 / 2)
                     - jnp.maximum(x1 - w1 / 2, x2 - w2 / 2), 0.0)
    ih = jnp.maximum(jnp.minimum(y1 + h1 / 2, y2 + h2 / 2)
                     - jnp.maximum(y1 - h1 / 2, y2 - h2 / 2), 0.0)
    inter = iw * ih
    union = w1 * h1 + w2 * h2 - inter
    return inter / jnp.maximum(union, 1e-12)


def build_targets_jax(boxes_t, cls_t, target, anchors, nA, nC, nH, nW,
                      noobject_scale, object_scale, sil_thresh, max_anchor_tile):
    """boxes_t: (nB, 4, nAnchors), cls_t: (nB, nC, nAnchors) channel-first."""
    nB, _, nAnchors = boxes_t.shape
    tgt = target.reshape(nB, NUM_TARGETS, 5)
    cls_id = tgt[:, :, 0].astype(jnp.int32)
    gx = tgt[:, :, 1] * nW
    gy = tgt[:, :, 2] * nH
    gw = tgt[:, :, 3] * nW
    gh = tgt[:, :, 4] * nH
    # the reference `break`s on the first zero x -> validity is a cumprod
    valid = jnp.cumprod((tgt[:, :, 1] != 0).astype(jnp.float32), axis=1)

    # GT pack for the IoU kernel: precomputed corners/areas + validity, padded
    # so GT_CHUNK divides the slot axis (padded rows have valid=0).
    gt_pack = jnp.stack([gx - 0.5 * gw, gx + 0.5 * gw,
                         gy - 0.5 * gh, gy + 0.5 * gh,
                         gw * gh, valid], axis=-1)                 # (nB, 50, 6)
    n_slots = _round_up(NUM_TARGETS, GT_CHUNK)
    gt_pack = jnp.pad(gt_pack, ((0, 0), (0, n_slots - NUM_TARGETS), (0, 0)))

    # --- hot path in Pallas: max IoU of every predicted box vs every GT box --
    max_iou = iou_max_pallas(boxes_t.astype(jnp.float32),
                             gt_pack.astype(jnp.float32), max_anchor_tile)

    conf_mask = jnp.where(max_iou > sil_thresh, 0.0, jnp.float32(noobject_scale))
    # seen(=False) < 12800 and anchor_step == 2 branch
    tx = jnp.full((nB, nAnchors), 0.5, jnp.float32)
    ty = jnp.full((nB, nAnchors), 0.5, jnp.float32)
    tw = jnp.zeros((nB, nAnchors), jnp.float32)
    th = jnp.zeros((nB, nAnchors), jnp.float32)
    coord_mask = jnp.ones((nB, nAnchors), jnp.float32)
    tconf = jnp.zeros((nB, nAnchors), jnp.float32)

    # best anchor per GT: IoU of (0,0,gw,gh) vs (0,0,aw,ah); argmax == strict
    # ">" (keeps the first maximum, like the reference loop).
    anc = jnp.asarray(anchors, jnp.float32).reshape(nA, 2)
    aw, ah = anc[:, 0], anc[:, 1]
    inter_a = (jnp.minimum(gw[..., None], aw[None, None, :])
               * jnp.minimum(gh[..., None], ah[None, None, :]))    # (nB, 50, nA)
    union_a = (gw * gh)[..., None] + (aw * ah)[None, None, :] - inter_a
    best_n = jnp.argmax(inter_a / jnp.maximum(union_a, 1e-12), axis=-1)
    gi = jnp.floor(gx).astype(jnp.int32)
    gj = jnp.floor(gy).astype(jnp.int32)
    best_idx = nA * (nW * gi + gj) + best_n.astype(jnp.int32)      # (nB, 50)

    t_idx = jnp.arange(NUM_TARGETS)
    vb = valid > 0
    in_range = (best_idx >= 0) & (best_idx < nAnchors)
    # sequential "last write wins": drop GT t if a later valid GT hits the
    # same best_idx in the same image.
    later_same = ((best_idx[:, None, :] == best_idx[:, :, None])
                  & (t_idx[None, None, :] > t_idx[None, :, None])
                  & vb[:, None, :])
    write = vb & in_range & ~jnp.any(later_same, axis=2)           # (nB, 50)

    # one batched scatter per tensor via flat indices (mode='drop')
    b_off = jnp.arange(nB, dtype=jnp.int32)[:, None] * nAnchors
    sentinel = nB * nAnchors
    flat_idx = jnp.where(write, b_off + best_idx, sentinel)

    def scat(base, vals):
        return (base.reshape(-1).at[flat_idx].set(vals, mode='drop')
                .reshape(nB, nAnchors))

    conf_mask = scat(conf_mask,
                     jnp.full((nB, NUM_TARGETS), float(object_scale), jnp.float32))
    tx = scat(tx, tgt[:, :, 1])
    ty = scat(ty, tgt[:, :, 2])
    tw = scat(tw, tgt[:, :, 3])
    th = scat(th, tgt[:, :, 4])
    # coord_mask is already all-ones in this branch; the reference scatter of
    # 1s is a no-op.

    # tconf = bbox_iou(gt_box_in_grid_units, pred_box/reso) at the matched anchor
    bi_c = jnp.clip(best_idx, 0, nAnchors - 1)
    pb = jnp.take_along_axis(
        boxes_t, jnp.broadcast_to(bi_c[:, None, :], (nB, 4, NUM_TARGETS)), axis=2)
    iou_best = _iou_xywh(gx, gy, gw, gh, pb[:, 0], pb[:, 1], pb[:, 2], pb[:, 3])
    tconf = scat(tconf, iou_best)

    # BCE correction replacing the materialized one-hot tcls: each UNIQUE
    # matched (b, anchor, class) position contributes  log(1-c_k) - log(c_k)
    # on top of the in-kernel "-sum log(1-c)" base.  (The reference ORs
    # one-hots, so duplicates of the same position count once.)
    earlier_same_pos = ((best_idx[:, None, :] == best_idx[:, :, None])
                        & (cls_id[:, None, :] == cls_id[:, :, None])
                        & (t_idx[None, None, :] < t_idx[None, :, None])
                        & vb[:, None, :])
    count = vb & in_range & ~jnp.any(earlier_same_pos, axis=2)     # (nB, 50)
    cid_c = jnp.clip(cls_id, 0, nC - 1)
    c_k = jnp.take_along_axis(cls_t.reshape(nB, -1),
                              cid_c * nAnchors + bi_c, axis=1)     # (nB, 50)
    lc = jnp.maximum(jnp.log(c_k), -100.0)
    l1c = jnp.maximum(jnp.log(1.0 - c_k), -100.0)
    bce_correction = jnp.sum(jnp.where(count, l1c - lc, 0.0))

    return coord_mask, conf_mask, tx, ty, tw, th, tconf, bce_correction


# ---------------------------------------------------------------------------
# V3Loss.forward
# ---------------------------------------------------------------------------
def v3_loss_forward(output, target, *, num_classes, anchors, reso, strides,
                    max_anchor_tile=512):
    nA = 3
    nC = num_classes
    strides = sorted(strides, reverse=True)
    split = 0
    total = jnp.float32(0.0)
    for i, stride in enumerate(strides):
        nH = nW = reso // stride
        nAnchors = nH * nW * nA
        # one transpose to a lane-dense (channel-first) slab per scale
        sl_t = jnp.transpose(output[:, split:split + nAnchors, :], (0, 2, 1))
        split += nAnchors
        boxes_t = sl_t[:, 0:4, :] * (1.0 / reso)   # scale_split_output (nB,4,nAnch)
        conf_t = sl_t[:, 5, :]                     # reference: conf = output[...,5]
        cls_t = sl_t[:, 5:, :]                     # reference: cls  = output[...,5:]

        (coord_mask, conf_mask, tx, ty, tw, th, tconf,
         bce_corr) = build_targets_jax(
            boxes_t, cls_t, target, anchors[i], nA, nC, nH, nW,
            noobject_scale=5, object_scale=1, sil_thresh=0.6,
            max_anchor_tile=max_anchor_tile)

        # pack the loss-kernel inputs: 3 lane-dense slabs per anchor tile
        coord_slab = jnp.concatenate(
            [boxes_t, jnp.stack([tx, ty, tw, th], axis=1)], axis=1)   # (nB,8,A)
        row_slab = jnp.stack([conf_t, tconf, coord_mask, conf_mask],
                             axis=1)                                  # (nB,4,A)
        # coord_scale = class_scale = 1; MSE/2 terms + BCE base in the kernel,
        # plus the tiny glue-side BCE one-hot correction.
        total = total + scale_loss_pallas(coord_slab, row_slab, cls_t,
                                          max_anchor_tile) + bce_corr
    return total


if __name__ == "__main__":
    nB, nC, reso = 2, 3, 64
    strides = [8, 16]                 # module sorts reverse -> [16, 8]
    anchors = [[10.0, 13.0, 16.0, 30.0, 33.0, 23.0],     # stride 16 scale
               [10.0, 14.0, 23.0, 27.0, 37.0, 58.0]]     # stride 8 scale
    nA = 3
    total_anchors = sum((reso // s) ** 2 * nA
                        for s in sorted(strides, reverse=True))   # 48 + 192 = 240

    key = jax.random.PRNGKey(0)
    k1, k2, k3, k4 = jax.random.split(key, 4)
    xy = jax.random.uniform(k1, (nB, total_anchors, 2), jnp.float32, 0.0, reso)
    wh = jax.random.uniform(k2, (nB, total_anchors, 2), jnp.float32, 2.0, reso / 2)
    obj = jax.random.normal(k3, (nB, total_anchors, 1), jnp.float32)
    clsp = jax.nn.sigmoid(jax.random.normal(k4, (nB, total_anchors, nC), jnp.float32))
    output = jnp.concatenate([xy, wh, obj, clsp], axis=-1)    # (2, 240, 8)

    # targets: 50 * (class, x, y, w, h), zero-padded after the last object
    objs = [
        [(0, 0.30, 0.40, 0.20, 0.30), (1, 0.65, 0.55, 0.35, 0.25),
         (2, 0.15, 0.80, 0.10, 0.15)],
        [(1, 0.50, 0.50, 0.40, 0.40), (2, 0.75, 0.25, 0.20, 0.20)],
    ]
    rows = []
    for b in range(nB):
        row = [0.0] * (NUM_TARGETS * 5)
        for t, (c, x, y, w, h) in enumerate(objs[b]):
            row[t * 5:(t + 1) * 5] = [float(c), x, y, w, h]
        rows.append(row)
    target = jnp.asarray(rows, jnp.float32)                  # (2, 250)

    # max_anchor_tile=128 exercises multi-tile grids (192 anchors -> 2 tiles)
    # on the small demo; real YOLO sizes would use the 512 default.
    loss_fn = jax.jit(functools.partial(
        v3_loss_forward, num_classes=nC, anchors=anchors, reso=reso,
        strides=strides, max_anchor_tile=128))
    loss = loss_fn(output, target)
    jax.block_until_ready(loss)
    assert loss.shape == () and bool(jnp.isfinite(loss))
    print("KERNEL_OK")
</pallas_src>

<mosaic_0001>
module attributes {stable_mosaic.version = 11 : i64} {
  func.func @_iou_max_kernel(%arg0: i32, %arg1: i32, %arg2: memref<1x4x128xf32, #tpu.memory_space<vmem>>, %arg3: memref<1x56x6xf32, #tpu.memory_space<vmem>>, %arg4: memref<1x1x128xf32, #tpu.memory_space<vmem>>) attributes {dimension_semantics = [#tpu.dimension_semantics<parallel>, #tpu.dimension_semantics<parallel>], iteration_bounds = array<i64: 2, 2>, scalar_prefetch = 0 : i64, scratch_operands = 0 : i64, tpu.core_type = #tpu.core_type<tc>, window_params = [{transform_indices = @transform_0, window_bounds = array<i64: 1, 4, 128>}, {transform_indices = @transform_1, window_bounds = array<i64: 1, 56, 6>}, {transform_indices = @transform_2, window_bounds = array<i64: 1, 1, 128>}]} {
    %c0 = arith.constant 0 : index
    %c0_0 = arith.constant 0 : index
    %c0_1 = arith.constant 0 : index
    %0 = vector.load %arg2[%c0, %c0_0, %c0_1] : memref<1x4x128xf32, #tpu.memory_space<vmem>>, vector<1x1x128xf32>
    %c0_2 = arith.constant 0 : index
    %c1 = arith.constant 1 : index
    %c0_3 = arith.constant 0 : index
    %1 = vector.load %arg2[%c0_2, %c1, %c0_3] : memref<1x4x128xf32, #tpu.memory_space<vmem>>, vector<1x1x128xf32>
    %c0_4 = arith.constant 0 : index
    %c2 = arith.constant 2 : index
    %c0_5 = arith.constant 0 : index
    %2 = vector.load %arg2[%c0_4, %c2, %c0_5] : memref<1x4x128xf32, #tpu.memory_space<vmem>>, vector<1x1x128xf32>
    %c0_6 = arith.constant 0 : index
    %c3 = arith.constant 3 : index
    %c0_7 = arith.constant 0 : index
    %3 = vector.load %arg2[%c0_6, %c3, %c0_7] : memref<1x4x128xf32, #tpu.memory_space<vmem>>, vector<1x1x128xf32>
    %cst = arith.constant 5.000000e-01 : f32
    %4 = vector.broadcast %cst : f32 to vector<1x1x128xf32>
    %5 = arith.mulf %4, %2 : vector<1x1x128xf32>
    %6 = arith.subf %0, %5 : vector<1x1x128xf32>
    %cst_8 = arith.constant 5.000000e-01 : f32
    %7 = vector.broadcast %cst_8 : f32 to vector<1x1x128xf32>
    %8 = arith.mulf %7, %2 : vector<1x1x128xf32>
    %9 = arith.addf %0, %8 : vector<1x1x128xf32>
    %cst_9 = arith.constant 5.000000e-01 : f32
    %10 = vector.broadcast %cst_9 : f32 to vector<1x1x128xf32>
    %11 = arith.mulf %10, %3 : vector<1x1x128xf32>
    %12 = arith.subf %1, %11 : vector<1x1x128xf32>
    %cst_10 = arith.constant 5.000000e-01 : f32
    %13 = vector.broadcast %cst_10 : f32 to vector<1x1x128xf32>
    %14 = arith.mulf %13, %3 : vector<1x1x128xf32>
    %15 = arith.addf %1, %14 : vector<1x1x128xf32>
    %16 = arith.mulf %2, %3 : vector<1x1x128xf32>
    %cst_11 = arith.constant 0.000000e+00 : f32
    %17 = vector.broadcast %cst_11 : f32 to vector<1x1x128xf32>
    %c0_12 = arith.constant 0 : index
    %c0_13 = arith.constant 0 : index
    %c0_14 = arith.constant 0 : index
    %18 = vector.load %arg3[%c0_12, %c0_13, %c0_14] : memref<1x56x6xf32, #tpu.memory_space<vmem>>, vector<1x8x6xf32>
    %19 = vector.extract_strided_slice %18 {offsets = [0, 0, 0], sizes = [1, 8, 1], strides = [1, 1, 1]} : vector<1x8x6xf32> to vector<1x8x1xf32>
    %20 = vector.extract_strided_slice %18 {offsets = [0, 0, 1], sizes = [1, 8, 1], strides = [1, 1, 1]} : vector<1x8x6xf32> to vector<1x8x1xf32>
    %21 = vector.extract_strided_slice %18 {offsets = [0, 0, 2], sizes = [1, 8, 1], strides = [1, 1, 1]} : vector<1x8x6xf32> to vector<1x8x1xf32>
    %22 = vector.extract_strided_slice %18 {offsets = [0, 0, 3], sizes = [1, 8, 1], strides = [1, 1, 1]} : vector<1x8x6xf32> to vector<1x8x1xf32>
    %23 = vector.extract_strided_slice %18 {offsets = [0, 0, 4], sizes = [1, 8, 1], strides = [1, 1, 1]} : vector<1x8x6xf32> to vector<1x8x1xf32>
    %24 = vector.extract_strided_slice %18 {offsets = [0, 0, 5], sizes = [1, 8, 1], strides = [1, 1, 1]} : vector<1x8x6xf32> to vector<1x8x1xf32>
    %25 = vector.broadcast %9 : vector<1x1x128xf32> to vector<1x8x128xf32>
    %26 = vector.broadcast %20 : vector<1x8x1xf32> to vector<1x8x128xf32>
    %27 = arith.minimumf %25, %26 : vector<1x8x128xf32>
    %28 = vector.broadcast %6 : vector<1x1x128xf32> to vector<1x8x128xf32>
    %29 = vector.broadcast %19 : vector<1x8x1xf32> to vector<1x8x128xf32>
    %30 = arith.maximumf %28, %29 : vector<1x8x128xf32>
    %31 = arith.subf %27, %30 : vector<1x8x128xf32>
    %cst_15 = arith.constant 0.000000e+00 : f32
    %32 = vector.broadcast %cst_15 : f32 to vector<1x8x128xf32>
    %33 = arith.maximumf %31, %32 : vector<1x8x128xf32>
    %34 = vector.broadcast %15 : vector<1x1x128xf32> to vector<1x8x128xf32>
    %35 = vector.broadcast %22 : vector<1x8x1xf32> to vector<1x8x128xf32>
    %36 = arith.minimumf %34, %35 : vector<1x8x128xf32>
    %37 = vector.broadcast %12 : vector<1x1x128xf32> to vector<1x8x128xf32>
    %38 = vector.broadcast %21 : vector<1x8x1xf32> to vector<1x8x128xf32>
    %39 = arith.maximumf %37, %38 : vector<1x8x128xf32>
    %40 = arith.subf %36, %39 : vector<1x8x128xf32>
    %cst_16 = arith.constant 0.000000e+00 : f32
    %41 = vector.broadcast %cst_16 : f32 to vector<1x8x128xf32>
    %42 = arith.maximumf %40, %41 : vector<1x8x128xf32>
    %43 = arith.mulf %33, %42 : vector<1x8x128xf32>
    %44 = vector.broadcast %16 : vector<1x1x128xf32> to vector<1x8x128xf32>
    %45 = vector.broadcast %23 : vector<1x8x1xf32> to vector<1x8x128xf32>
    %46 = arith.addf %44, %45 : vector<1x8x128xf32>
    %47 = arith.subf %46, %43 : vector<1x8x128xf32>
    %cst_17 = arith.constant 9.99999996E-13 : f32
    %48 = vector.broadcast %cst_17 : f32 to vector<1x8x128xf32>
    %49 = arith.maximumf %47, %48 : vector<1x8x128xf32>
    %50 = arith.divf %43, %49 : vector<1x8x128xf32>
    %cst_18 = arith.constant 0.000000e+00 : f32
    %51 = vector.broadcast %cst_18 : f32 to vector<1x8x1xf32>
    %52 = arith.cmpf ogt, %24, %51 : vector<1x8x1xf32>
    %cst_19 = arith.constant 0.000000e+00 : f32
    %53 = vector.shape_cast %52 : vector<1x8x1xi1> to vector<1x8x1xi1>
    %54 = vector.broadcast %53 : vector<1x8x1xi1> to vector<1x8x128xi1>
    %55 = vector.broadcast %cst_19 : f32 to vector<1x8x128xf32>
    %56 = arith.select %54, %50, %55 : vector<1x8x128xi1>, vector<1x8x128xf32>
    %cst_20 = arith.constant dense<0xFF800000> : vector<1x128xf32>
    %57 = vector.multi_reduction <maximumf>, %56, %cst_20 [1] : vector<1x8x128xf32> to vector<1x128xf32>
    %58 = vector.shape_cast %57 : vector<1x128xf32> to vector<1x1x128xf32>
    %59 = arith.maximumf %17, %58 : vector<1x1x128xf32>
    %c0_21 = arith.constant 0 : index
    %c8 = arith.constant 8 : index
    %c0_22 = arith.constant 0 : index
    %60 = vector.load %arg3[%c0_21, %c8, %c0_22] : memref<1x56x6xf32, #tpu.memory_space<vmem>>, vector<1x8x6xf32>
    %61 = vector.extract_strided_slice %60 {offsets = [0, 0, 0], sizes = [1, 8, 1], strides = [1, 1, 1]} : vector<1x8x6xf32> to vector<1x8x1xf32>
    %62 = vector.extract_strided_slice %60 {offsets = [0, 0, 1], sizes = [1, 8, 1], strides = [1, 1, 1]} : vector<1x8x6xf32> to vector<1x8x1xf32>
    %63 = vector.extract_strided_slice %60 {offsets = [0, 0, 2], sizes = [1, 8, 1], strides = [1, 1, 1]} : vector<1x8x6xf32> to vector<1x8x1xf32>
    %64 = vector.extract_strided_slice %60 {offsets = [0, 0, 3], sizes = [1, 8, 1], strides = [1, 1, 1]} : vector<1x8x6xf32> to vector<1x8x1xf32>
    %65 = vector.extract_strided_slice %60 {offsets = [0, 0, 4], sizes = [1, 8, 1], strides = [1, 1, 1]} : vector<1x8x6xf32> to vector<1x8x1xf32>
    %66 = vector.extract_strided_slice %60 {offsets = [0, 0, 5], sizes = [1, 8, 1], strides = [1, 1, 1]} : vector<1x8x6xf32> to vector<1x8x1xf32>
    %67 = vector.broadcast %9 : vector<1x1x128xf32> to vector<1x8x128xf32>
    %68 = vector.broadcast %62 : vector<1x8x1xf32> to vector<1x8x128xf32>
    %69 = arith.minimumf %67, %68 : vector<1x8x128xf32>
    %70 = vector.broadcast %6 : vector<1x1x128xf32> to vector<1x8x128xf32>
    %71 = vector.broadcast %61 : vector<1x8x1xf32> to vector<1x8x128xf32>
    %72 = arith.maximumf %70, %71 : vector<1x8x128xf32>
    %73 = arith.subf %69, %72 : vector<1x8x128xf32>
    %cst_23 = arith.constant 0.000000e+00 : f32
    %74 = vector.broadcast %cst_23 : f32 to vector<1x8x128xf32>
    %75 = arith.maximumf %73, %74 : vector<1x8x128xf32>
    %76 = vector.broadcast %15 : vector<1x1x128xf32> to vector<1x8x128xf32>
    %77 = vector.broadcast %64 : vector<1x8x1xf32> to vector<1x8x128xf32>
    %78 = arith.minimumf %76, %77 : vector<1x8x128xf32>
    %79 = vector.broadcast %12 : vector<1x1x128xf32> to vector<1x8x128xf32>
    %80 = vector.broadcast %63 : vector<1x8x1xf32> to vector<1x8x128xf32>
    %81 = arith.maximumf %79, %80 : vector<1x8x128xf32>
    %82 = arith.subf %78, %81 : vector<1x8x128xf32>
    %cst_24 = arith.constant 0.000000e+00 : f32
    %83 = vector.broadcast %cst_24 : f32 to vector<1x8x128xf32>
    %84 = arith.maximumf %82, %83 : vector<1x8x128xf32>
    %85 = arith.mulf %75, %84 : vector<1x8x128xf32>
    %86 = vector.broadcast %16 : vector<1x1x128xf32> to vector<1x8x128xf32>
    %87 = vector.broadcast %65 : vector<1x8x1xf32> to vector<1x8x128xf32>
    %88 = arith.addf %86, %87 : vector<1x8x128xf32>
    %89 = arith.subf %88, %85 : vector<1x8x128xf32>
    %cst_25 = arith.constant 9.99999996E-13 : f32
    %90 = vector.broadcast %cst_25 : f32 to vector<1x8x128xf32>
    %91 = arith.maximumf %89, %90 : vector<1x8x128xf32>
    %92 = arith.divf %85, %91 : vector<1x8x128xf32>
    %cst_26 = arith.constant 0.000000e+00 : f32
    %93 = vector.broadcast %cst_26 : f32 to vector<1x8x1xf32>
    %94 = arith.cmpf ogt, %66, %93 : vector<1x8x1xf32>
    %cst_27 = arith.constant 0.000000e+00 : f32
    %95 = vector.shape_cast %94 : vector<1x8x1xi1> to vector<1x8x1xi1>
    %96 = vector.broadcast %95 : vector<1x8x1xi1> to vector<1x8x128xi1>
    %97 = vector.broadcast %cst_27 : f32 to vector<1x8x128xf32>
    %98 = arith.select %96, %92, %97 : vector<1x8x128xi1>, vector<1x8x128xf32>
    %cst_28 = arith.constant dense<0xFF800000> : vector<1x128xf32>
    %99 = vector.multi_reduction <maximumf>, %98, %cst_28 [1] : vector<1x8x128xf32> to vector<1x128xf32>
    %100 = vector.shape_cast %99 : vector<1x128xf32> to vector<1x1x128xf32>
    %101 = arith.maximumf %59, %100 : vector<1x1x128xf32>
    %c0_29 = arith.constant 0 : index
    %c16 = arith.constant 16 : index
    %c0_30 = arith.constant 0 : index
    %102 = vector.load %arg3[%c0_29, %c16, %c0_30] : memref<1x56x6xf32, #tpu.memory_space<vmem>>, vector<1x8x6xf32>
    %103 = vector.extract_strided_slice %102 {offsets = [0, 0, 0], sizes = [1, 8, 1], strides = [1, 1, 1]} : vector<1x8x6xf32> to vector<1x8x1xf32>
    %104 = vector.extract_strided_slice %102 {offsets = [0, 0, 1], sizes = [1, 8, 1], strides = [1, 1, 1]} : vector<1x8x6xf32> to vector<1x8x1xf32>
    %105 = vector.extract_strided_slice %102 {offsets = [0, 0, 2], sizes = [1, 8, 1], strides = [1, 1, 1]} : vector<1x8x6xf32> to vector<1x8x1xf32>
    %106 = vector.extract_strided_slice %102 {offsets = [0, 0, 3], sizes = [1, 8, 1], strides = [1, 1, 1]} : vector<1x8x6xf32> to vector<1x8x1xf32>
    %107 = vector.extract_strided_slice %102 {offsets = [0, 0, 4], sizes = [1, 8, 1], strides = [1, 1, 1]} : vector<1x8x6xf32> to vector<1x8x1xf32>
    %108 = vector.extract_strided_slice %102 {offsets = [0, 0, 5], sizes = [1, 8, 1], strides = [1, 1, 1]} : vector<1x8x6xf32> to vector<1x8x1xf32>
    %109 = vector.broadcast %9 : vector<1x1x128xf32> to vector<1x8x128xf32>
    %110 = vector.broadcast %104 : vector<1x8x1xf32> to vector<1x8x128xf32>
    %111 = arith.minimumf %109, %110 : vector<1x8x128xf32>
    %112 = vector.broadcast %6 : vector<1x1x128xf32> to vector<1x8x128xf32>
    %113 = vector.broadcast %103 : vector<1x8x1xf32> to vector<1x8x128xf32>
    %114 = arith.maximumf %112, %113 : vector<1x8x128xf32>
    %115 = arith.subf %111, %114 : vector<1x8x128xf32>
    %cst_31 = arith.constant 0.000000e+00 : f32
    %116 = vector.broadcast %cst_31 : f32 to vector<1x8x128xf32>
    %117 = arith.maximumf %115, %116 : vector<1x8x128xf32>
    %118 = vector.broadcast %15 : vector<1x1x128xf32> to vector<1x8x128xf32>
    %119 = vector.broadcast %106 : vector<1x8x1xf32> to vector<1x8x128xf32>
    %120 = arith.minimumf %118, %119 : vector<1x8x128xf32>
    %121 = vector.broadcast %12 : vector<1x1x128xf32> to vector<1x8x128xf32>
    %122 = vector.broadcast %105 : vector<1x8x1xf32> to vector<1x8x128xf32>
    %123 = arith.maximumf %121, %122 : vector<1x8x128xf32>
    %124 = arith.subf %120, %123 : vector<1x8x128xf32>
    %cst_32 = arith.constant 0.000000e+00 : f32
    %125 = vector.broadcast %cst_32 : f32 to vector<1x8x128xf32>
    %126 = arith.maximumf %124, %125 : vector<1x8x128xf32>
    %127 = arith.mulf %117, %126 : vector<1x8x128xf32>
    %128 = vector.broadcast %16 : vector<1x1x128xf32> to vector<1x8x128xf32>
    %129 = vector.broadcast %107 : vector<1x8x1xf32> to vector<1x8x128xf32>
    %130 = arith.addf %128, %129 : vector<1x8x128xf32>
    %131 = arith.subf %130, %127 : vector<1x8x128xf32>
    %cst_33 = arith.constant 9.99999996E-13 : f32
    %132 = vector.broadcast %cst_33 : f32 to vector<1x8x128xf32>
    %133 = arith.maximumf %131, %132 : vector<1x8x128xf32>
    %134 = arith.divf %127, %133 : vector<1x8x128xf32>
    %cst_34 = arith.constant 0.000000e+00 : f32
    %135 = vector.broadcast %cst_34 : f32 to vector<1x8x1xf32>
    %136 = arith.cmpf ogt, %108, %135 : vector<1x8x1xf32>
    %cst_35 = arith.constant 0.000000e+00 : f32
    %137 = vector.shape_cast %136 : vector<1x8x1xi1> to vector<1x8x1xi1>
    %138 = vector.broadcast %137 : vector<1x8x1xi1> to vector<1x8x128xi1>
    %139 = vector.broadcast %cst_35 : f32 to vector<1x8x128xf32>
    %140 = arith.select %138, %134, %139 : vector<1x8x128xi1>, vector<1x8x128xf32>
    %cst_36 = arith.constant dense<0xFF800000> : vector<1x128xf32>
    %141 = vector.multi_reduction <maximumf>, %140, %cst_36 [1] : vector<1x8x128xf32> to vector<1x128xf32>
    %142 = vector.shape_cast %141 : vector<1x128xf32> to vector<1x1x128xf32>
    %143 = arith.maximumf %101, %142 : vector<1x1x128xf32>
    %c0_37 = arith.constant 0 : index
    %c24 = arith.constant 24 : index
    %c0_38 = arith.constant 0 : index
    %144 = vector.load %arg3[%c0_37, %c24, %c0_38] : memref<1x56x6xf32, #tpu.memory_space<vmem>>, vector<1x8x6xf32>
    %145 = vector.extract_strided_slice %144 {offsets = [0, 0, 0], sizes = [1, 8, 1], strides = [1, 1, 1]} : vector<1x8x6xf32> to vector<1x8x1xf32>
    %146 = vector.extract_strided_slice %144 {offsets = [0, 0, 1], sizes = [1, 8, 1], strides = [1, 1, 1]} : vector<1x8x6xf32> to vector<1x8x1xf32>
    %147 = vector.extract_strided_slice %144 {offsets = [0, 0, 2], sizes = [1, 8, 1], strides = [1, 1, 1]} : vector<1x8x6xf32> to vector<1x8x1xf32>
    %148 = vector.extract_strided_slice %144 {offsets = [0, 0, 3], sizes = [1, 8, 1], strides = [1, 1, 1]} : vector<1x8x6xf32> to vector<1x8x1xf32>
    %149 = vector.extract_strided_slice %144 {offsets = [0, 0, 4], sizes = [1, 8, 1], strides = [1, 1, 1]} : vector<1x8x6xf32> to vector<1x8x1xf32>
    %150 = vector.extract_strided_slice %144 {offsets = [0, 0, 5], sizes = [1, 8, 1], strides = [1, 1, 1]} : vector<1x8x6xf32> to vector<1x8x1xf32>
    %151 = vector.broadcast %9 : vector<1x1x128xf32> to vector<1x8x128xf32>
    %152 = vector.broadcast %146 : vector<1x8x1xf32> to vector<1x8x128xf32>
    %153 = arith.minimumf %151, %152 : vector<1x8x128xf32>
    %154 = vector.broadcast %6 : vector<1x1x128xf32> to vector<1x8x128xf32>
    %155 = vector.broadcast %145 : vector<1x8x1xf32> to vector<1x8x128xf32>
    %156 = arith.maximumf %154, %155 : vector<1x8x128xf32>
    %157 = arith.subf %153, %156 : vector<1x8x128xf32>
    %cst_39 = arith.constant 0.000000e+00 : f32
    %158 = vector.broadcast %cst_39 : f32 to vector<1x8x128xf32>
    %159 = arith.maximumf %157, %158 : vector<1x8x128xf32>
    %160 = vector.broadcast %15 : vector<1x1x128xf32> to vector<1x8x128xf32>
    %161 = vector.broadcast %148 : vector<1x8x1xf32> to vector<1x8x128xf32>
    %162 = arith.minimumf %160, %161 : vector<1x8x128xf32>
    %163 = vector.broadcast %12 : vector<1x1x128xf32> to vector<1x8x128xf32>
    %164 = vector.broadcast %147 : vector<1x8x1xf32> to vector<1x8x128xf32>
    %165 = arith.maximumf %163, %164 : vector<1x8x128xf32>
    %166 = arith.subf %162, %165 : vector<1x8x128xf32>
    %cst_40 = arith.constant 0.000000e+00 : f32
    %167 = vector.broadcast %cst_40 : f32 to vector<1x8x128xf32>
    %168 = arith.maximumf %166, %167 : vector<1x8x128xf32>
    %169 = arith.mulf %159, %168 : vector<1x8x128xf32>
    %170 = vector.broadcast %16 : vector<1x1x128xf32> to vector<1x8x128xf32>
    %171 = vector.broadcast %149 : vector<1x8x1xf32> to vector<1x8x128xf32>
    %172 = arith.addf %170, %171 : vector<1x8x128xf32>
    %173 = arith.subf %172, %169 : vector<1x8x128xf32>
    %cst_41 = arith.constant 9.99999996E-13 : f32
    %174 = vector.broadcast %cst_41 : f32 to vector<1x8x128xf32>
    %175 = arith.maximumf %173, %174 : vector<1x8x128xf32>
    %176 = arith.divf %169, %175 : vector<1x8x128xf32>
    %cst_42 = arith.constant 0.000000e+00 : f32
    %177 = vector.broadcast %cst_42 : f32 to vector<1x8x1xf32>
    %178 = arith.cmpf ogt, %150, %177 : vector<1x8x1xf32>
    %cst_43 = arith.constant 0.000000e+00 : f32
    %179 = vector.shape_cast %178 : vector<1x8x1xi1> to vector<1x8x1xi1>
    %180 = vector.broadcast %179 : vector<1x8x1xi1> to vector<1x8x128xi1>
    %181 = vector.broadcast %cst_43 : f32 to vector<1x8x128xf32>
    %182 = arith.select %180, %176, %181 : vector<1x8x128xi1>, vector<1x8x128xf32>
    %cst_44 = arith.constant dense<0xFF800000> : vector<1x128xf32>
    %183 = vector.multi_reduction <maximumf>, %182, %cst_44 [1] : vector<1x8x128xf32> to vector<1x128xf32>
    %184 = vector.shape_cast %183 : vector<1x128xf32> to vector<1x1x128xf32>
    %185 = arith.maximumf %143, %184 : vector<1x1x128xf32>
    %c0_45 = arith.constant 0 : index
    %c32 = arith.constant 32 : index
    %c0_46 = arith.constant 0 : index
    %186 = vector.load %arg3[%c0_45, %c32, %c0_46] : memref<1x56x6xf32, #tpu.memory_space<vmem>>, vector<1x8x6xf32>
    %187 = vector.extract_strided_slice %186 {offsets = [0, 0, 0], sizes = [1, 8, 1], strides = [1, 1, 1]} : vector<1x8x6xf32> to vector<1x8x1xf32>
    %188 = vector.extract_strided_slice %186 {offsets = [0, 0, 1], sizes = [1, 8, 1], strides = [1, 1, 1]} : vector<1x8x6xf32> to vector<1x8x1xf32>
    %189 = vector.extract_strided_slice %186 {offsets = [0, 0, 2], sizes = [1, 8, 1], strides = [1, 1, 1]} : vector<1x8x6xf32> to vector<1x8x1xf32>
    %190 = vector.extract_strided_slice %186 {offsets = [0, 0, 3], sizes = [1, 8, 1], strides = [1, 1, 1]} : vector<1x8x6xf32> to vector<1x8x1xf32>
    %191 = vector.extract_strided_slice %186 {offsets = [0, 0, 4], sizes = [1, 8, 1], strides = [1, 1, 1]} : vector<1x8x6xf32> to vector<1x8x1xf32>
    %192 = vector.extract_strided_slice %186 {offsets = [0, 0, 5], sizes = [1, 8, 1], strides = [1, 1, 1]} : vector<1x8x6xf32> to vector<1x8x1xf32>
    %193 = vector.broadcast %9 : vector<1x1x128xf32> to vector<1x8x128xf32>
    %194 = vector.broadcast %188 : vector<1x8x1xf32> to vector<1x8x128xf32>
    %195 = arith.minimumf %193, %194 : vector<1x8x128xf32>
    %196 = vector.broadcast %6 : vector<1x1x128xf32> to vector<1x8x128xf32>
    %197 = vector.broadcast %187 : vector<1x8x1xf32> to vector<1x8x128xf32>
    %198 = arith.maximumf %196, %197 : vector<1x8x128xf32>
    %199 = arith.subf %195, %198 : vector<1x8x128xf32>
    %cst_47 = arith.constant 0.000000e+00 : f32
    %200 = vector.broadcast %cst_47 : f32 to vector<1x8x128xf32>
    %201 = arith.maximumf %199, %200 : vector<1x8x128xf32>
    %202 = vector.broadcast %15 : vector<1x1x128xf32> to vector<1x8x128xf32>
    %203 = vector.broadcast %190 : vector<1x8x1xf32> to vector<1x8x128xf32>
    %204 = arith.minimumf %202, %203 : vector<1x8x128xf32>
    %205 = vector.broadcast %12 : vector<1x1x128xf32> to vector<1x8x128xf32>
    %206 = vector.broadcast %189 : vector<1x8x1xf32> to vector<1x8x128xf32>
    %207 = arith.maximumf %205, %206 : vector<1x8x128xf32>
    %208 = arith.subf %204, %207 : vector<1x8x128xf32>
    %cst_48 = arith.constant 0.000000e+00 : f32
    %209 = vector.broadcast %cst_48 : f32 to vector<1x8x128xf32>
    %210 = arith.maximumf %208, %209 : vector<1x8x128xf32>
    %211 = arith.mulf %201, %210 : vector<1x8x128xf32>
    %212 = vector.broadcast %16 : vector<1x1x128xf32> to vector<1x8x128xf32>
    %213 = vector.broadcast %191 : vector<1x8x1xf32> to vector<1x8x128xf32>
    %214 = arith.addf %212, %213 : vector<1x8x128xf32>
    %215 = arith.subf %214, %211 : vector<1x8x128xf32>
    %cst_49 = arith.constant 9.99999996E-13 : f32
    %216 = vector.broadcast %cst_49 : f32 to vector<1x8x128xf32>
    %217 = arith.maximumf %215, %216 : vector<1x8x128xf32>
    %218 = arith.divf %211, %217 : vector<1x8x128xf32>
    %cst_50 = arith.constant 0.000000e+00 : f32
    %219 = vector.broadcast %cst_50 : f32 to vector<1x8x1xf32>
    %220 = arith.cmpf ogt, %192, %219 : vector<1x8x1xf32>
    %cst_51 = arith.constant 0.000000e+00 : f32
    %221 = vector.shape_cast %220 : vector<1x8x1xi1> to vector<1x8x1xi1>
    %222 = vector.broadcast %221 : vector<1x8x1xi1> to vector<1x8x128xi1>
    %223 = vector.broadcast %cst_51 : f32 to vector<1x8x128xf32>
    %224 = arith.select %222, %218, %223 : vector<1x8x128xi1>, vector<1x8x128xf32>
    %cst_52 = arith.constant dense<0xFF800000> : vector<1x128xf32>
    %225 = vector.multi_reduction <maximumf>, %224, %cst_52 [1] : vector<1x8x128xf32> to vector<1x128xf32>
    %226 = vector.shape_cast %225 : vector<1x128xf32> to vector<1x1x128xf32>
    %227 = arith.maximumf %185, %226 : vector<1x1x128xf32>
    %c0_53 = arith.constant 0 : index
    %c40 = arith.constant 40 : index
    %c0_54 = arith.constant 0 : index
    %228 = vector.load %arg3[%c0_53, %c40, %c0_54] : memref<1x56x6xf32, #tpu.memory_space<vmem>>, vector<1x8x6xf32>
    %229 = vector.extract_strided_slice %228 {offsets = [0, 0, 0], sizes = [1, 8, 1], strides = [1, 1, 1]} : vector<1x8x6xf32> to vector<1x8x1xf32>
    %230 = vector.extract_strided_slice %228 {offsets = [0, 0, 1], sizes = [1, 8, 1], strides = [1, 1, 1]} : vector<1x8x6xf32> to vector<1x8x1xf32>
    %231 = vector.extract_strided_slice %228 {offsets = [0, 0, 2], sizes = [1, 8, 1], strides = [1, 1, 1]} : vector<1x8x6xf32> to vector<1x8x1xf32>
    %232 = vector.extract_strided_slice %228 {offsets = [0, 0, 3], sizes = [1, 8, 1], strides = [1, 1, 1]} : vector<1x8x6xf32> to vector<1x8x1xf32>
    %233 = vector.extract_strided_slice %228 {offsets = [0, 0, 4], sizes = [1, 8, 1], strides = [1, 1, 1]} : vector<1x8x6xf32> to vector<1x8x1xf32>
    %234 = vector.extract_strided_slice %228 {offsets = [0, 0, 5], sizes = [1, 8, 1], strides = [1, 1, 1]} : vector<1x8x6xf32> to vector<1x8x1xf32>
    %235 = vector.broadcast %9 : vector<1x1x128xf32> to vector<1x8x128xf32>
    %236 = vector.broadcast %230 : vector<1x8x1xf32> to vector<1x8x128xf32>
    %237 = arith.minimumf %235, %236 : vector<1x8x128xf32>
    %238 = vector.broadcast %6 : vector<1x1x128xf32> to vector<1x8x128xf32>
    %239 = vector.broadcast %229 : vector<1x8x1xf32> to vector<1x8x128xf32>
    %240 = arith.maximumf %238, %239 : vector<1x8x128xf32>
    %241 = arith.subf %237, %240 : vector<1x8x128xf32>
    %cst_55 = arith.constant 0.000000e+00 : f32
    %242 = vector.broadcast %cst_55 : f32 to vector<1x8x128xf32>
    %243 = arith.maximumf %241, %242 : vector<1x8x128xf32>
    %244 = vector.broadcast %15 : vector<1x1x128xf32> to vector<1x8x128xf32>
    %245 = vector.broadcast %232 : vector<1x8x1xf32> to vector<1x8x128xf32>
    %246 = arith.minimumf %244, %245 : vector<1x8x128xf32>
    %247 = vector.broadcast %12 : vector<1x1x128xf32> to vector<1x8x128xf32>
    %248 = vector.broadcast %231 : vector<1x8x1xf32> to vector<1x8x128xf32>
    %249 = arith.maximumf %247, %248 : vector<1x8x128xf32>
    %250 = arith.subf %246, %249 : vector<1x8x128xf32>
    %cst_56 = arith.constant 0.000000e+00 : f32
    %251 = vector.broadcast %cst_56 : f32 to vector<1x8x128xf32>
    %252 = arith.maximumf %250, %251 : vector<1x8x128xf32>
    %253 = arith.mulf %243, %252 : vector<1x8x128xf32>
    %254 = vector.broadcast %16 : vector<1x1x128xf32> to vector<1x8x128xf32>
    %255 = vector.broadcast %233 : vector<1x8x1xf32> to vector<1x8x128xf32>
    %256 = arith.addf %254, %255 : vector<1x8x128xf32>
    %257 = arith.subf %256, %253 : vector<1x8x128xf32>
    %cst_57 = arith.constant 9.99999996E-13 : f32
    %258 = vector.broadcast %cst_57 : f32 to vector<1x8x128xf32>
    %259 = arith.maximumf %257, %258 : vector<1x8x128xf32>
    %260 = arith.divf %253, %259 : vector<1x8x128xf32>
    %cst_58 = arith.constant 0.000000e+00 : f32
    %261 = vector.broadcast %cst_58 : f32 to vector<1x8x1xf32>
    %262 = arith.cmpf ogt, %234, %261 : vector<1x8x1xf32>
    %cst_59 = arith.constant 0.000000e+00 : f32
    %263 = vector.shape_cast %262 : vector<1x8x1xi1> to vector<1x8x1xi1>
    %264 = vector.broadcast %263 : vector<1x8x1xi1> to vector<1x8x128xi1>
    %265 = vector.broadcast %cst_59 : f32 to vector<1x8x128xf32>
    %266 = arith.select %264, %260, %265 : vector<1x8x128xi1>, vector<1x8x128xf32>
    %cst_60 = arith.constant dense<0xFF800000> : vector<1x128xf32>
    %267 = vector.multi_reduction <maximumf>, %266, %cst_60 [1] : vector<1x8x128xf32> to vector<1x128xf32>
    %268 = vector.shape_cast %267 : vector<1x128xf32> to vector<1x1x128xf32>
    %269 = arith.maximumf %227, %268 : vector<1x1x128xf32>
    %c0_61 = arith.constant 0 : index
    %c48 = arith.constant 48 : index
    %c0_62 = arith.constant 0 : index
    %270 = vector.load %arg3[%c0_61, %c48, %c0_62] : memref<1x56x6xf32, #tpu.memory_space<vmem>>, vector<1x8x6xf32>
    %271 = vector.extract_strided_slice %270 {offsets = [0, 0, 0], sizes = [1, 8, 1], strides = [1, 1, 1]} : vector<1x8x6xf32> to vector<1x8x1xf32>
    %272 = vector.extract_strided_slice %270 {offsets = [0, 0, 1], sizes = [1, 8, 1], strides = [1, 1, 1]} : vector<1x8x6xf32> to vector<1x8x1xf32>
    %273 = vector.extract_strided_slice %270 {offsets = [0, 0, 2], sizes = [1, 8, 1], strides = [1, 1, 1]} : vector<1x8x6xf32> to vector<1x8x1xf32>
    %274 = vector.extract_strided_slice %270 {offsets = [0, 0, 3], sizes = [1, 8, 1], strides = [1, 1, 1]} : vector<1x8x6xf32> to vector<1x8x1xf32>
    %275 = vector.extract_strided_slice %270 {offsets = [0, 0, 4], sizes = [1, 8, 1], strides = [1, 1, 1]} : vector<1x8x6xf32> to vector<1x8x1xf32>
    %276 = vector.extract_strided_slice %270 {offsets = [0, 0, 5], sizes = [1, 8, 1], strides = [1, 1, 1]} : vector<1x8x6xf32> to vector<1x8x1xf32>
    %277 = vector.broadcast %9 : vector<1x1x128xf32> to vector<1x8x128xf32>
    %278 = vector.broadcast %272 : vector<1x8x1xf32> to vector<1x8x128xf32>
    %279 = arith.minimumf %277, %278 : vector<1x8x128xf32>
    %280 = vector.broadcast %6 : vector<1x1x128xf32> to vector<1x8x128xf32>
    %281 = vector.broadcast %271 : vector<1x8x1xf32> to vector<1x8x128xf32>
    %282 = arith.maximumf %280, %281 : vector<1x8x128xf32>
    %283 = arith.subf %279, %282 : vector<1x8x128xf32>
    %cst_63 = arith.constant 0.000000e+00 : f32
    %284 = vector.broadcast %cst_63 : f32 to vector<1x8x128xf32>
    %285 = arith.maximumf %283, %284 : vector<1x8x128xf32>
    %286 = vector.broadcast %15 : vector<1x1x128xf32> to vector<1x8x128xf32>
    %287 = vector.broadcast %274 : vector<1x8x1xf32> to vector<1x8x128xf32>
    %288 = arith.minimumf %286, %287 : vector<1x8x128xf32>
    %289 = vector.broadcast %12 : vector<1x1x128xf32> to vector<1x8x128xf32>
    %290 = vector.broadcast %273 : vector<1x8x1xf32> to vector<1x8x128xf32>
    %291 = arith.maximumf %289, %290 : vector<1x8x128xf32>
    %292 = arith.subf %288, %291 : vector<1x8x128xf32>
    %cst_64 = arith.constant 0.000000e+00 : f32
    %293 = vector.broadcast %cst_64 : f32 to vector<1x8x128xf32>
    %294 = arith.maximumf %292, %293 : vector<1x8x128xf32>
    %295 = arith.mulf %285, %294 : vector<1x8x128xf32>
    %296 = vector.broadcast %16 : vector<1x1x128xf32> to vector<1x8x128xf32>
    %297 = vector.broadcast %275 : vector<1x8x1xf32> to vector<1x8x128xf32>
    %298 = arith.addf %296, %297 : vector<1x8x128xf32>
    %299 = arith.subf %298, %295 : vector<1x8x128xf32>
    %cst_65 = arith.constant 9.99999996E-13 : f32
    %300 = vector.broadcast %cst_65 : f32 to vector<1x8x128xf32>
    %301 = arith.maximumf %299, %300 : vector<1x8x128xf32>
    %302 = arith.divf %295, %301 : vector<1x8x128xf32>
    %cst_66 = arith.constant 0.000000e+00 : f32
    %303 = vector.broadcast %cst_66 : f32 to vector<1x8x1xf32>
    %304 = arith.cmpf ogt, %276, %303 : vector<1x8x1xf32>
    %cst_67 = arith.constant 0.000000e+00 : f32
    %305 = vector.shape_cast %304 : vector<1x8x1xi1> to vector<1x8x1xi1>
    %306 = vector.broadcast %305 : vector<1x8x1xi1> to vector<1x8x128xi1>
    %307 = vector.broadcast %cst_67 : f32 to vector<1x8x128xf32>
    %308 = arith.select %306, %302, %307 : vector<1x8x128xi1>, vector<1x8x128xf32>
    %cst_68 = arith.constant dense<0xFF800000> : vector<1x128xf32>
    %309 = vector.multi_reduction <maximumf>, %308, %cst_68 [1] : vector<1x8x128xf32> to vector<1x128xf32>
    %310 = vector.shape_cast %309 : vector<1x128xf32> to vector<1x1x128xf32>
    %311 = arith.maximumf %269, %310 : vector<1x1x128xf32>
    %c0_69 = arith.constant 0 : index
    %c0_70 = arith.constant 0 : index
    %c0_71 = arith.constant 0 : index
    %312 = vector.load %arg4[%c0_69, %c0_70, %c0_71] : memref<1x1x128xf32, #tpu.memory_space<vmem>>, vector<1x1x128xf32>
    tpu.vector_store %arg4[%c0_69, %c0_70, %c0_71], %311 {strides = array<i32>} : memref<1x1x128xf32, #tpu.memory_space<vmem>>, vector<1x1x128xf32>,
    return
  }
  func.func @transform_0(%arg0: i32, %arg1: i32) -> (i32, i32, i32) {
    %c0_i32 = arith.constant 0 : i32
    %c0_i32_0 = arith.constant 0 : i32
    return %arg0, %c0_i32, %arg1 : i32, i32, i32
  }
  func.func @transform_1(%arg0: i32, %arg1: i32) -> (i32, i32, i32) {
    %c0_i32 = arith.constant 0 : i32
    %c0_i32_0 = arith.constant 0 : i32
    %c0_i32_1 = arith.constant 0 : i32
    return %arg0, %c0_i32, %c0_i32_0 : i32, i32, i32
  }
  func.func @transform_2(%arg0: i32, %arg1: i32) -> (i32, i32, i32) {
    %c0_i32 = arith.constant 0 : i32
    %c0_i32_0 = arith.constant 0 : i32
    return %arg0, %c0_i32, %arg1 : i32, i32, i32
  }
}

module attributes {stable_mosaic.version = 11 : i64} {
  func.func @_loss_kernel(%arg0: i32, %arg1: memref<2x8x128xf32, #tpu.memory_space<vmem>>, %arg2: memref<2x4x128xf32, #tpu.memory_space<vmem>>, %arg3: memref<2x3x128xf32, #tpu.memory_space<vmem>>, %arg4: memref<1x1x128xf32, #tpu.memory_space<vmem>>) attributes {dimension_semantics = [#tpu.dimension_semantics<parallel>], iteration_bounds = array<i64: 2>, scalar_prefetch = 0 : i64, scratch_operands = 0 : i64, tpu.core_type = #tpu.core_type<tc>, window_params = [{transform_indices = @transform_0, window_bounds = array<i64: 2, 8, 128>}, {transform_indices = @transform_1, window_bounds = array<i64: 2, 4, 128>}, {transform_indices = @transform_2, window_bounds = array<i64: 2, 3, 128>}, {transform_indices = @transform_3, window_bounds = array<i64: 1, 1, 128>}]} {
    %c0 = arith.constant 0 : index
    %c0_0 = arith.constant 0 : index
    %c0_1 = arith.constant 0 : index
    %0 = vector.load %arg1[%c0, %c0_0, %c0_1] : memref<2x8x128xf32, #tpu.memory_space<vmem>>, vector<2x8x128xf32>
    %c0_2 = arith.constant 0 : index
    %c0_3 = arith.constant 0 : index
    %c0_4 = arith.constant 0 : index
    %1 = vector.load %arg2[%c0_2, %c0_3, %c0_4] : memref<2x4x128xf32, #tpu.memory_space<vmem>>, vector<2x4x128xf32>
    %2 = vector.extract_strided_slice %1 {offsets = [0, 2, 0], sizes = [2, 1, 128], strides = [1, 1, 1]} : vector<2x4x128xf32> to vector<2x1x128xf32>
    %3 = vector.extract_strided_slice %0 {offsets = [0, 0, 0], sizes = [2, 4, 128], strides = [1, 1, 1]} : vector<2x8x128xf32> to vector<2x4x128xf32>
    %4 = vector.extract_strided_slice %0 {offsets = [0, 4, 0], sizes = [2, 4, 128], strides = [1, 1, 1]} : vector<2x8x128xf32> to vector<2x4x128xf32>
    %5 = arith.subf %3, %4 : vector<2x4x128xf32>
    %6 = vector.broadcast %2 : vector<2x1x128xf32> to vector<2x4x128xf32>
    %7 = arith.mulf %5, %6 : vector<2x4x128xf32>
    %8 = vector.extract_strided_slice %1 {offsets = [0, 0, 0], sizes = [2, 1, 128], strides = [1, 1, 1]} : vector<2x4x128xf32> to vector<2x1x128xf32>
    %9 = vector.extract_strided_slice %1 {offsets = [0, 1, 0], sizes = [2, 1, 128], strides = [1, 1, 1]} : vector<2x4x128xf32> to vector<2x1x128xf32>
    %10 = arith.subf %8, %9 : vector<2x1x128xf32>
    %11 = vector.extract_strided_slice %1 {offsets = [0, 3, 0], sizes = [2, 1, 128], strides = [1, 1, 1]} : vector<2x4x128xf32> to vector<2x1x128xf32>
    %12 = arith.mulf %10, %11 : vector<2x1x128xf32>
    %13 = arith.mulf %7, %7 : vector<2x4x128xf32>
    %cst = arith.constant dense<0.000000e+00> : vector<128xf32>
    %14 = vector.multi_reduction <add>, %13, %cst [0, 1] : vector<2x4x128xf32> to vector<128xf32>
    %15 = vector.shape_cast %14 : vector<128xf32> to vector<1x1x128xf32>
    %16 = arith.mulf %12, %12 : vector<2x1x128xf32>
    %cst_5 = arith.constant dense<0.000000e+00> : vector<128xf32>
    %17 = vector.multi_reduction <add>, %16, %cst_5 [0, 1] : vector<2x1x128xf32> to vector<128xf32>
    %18 = vector.shape_cast %17 : vector<128xf32> to vector<1x1x128xf32>
    %19 = arith.addf %15, %18 : vector<1x1x128xf32>
    %cst_6 = arith.constant 5.000000e-01 : f32
    %20 = vector.broadcast %cst_6 : f32 to vector<1x1x128xf32>
    %21 = arith.mulf %20, %19 : vector<1x1x128xf32>
    %c0_7 = arith.constant 0 : index
    %c0_8 = arith.constant 0 : index
    %c0_9 = arith.constant 0 : index
    %22 = vector.load %arg3[%c0_7, %c0_8, %c0_9] : memref<2x3x128xf32, #tpu.memory_space<vmem>>, vector<2x3x128xf32>
    %cst_10 = arith.constant 1.000000e+00 : f32
    %23 = vector.broadcast %cst_10 : f32 to vector<2x3x128xf32>
    %24 = arith.subf %23, %22 : vector<2x3x128xf32>
    %25 = math.log %24 : vector<2x3x128xf32>
    %cst_11 = arith.constant -1.000000e+02 : f32
    %26 = vector.broadcast %cst_11 : f32 to vector<2x3x128xf32>
    %27 = arith.maximumf %25, %26 : vector<2x3x128xf32>
    %cst_12 = arith.constant dense<0.000000e+00> : vector<128xf32>
    %28 = vector.multi_reduction <add>, %27, %cst_12 [0, 1] : vector<2x3x128xf32> to vector<128xf32>
    %29 = vector.shape_cast %28 : vector<128xf32> to vector<1x1x128xf32>
    %30 = arith.subf %21, %29 : vector<1x1x128xf32>
    %c0_13 = arith.constant 0 : index
    %c0_14 = arith.constant 0 : index
    %c0_15 = arith.constant 0 : index
    %31 = vector.load %arg4[%c0_13, %c0_14, %c0_15] : memref<1x1x128xf32, #tpu.memory_space<vmem>>, vector<1x1x128xf32>
    tpu.vector_store %arg4[%c0_13, %c0_14, %c0_15], %30 {strides = array<i32>} : memref<1x1x128xf32, #tpu.memory_space<vmem>>, vector<1x1x128xf32>,
    return
  }
  func.func @transform_0(%arg0: i32) -> (i32, i32, i32) {
    %c0_i32 = arith.constant 0 : i32
    %c0_i32_0 = arith.constant 0 : i32
    %c0_i32_1 = arith.constant 0 : i32
    return %c0_i32, %c0_i32_0, %arg0 : i32, i32, i32
  }
  func.func @transform_1(%arg0: i32) -> (i32, i32, i32) {
    %c0_i32 = arith.constant 0 : i32
    %c0_i32_0 = arith.constant 0 : i32
    %c0_i32_1 = arith.constant 0 : i32
    return %c0_i32, %c0_i32_0, %arg0 : i32, i32, i32
  }
  func.func @transform_2(%arg0: i32) -> (i32, i32, i32) {
    %c0_i32 = arith.constant 0 : i32
    %c0_i32_0 = arith.constant 0 : i32
    %c0_i32_1 = arith.constant 0 : i32
    return %c0_i32, %c0_i32_0, %arg0 : i32, i32, i32
  }
  func.func @transform_3(%arg0: i32) -> (i32, i32, i32) {
    %c0_i32 = arith.constant 0 : i32
    %c0_i32_0 = arith.constant 0 : i32
    %c0_i32_1 = arith.constant 0 : i32
    return %arg0, %c0_i32, %c0_i32_0 : i32, i32, i32
  }
}

module attributes {stable_mosaic.version = 11 : i64} {
  func.func @_iou_max_kernel(%arg0: i32, %arg1: i32, %arg2: memref<1x4x128xf32, #tpu.memory_space<vmem>>, %arg3: memref<1x56x6xf32, #tpu.memory_space<vmem>>, %arg4: memref<1x1x128xf32, #tpu.memory_space<vmem>>) attributes {dimension_semantics = [#tpu.dimension_semantics<parallel>, #tpu.dimension_semantics<parallel>], iteration_bounds = array<i64: 2, 1>, scalar_prefetch = 0 : i64, scratch_operands = 0 : i64, tpu.core_type = #tpu.core_type<tc>, window_params = [{transform_indices = @transform_0, window_bounds = array<i64: 1, 4, 128>}, {transform_indices = @transform_1, window_bounds = array<i64: 1, 56, 6>}, {transform_indices = @transform_2, window_bounds = array<i64: 1, 1, 128>}]} {
    %c0 = arith.constant 0 : index
    %c0_0 = arith.constant 0 : index
    %c0_1 = arith.constant 0 : index
    %0 = vector.load %arg2[%c0, %c0_0, %c0_1] : memref<1x4x128xf32, #tpu.memory_space<vmem>>, vector<1x1x128xf32>
    %c0_2 = arith.constant 0 : index
    %c1 = arith.constant 1 : index
    %c0_3 = arith.constant 0 : index
    %1 = vector.load %arg2[%c0_2, %c1, %c0_3] : memref<1x4x128xf32, #tpu.memory_space<vmem>>, vector<1x1x128xf32>
    %c0_4 = arith.constant 0 : index
    %c2 = arith.constant 2 : index
    %c0_5 = arith.constant 0 : index
    %2 = vector.load %arg2[%c0_4, %c2, %c0_5] : memref<1x4x128xf32, #tpu.memory_space<vmem>>, vector<1x1x128xf32>
    %c0_6 = arith.constant 0 : index
    %c3 = arith.constant 3 : index
    %c0_7 = arith.constant 0 : index
    %3 = vector.load %arg2[%c0_6, %c3, %c0_7] : memref<1x4x128xf32, #tpu.memory_space<vmem>>, vector<1x1x128xf32>
    %cst = arith.constant 5.000000e-01 : f32
    %4 = vector.broadcast %cst : f32 to vector<1x1x128xf32>
    %5 = arith.mulf %4, %2 : vector<1x1x128xf32>
    %6 = arith.subf %0, %5 : vector<1x1x128xf32>
    %cst_8 = arith.constant 5.000000e-01 : f32
    %7 = vector.broadcast %cst_8 : f32 to vector<1x1x128xf32>
    %8 = arith.mulf %7, %2 : vector<1x1x128xf32>
    %9 = arith.addf %0, %8 : vector<1x1x128xf32>
    %cst_9 = arith.constant 5.000000e-01 : f32
    %10 = vector.broadcast %cst_9 : f32 to vector<1x1x128xf32>
    %11 = arith.mulf %10, %3 : vector<1x1x128xf32>
    %12 = arith.subf %1, %11 : vector<1x1x128xf32>
    %cst_10 = arith.constant 5.000000e-01 : f32
    %13 = vector.broadcast %cst_10 : f32 to vector<1x1x128xf32>
    %14 = arith.mulf %13, %3 : vector<1x1x128xf32>
    %15 = arith.addf %1, %14 : vector<1x1x128xf32>
    %16 = arith.mulf %2, %3 : vector<1x1x128xf32>
    %cst_11 = arith.constant 0.000000e+00 : f32
    %17 = vector.broadcast %cst_11 : f32 to vector<1x1x128xf32>
    %c0_12 = arith.constant 0 : index
    %c0_13 = arith.constant 0 : index
    %c0_14 = arith.constant 0 : index
    %18 = vector.load %arg3[%c0_12, %c0_13, %c0_14] : memref<1x56x6xf32, #tpu.memory_space<vmem>>, vector<1x8x6xf32>
    %19 = vector.extract_strided_slice %18 {offsets = [0, 0, 0], sizes = [1, 8, 1], strides = [1, 1, 1]} : vector<1x8x6xf32> to vector<1x8x1xf32>
    %20 = vector.extract_strided_slice %18 {offsets = [0, 0, 1], sizes = [1, 8, 1], strides = [1, 1, 1]} : vector<1x8x6xf32> to vector<1x8x1xf32>
    %21 = vector.extract_strided_slice %18 {offsets = [0, 0, 2], sizes = [1, 8, 1], strides = [1, 1, 1]} : vector<1x8x6xf32> to vector<1x8x1xf32>
    %22 = vector.extract_strided_slice %18 {offsets = [0, 0, 3], sizes = [1, 8, 1], strides = [1, 1, 1]} : vector<1x8x6xf32> to vector<1x8x1xf32>
    %23 = vector.extract_strided_slice %18 {offsets = [0, 0, 4], sizes = [1, 8, 1], strides = [1, 1, 1]} : vector<1x8x6xf32> to vector<1x8x1xf32>
    %24 = vector.extract_strided_slice %18 {offsets = [0, 0, 5], sizes = [1, 8, 1], strides = [1, 1, 1]} : vector<1x8x6xf32> to vector<1x8x1xf32>
    %25 = vector.broadcast %9 : vector<1x1x128xf32> to vector<1x8x128xf32>
    %26 = vector.broadcast %20 : vector<1x8x1xf32> to vector<1x8x128xf32>
    %27 = arith.minimumf %25, %26 : vector<1x8x128xf32>
    %28 = vector.broadcast %6 : vector<1x1x128xf32> to vector<1x8x128xf32>
    %29 = vector.broadcast %19 : vector<1x8x1xf32> to vector<1x8x128xf32>
    %30 = arith.maximumf %28, %29 : vector<1x8x128xf32>
    %31 = arith.subf %27, %30 : vector<1x8x128xf32>
    %cst_15 = arith.constant 0.000000e+00 : f32
    %32 = vector.broadcast %cst_15 : f32 to vector<1x8x128xf32>
    %33 = arith.maximumf %31, %32 : vector<1x8x128xf32>
    %34 = vector.broadcast %15 : vector<1x1x128xf32> to vector<1x8x128xf32>
    %35 = vector.broadcast %22 : vector<1x8x1xf32> to vector<1x8x128xf32>
    %36 = arith.minimumf %34, %35 : vector<1x8x128xf32>
    %37 = vector.broadcast %12 : vector<1x1x128xf32> to vector<1x8x128xf32>
    %38 = vector.broadcast %21 : vector<1x8x1xf32> to vector<1x8x128xf32>
    %39 = arith.maximumf %37, %38 : vector<1x8x128xf32>
    %40 = arith.subf %36, %39 : vector<1x8x128xf32>
    %cst_16 = arith.constant 0.000000e+00 : f32
    %41 = vector.broadcast %cst_16 : f32 to vector<1x8x128xf32>
    %42 = arith.maximumf %40, %41 : vector<1x8x128xf32>
    %43 = arith.mulf %33, %42 : vector<1x8x128xf32>
    %44 = vector.broadcast %16 : vector<1x1x128xf32> to vector<1x8x128xf32>
    %45 = vector.broadcast %23 : vector<1x8x1xf32> to vector<1x8x128xf32>
    %46 = arith.addf %44, %45 : vector<1x8x128xf32>
    %47 = arith.subf %46, %43 : vector<1x8x128xf32>
    %cst_17 = arith.constant 9.99999996E-13 : f32
    %48 = vector.broadcast %cst_17 : f32 to vector<1x8x128xf32>
    %49 = arith.maximumf %47, %48 : vector<1x8x128xf32>
    %50 = arith.divf %43, %49 : vector<1x8x128xf32>
    %cst_18 = arith.constant 0.000000e+00 : f32
    %51 = vector.broadcast %cst_18 : f32 to vector<1x8x1xf32>
    %52 = arith.cmpf ogt, %24, %51 : vector<1x8x1xf32>
    %cst_19 = arith.constant 0.000000e+00 : f32
    %53 = vector.shape_cast %52 : vector<1x8x1xi1> to vector<1x8x1xi1>
    %54 = vector.broadcast %53 : vector<1x8x1xi1> to vector<1x8x128xi1>
    %55 = vector.broadcast %cst_19 : f32 to vector<1x8x128xf32>
    %56 = arith.select %54, %50, %55 : vector<1x8x128xi1>, vector<1x8x128xf32>
    %cst_20 = arith.constant dense<0xFF800000> : vector<1x128xf32>
    %57 = vector.multi_reduction <maximumf>, %56, %cst_20 [1] : vector<1x8x128xf32> to vector<1x128xf32>
    %58 = vector.shape_cast %57 : vector<1x128xf32> to vector<1x1x128xf32>
    %59 = arith.maximumf %17, %58 : vector<1x1x128xf32>
    %c0_21 = arith.constant 0 : index
    %c8 = arith.constant 8 : index
    %c0_22 = arith.constant 0 : index
    %60 = vector.load %arg3[%c0_21, %c8, %c0_22] : memref<1x56x6xf32, #tpu.memory_space<vmem>>, vector<1x8x6xf32>
    %61 = vector.extract_strided_slice %60 {offsets = [0, 0, 0], sizes = [1, 8, 1], strides = [1, 1, 1]} : vector<1x8x6xf32> to vector<1x8x1xf32>
    %62 = vector.extract_strided_slice %60 {offsets = [0, 0, 1], sizes = [1, 8, 1], strides = [1, 1, 1]} : vector<1x8x6xf32> to vector<1x8x1xf32>
    %63 = vector.extract_strided_slice %60 {offsets = [0, 0, 2], sizes = [1, 8, 1], strides = [1, 1, 1]} : vector<1x8x6xf32> to vector<1x8x1xf32>
    %64 = vector.extract_strided_slice %60 {offsets = [0, 0, 3], sizes = [1, 8, 1], strides = [1, 1, 1]} : vector<1x8x6xf32> to vector<1x8x1xf32>
    %65 = vector.extract_strided_slice %60 {offsets = [0, 0, 4], sizes = [1, 8, 1], strides = [1, 1, 1]} : vector<1x8x6xf32> to vector<1x8x1xf32>
    %66 = vector.extract_strided_slice %60 {offsets = [0, 0, 5], sizes = [1, 8, 1], strides = [1, 1, 1]} : vector<1x8x6xf32> to vector<1x8x1xf32>
    %67 = vector.broadcast %9 : vector<1x1x128xf32> to vector<1x8x128xf32>
    %68 = vector.broadcast %62 : vector<1x8x1xf32> to vector<1x8x128xf32>
    %69 = arith.minimumf %67, %68 : vector<1x8x128xf32>
    %70 = vector.broadcast %6 : vector<1x1x128xf32> to vector<1x8x128xf32>
    %71 = vector.broadcast %61 : vector<1x8x1xf32> to vector<1x8x128xf32>
    %72 = arith.maximumf %70, %71 : vector<1x8x128xf32>
    %73 = arith.subf %69, %72 : vector<1x8x128xf32>
    %cst_23 = arith.constant 0.000000e+00 : f32
    %74 = vector.broadcast %cst_23 : f32 to vector<1x8x128xf32>
    %75 = arith.maximumf %73, %74 : vector<1x8x128xf32>
    %76 = vector.broadcast %15 : vector<1x1x128xf32> to vector<1x8x128xf32>
    %77 = vector.broadcast %64 : vector<1x8x1xf32> to vector<1x8x128xf32>
    %78 = arith.minimumf %76, %77 : vector<1x8x128xf32>
    %79 = vector.broadcast %12 : vector<1x1x128xf32> to vector<1x8x128xf32>
    %80 = vector.broadcast %63 : vector<1x8x1xf32> to vector<1x8x128xf32>
    %81 = arith.maximumf %79, %80 : vector<1x8x128xf32>
    %82 = arith.subf %78, %81 : vector<1x8x128xf32>
    %cst_24 = arith.constant 0.000000e+00 : f32
    %83 = vector.broadcast %cst_24 : f32 to vector<1x8x128xf32>
    %84 = arith.maximumf %82, %83 : vector<1x8x128xf32>
    %85 = arith.mulf %75, %84 : vector<1x8x128xf32>
    %86 = vector.broadcast %16 : vector<1x1x128xf32> to vector<1x8x128xf32>
    %87 = vector.broadcast %65 : vector<1x8x1xf32> to vector<1x8x128xf32>
    %88 = arith.addf %86, %87 : vector<1x8x128xf32>
    %89 = arith.subf %88, %85 : vector<1x8x128xf32>
    %cst_25 = arith.constant 9.99999996E-13 : f32
    %90 = vector.broadcast %cst_25 : f32 to vector<1x8x128xf32>
    %91 = arith.maximumf %89, %90 : vector<1x8x128xf32>
    %92 = arith.divf %85, %91 : vector<1x8x128xf32>
    %cst_26 = arith.constant 0.000000e+00 : f32
    %93 = vector.broadcast %cst_26 : f32 to vector<1x8x1xf32>
    %94 = arith.cmpf ogt, %66, %93 : vector<1x8x1xf32>
    %cst_27 = arith.constant 0.000000e+00 : f32
    %95 = vector.shape_cast %94 : vector<1x8x1xi1> to vector<1x8x1xi1>
    %96 = vector.broadcast %95 : vector<1x8x1xi1> to vector<1x8x128xi1>
    %97 = vector.broadcast %cst_27 : f32 to vector<1x8x128xf32>
    %98 = arith.select %96, %92, %97 : vector<1x8x128xi1>, vector<1x8x128xf32>
    %cst_28 = arith.constant dense<0xFF800000> : vector<1x128xf32>
    %99 = vector.multi_reduction <maximumf>, %98, %cst_28 [1] : vector<1x8x128xf32> to vector<1x128xf32>
    %100 = vector.shape_cast %99 : vector<1x128xf32> to vector<1x1x128xf32>
    %101 = arith.maximumf %59, %100 : vector<1x1x128xf32>
    %c0_29 = arith.constant 0 : index
    %c16 = arith.constant 16 : index
    %c0_30 = arith.constant 0 : index
    %102 = vector.load %arg3[%c0_29, %c16, %c0_30] : memref<1x56x6xf32, #tpu.memory_space<vmem>>, vector<1x8x6xf32>
    %103 = vector.extract_strided_slice %102 {offsets = [0, 0, 0], sizes = [1, 8, 1], strides = [1, 1, 1]} : vector<1x8x6xf32> to vector<1x8x1xf32>
    %104 = vector.extract_strided_slice %102 {offsets = [0, 0, 1], sizes = [1, 8, 1], strides = [1, 1, 1]} : vector<1x8x6xf32> to vector<1x8x1xf32>
    %105 = vector.extract_strided_slice %102 {offsets = [0, 0, 2], sizes = [1, 8, 1], strides = [1, 1, 1]} : vector<1x8x6xf32> to vector<1x8x1xf32>
    %106 = vector.extract_strided_slice %102 {offsets = [0, 0, 3], sizes = [1, 8, 1], strides = [1, 1, 1]} : vector<1x8x6xf32> to vector<1x8x1xf32>
    %107 = vector.extract_strided_slice %102 {offsets = [0, 0, 4], sizes = [1, 8, 1], strides = [1, 1, 1]} : vector<1x8x6xf32> to vector<1x8x1xf32>
    %108 = vector.extract_strided_slice %102 {offsets = [0, 0, 5], sizes = [1, 8, 1], strides = [1, 1, 1]} : vector<1x8x6xf32> to vector<1x8x1xf32>
    %109 = vector.broadcast %9 : vector<1x1x128xf32> to vector<1x8x128xf32>
    %110 = vector.broadcast %104 : vector<1x8x1xf32> to vector<1x8x128xf32>
    %111 = arith.minimumf %109, %110 : vector<1x8x128xf32>
    %112 = vector.broadcast %6 : vector<1x1x128xf32> to vector<1x8x128xf32>
    %113 = vector.broadcast %103 : vector<1x8x1xf32> to vector<1x8x128xf32>
    %114 = arith.maximumf %112, %113 : vector<1x8x128xf32>
    %115 = arith.subf %111, %114 : vector<1x8x128xf32>
    %cst_31 = arith.constant 0.000000e+00 : f32
    %116 = vector.broadcast %cst_31 : f32 to vector<1x8x128xf32>
    %117 = arith.maximumf %115, %116 : vector<1x8x128xf32>
    %118 = vector.broadcast %15 : vector<1x1x128xf32> to vector<1x8x128xf32>
    %119 = vector.broadcast %106 : vector<1x8x1xf32> to vector<1x8x128xf32>
    %120 = arith.minimumf %118, %119 : vector<1x8x128xf32>
    %121 = vector.broadcast %12 : vector<1x1x128xf32> to vector<1x8x128xf32>
    %122 = vector.broadcast %105 : vector<1x8x1xf32> to vector<1x8x128xf32>
    %123 = arith.maximumf %121, %122 : vector<1x8x128xf32>
    %124 = arith.subf %120, %123 : vector<1x8x128xf32>
    %cst_32 = arith.constant 0.000000e+00 : f32
    %125 = vector.broadcast %cst_32 : f32 to vector<1x8x128xf32>
    %126 = arith.maximumf %124, %125 : vector<1x8x128xf32>
    %127 = arith.mulf %117, %126 : vector<1x8x128xf32>
    %128 = vector.broadcast %16 : vector<1x1x128xf32> to vector<1x8x128xf32>
    %129 = vector.broadcast %107 : vector<1x8x1xf32> to vector<1x8x128xf32>
    %130 = arith.addf %128, %129 : vector<1x8x128xf32>
    %131 = arith.subf %130, %127 : vector<1x8x128xf32>
    %cst_33 = arith.constant 9.99999996E-13 : f32
    %132 = vector.broadcast %cst_33 : f32 to vector<1x8x128xf32>
    %133 = arith.maximumf %131, %132 : vector<1x8x128xf32>
    %134 = arith.divf %127, %133 : vector<1x8x128xf32>
    %cst_34 = arith.constant 0.000000e+00 : f32
    %135 = vector.broadcast %cst_34 : f32 to vector<1x8x1xf32>
    %136 = arith.cmpf ogt, %108, %135 : vector<1x8x1xf32>
    %cst_35 = arith.constant 0.000000e+00 : f32
    %137 = vector.shape_cast %136 : vector<1x8x1xi1> to vector<1x8x1xi1>
    %138 = vector.broadcast %137 : vector<1x8x1xi1> to vector<1x8x128xi1>
    %139 = vector.broadcast %cst_35 : f32 to vector<1x8x128xf32>
    %140 = arith.select %138, %134, %139 : vector<1x8x128xi1>, vector<1x8x128xf32>
    %cst_36 = arith.constant dense<0xFF800000> : vector<1x128xf32>
    %141 = vector.multi_reduction <maximumf>, %140, %cst_36 [1] : vector<1x8x128xf32> to vector<1x128xf32>
    %142 = vector.shape_cast %141 : vector<1x128xf32> to vector<1x1x128xf32>
    %143 = arith.maximumf %101, %142 : vector<1x1x128xf32>
    %c0_37 = arith.constant 0 : index
    %c24 = arith.constant 24 : index
    %c0_38 = arith.constant 0 : index
    %144 = vector.load %arg3[%c0_37, %c24, %c0_38] : memref<1x56x6xf32, #tpu.memory_space<vmem>>, vector<1x8x6xf32>
    %145 = vector.extract_strided_slice %144 {offsets = [0, 0, 0], sizes = [1, 8, 1], strides = [1, 1, 1]} : vector<1x8x6xf32> to vector<1x8x1xf32>
    %146 = vector.extract_strided_slice %144 {offsets = [0, 0, 1], sizes = [1, 8, 1], strides = [1, 1, 1]} : vector<1x8x6xf32> to vector<1x8x1xf32>
    %147 = vector.extract_strided_slice %144 {offsets = [0, 0, 2], sizes = [1, 8, 1], strides = [1, 1, 1]} : vector<1x8x6xf32> to vector<1x8x1xf32>
    %148 = vector.extract_strided_slice %144 {offsets = [0, 0, 3], sizes = [1, 8, 1], strides = [1, 1, 1]} : vector<1x8x6xf32> to vector<1x8x1xf32>
    %149 = vector.extract_strided_slice %144 {offsets = [0, 0, 4], sizes = [1, 8, 1], strides = [1, 1, 1]} : vector<1x8x6xf32> to vector<1x8x1xf32>
    %150 = vector.extract_strided_slice %144 {offsets = [0, 0, 5], sizes = [1, 8, 1], strides = [1, 1, 1]} : vector<1x8x6xf32> to vector<1x8x1xf32>
    %151 = vector.broadcast %9 : vector<1x1x128xf32> to vector<1x8x128xf32>
    %152 = vector.broadcast %146 : vector<1x8x1xf32> to vector<1x8x128xf32>
    %153 = arith.minimumf %151, %152 : vector<1x8x128xf32>
    %154 = vector.broadcast %6 : vector<1x1x128xf32> to vector<1x8x128xf32>
    %155 = vector.broadcast %145 : vector<1x8x1xf32> to vector<1x8x128xf32>
    %156 = arith.maximumf %154, %155 : vector<1x8x128xf32>
    %157 = arith.subf %153, %156 : vector<1x8x128xf32>
    %cst_39 = arith.constant 0.000000e+00 : f32
    %158 = vector.broadcast %cst_39 : f32 to vector<1x8x128xf32>
    %159 = arith.maximumf %157, %158 : vector<1x8x128xf32>
    %160 = vector.broadcast %15 : vector<1x1x128xf32> to vector<1x8x128xf32>
    %161 = vector.broadcast %148 : vector<1x8x1xf32> to vector<1x8x128xf32>
    %162 = arith.minimumf %160, %161 : vector<1x8x128xf32>
    %163 = vector.broadcast %12 : vector<1x1x128xf32> to vector<1x8x128xf32>
    %164 = vector.broadcast %147 : vector<1x8x1xf32> to vector<1x8x128xf32>
    %165 = arith.maximumf %163, %164 : vector<1x8x128xf32>
    %166 = arith.subf %162, %165 : vector<1x8x128xf32>
    %cst_40 = arith.constant 0.000000e+00 : f32
    %167 = vector.broadcast %cst_40 : f32 to vector<1x8x128xf32>
    %168 = arith.maximumf %166, %167 : vector<1x8x128xf32>
    %169 = arith.mulf %159, %168 : vector<1x8x128xf32>
    %170 = vector.broadcast %16 : vector<1x1x128xf32> to vector<1x8x128xf32>
    %171 = vector.broadcast %149 : vector<1x8x1xf32> to vector<1x8x128xf32>
    %172 = arith.addf %170, %171 : vector<1x8x128xf32>
    %173 = arith.subf %172, %169 : vector<1x8x128xf32>
    %cst_41 = arith.constant 9.99999996E-13 : f32
    %174 = vector.broadcast %cst_41 : f32 to vector<1x8x128xf32>
    %175 = arith.maximumf %173, %174 : vector<1x8x128xf32>
    %176 = arith.divf %169, %175 : vector<1x8x128xf32>
    %cst_42 = arith.constant 0.000000e+00 : f32
    %177 = vector.broadcast %cst_42 : f32 to vector<1x8x1xf32>
    %178 = arith.cmpf ogt, %150, %177 : vector<1x8x1xf32>
    %cst_43 = arith.constant 0.000000e+00 : f32
    %179 = vector.shape_cast %178 : vector<1x8x1xi1> to vector<1x8x1xi1>
    %180 = vector.broadcast %179 : vector<1x8x1xi1> to vector<1x8x128xi1>
    %181 = vector.broadcast %cst_43 : f32 to vector<1x8x128xf32>
    %182 = arith.select %180, %176, %181 : vector<1x8x128xi1>, vector<1x8x128xf32>
    %cst_44 = arith.constant dense<0xFF800000> : vector<1x128xf32>
    %183 = vector.multi_reduction <maximumf>, %182, %cst_44 [1] : vector<1x8x128xf32> to vector<1x128xf32>
    %184 = vector.shape_cast %183 : vector<1x128xf32> to vector<1x1x128xf32>
    %185 = arith.maximumf %143, %184 : vector<1x1x128xf32>
    %c0_45 = arith.constant 0 : index
    %c32 = arith.constant 32 : index
    %c0_46 = arith.constant 0 : index
    %186 = vector.load %arg3[%c0_45, %c32, %c0_46] : memref<1x56x6xf32, #tpu.memory_space<vmem>>, vector<1x8x6xf32>
    %187 = vector.extract_strided_slice %186 {offsets = [0, 0, 0], sizes = [1, 8, 1], strides = [1, 1, 1]} : vector<1x8x6xf32> to vector<1x8x1xf32>
    %188 = vector.extract_strided_slice %186 {offsets = [0, 0, 1], sizes = [1, 8, 1], strides = [1, 1, 1]} : vector<1x8x6xf32> to vector<1x8x1xf32>
    %189 = vector.extract_strided_slice %186 {offsets = [0, 0, 2], sizes = [1, 8, 1], strides = [1, 1, 1]} : vector<1x8x6xf32> to vector<1x8x1xf32>
    %190 = vector.extract_strided_slice %186 {offsets = [0, 0, 3], sizes = [1, 8, 1], strides = [1, 1, 1]} : vector<1x8x6xf32> to vector<1x8x1xf32>
    %191 = vector.extract_strided_slice %186 {offsets = [0, 0, 4], sizes = [1, 8, 1], strides = [1, 1, 1]} : vector<1x8x6xf32> to vector<1x8x1xf32>
    %192 = vector.extract_strided_slice %186 {offsets = [0, 0, 5], sizes = [1, 8, 1], strides = [1, 1, 1]} : vector<1x8x6xf32> to vector<1x8x1xf32>
    %193 = vector.broadcast %9 : vector<1x1x128xf32> to vector<1x8x128xf32>
    %194 = vector.broadcast %188 : vector<1x8x1xf32> to vector<1x8x128xf32>
    %195 = arith.minimumf %193, %194 : vector<1x8x128xf32>
    %196 = vector.broadcast %6 : vector<1x1x128xf32> to vector<1x8x128xf32>
    %197 = vector.broadcast %187 : vector<1x8x1xf32> to vector<1x8x128xf32>
    %198 = arith.maximumf %196, %197 : vector<1x8x128xf32>
    %199 = arith.subf %195, %198 : vector<1x8x128xf32>
    %cst_47 = arith.constant 0.000000e+00 : f32
    %200 = vector.broadcast %cst_47 : f32 to vector<1x8x128xf32>
    %201 = arith.maximumf %199, %200 : vector<1x8x128xf32>
    %202 = vector.broadcast %15 : vector<1x1x128xf32> to vector<1x8x128xf32>
    %203 = vector.broadcast %190 : vector<1x8x1xf32> to vector<1x8x128xf32>
    %204 = arith.minimumf %202, %203 : vector<1x8x128xf32>
    %205 = vector.broadcast %12 : vector<1x1x128xf32> to vector<1x8x128xf32>
    %206 = vector.broadcast %189 : vector<1x8x1xf32> to vector<1x8x128xf32>
    %207 = arith.maximumf %205, %206 : vector<1x8x128xf32>
    %208 = arith.subf %204, %207 : vector<1x8x128xf32>
    %cst_48 = arith.constant 0.000000e+00 : f32
    %209 = vector.broadcast %cst_48 : f32 to vector<1x8x128xf32>
    %210 = arith.maximumf %208, %209 : vector<1x8x128xf32>
    %211 = arith.mulf %201, %210 : vector<1x8x128xf32>
    %212 = vector.broadcast %16 : vector<1x1x128xf32> to vector<1x8x128xf32>
    %213 = vector.broadcast %191 : vector<1x8x1xf32> to vector<1x8x128xf32>
    %214 = arith.addf %212, %213 : vector<1x8x128xf32>
    %215 = arith.subf %214, %211 : vector<1x8x128xf32>
    %cst_49 = arith.constant 9.99999996E-13 : f32
    %216 = vector.broadcast %cst_49 : f32 to vector<1x8x128xf32>
    %217 = arith.maximumf %215, %216 : vector<1x8x128xf32>
    %218 = arith.divf %211, %217 : vector<1x8x128xf32>
    %cst_50 = arith.constant 0.000000e+00 : f32
    %219 = vector.broadcast %cst_50 : f32 to vector<1x8x1xf32>
    %220 = arith.cmpf ogt, %192, %219 : vector<1x8x1xf32>
    %cst_51 = arith.constant 0.000000e+00 : f32
    %221 = vector.shape_cast %220 : vector<1x8x1xi1> to vector<1x8x1xi1>
    %222 = vector.broadcast %221 : vector<1x8x1xi1> to vector<1x8x128xi1>
    %223 = vector.broadcast %cst_51 : f32 to vector<1x8x128xf32>
    %224 = arith.select %222, %218, %223 : vector<1x8x128xi1>, vector<1x8x128xf32>
    %cst_52 = arith.constant dense<0xFF800000> : vector<1x128xf32>
    %225 = vector.multi_reduction <maximumf>, %224, %cst_52 [1] : vector<1x8x128xf32> to vector<1x128xf32>
    %226 = vector.shape_cast %225 : vector<1x128xf32> to vector<1x1x128xf32>
    %227 = arith.maximumf %185, %226 : vector<1x1x128xf32>
    %c0_53 = arith.constant 0 : index
    %c40 = arith.constant 40 : index
    %c0_54 = arith.constant 0 : index
    %228 = vector.load %arg3[%c0_53, %c40, %c0_54] : memref<1x56x6xf32, #tpu.memory_space<vmem>>, vector<1x8x6xf32>
    %229 = vector.extract_strided_slice %228 {offsets = [0, 0, 0], sizes = [1, 8, 1], strides = [1, 1, 1]} : vector<1x8x6xf32> to vector<1x8x1xf32>
    %230 = vector.extract_strided_slice %228 {offsets = [0, 0, 1], sizes = [1, 8, 1], strides = [1, 1, 1]} : vector<1x8x6xf32> to vector<1x8x1xf32>
    %231 = vector.extract_strided_slice %228 {offsets = [0, 0, 2], sizes = [1, 8, 1], strides = [1, 1, 1]} : vector<1x8x6xf32> to vector<1x8x1xf32>
    %232 = vector.extract_strided_slice %228 {offsets = [0, 0, 3], sizes = [1, 8, 1], strides = [1, 1, 1]} : vector<1x8x6xf32> to vector<1x8x1xf32>
    %233 = vector.extract_strided_slice %228 {offsets = [0, 0, 4], sizes = [1, 8, 1], strides = [1, 1, 1]} : vector<1x8x6xf32> to vector<1x8x1xf32>
    %234 = vector.extract_strided_slice %228 {offsets = [0, 0, 5], sizes = [1, 8, 1], strides = [1, 1, 1]} : vector<1x8x6xf32> to vector<1x8x1xf32>
    %235 = vector.broadcast %9 : vector<1x1x128xf32> to vector<1x8x128xf32>
    %236 = vector.broadcast %230 : vector<1x8x1xf32> to vector<1x8x128xf32>
    %237 = arith.minimumf %235, %236 : vector<1x8x128xf32>
    %238 = vector.broadcast %6 : vector<1x1x128xf32> to vector<1x8x128xf32>
    %239 = vector.broadcast %229 : vector<1x8x1xf32> to vector<1x8x128xf32>
    %240 = arith.maximumf %238, %239 : vector<1x8x128xf32>
    %241 = arith.subf %237, %240 : vector<1x8x128xf32>
    %cst_55 = arith.constant 0.000000e+00 : f32
    %242 = vector.broadcast %cst_55 : f32 to vector<1x8x128xf32>
    %243 = arith.maximumf %241, %242 : vector<1x8x128xf32>
    %244 = vector.broadcast %15 : vector<1x1x128xf32> to vector<1x8x128xf32>
    %245 = vector.broadcast %232 : vector<1x8x1xf32> to vector<1x8x128xf32>
    %246 = arith.minimumf %244, %245 : vector<1x8x128xf32>
    %247 = vector.broadcast %12 : vector<1x1x128xf32> to vector<1x8x128xf32>
    %248 = vector.broadcast %231 : vector<1x8x1xf32> to vector<1x8x128xf32>
    %249 = arith.maximumf %247, %248 : vector<1x8x128xf32>
    %250 = arith.subf %246, %249 : vector<1x8x128xf32>
    %cst_56 = arith.constant 0.000000e+00 : f32
    %251 = vector.broadcast %cst_56 : f32 to vector<1x8x128xf32>
    %252 = arith.maximumf %250, %251 : vector<1x8x128xf32>
    %253 = arith.mulf %243, %252 : vector<1x8x128xf32>
    %254 = vector.broadcast %16 : vector<1x1x128xf32> to vector<1x8x128xf32>
    %255 = vector.broadcast %233 : vector<1x8x1xf32> to vector<1x8x128xf32>
    %256 = arith.addf %254, %255 : vector<1x8x128xf32>
    %257 = arith.subf %256, %253 : vector<1x8x128xf32>
    %cst_57 = arith.constant 9.99999996E-13 : f32
    %258 = vector.broadcast %cst_57 : f32 to vector<1x8x128xf32>
    %259 = arith.maximumf %257, %258 : vector<1x8x128xf32>
    %260 = arith.divf %253, %259 : vector<1x8x128xf32>
    %cst_58 = arith.constant 0.000000e+00 : f32
    %261 = vector.broadcast %cst_58 : f32 to vector<1x8x1xf32>
    %262 = arith.cmpf ogt, %234, %261 : vector<1x8x1xf32>
    %cst_59 = arith.constant 0.000000e+00 : f32
    %263 = vector.shape_cast %262 : vector<1x8x1xi1> to vector<1x8x1xi1>
    %264 = vector.broadcast %263 : vector<1x8x1xi1> to vector<1x8x128xi1>
    %265 = vector.broadcast %cst_59 : f32 to vector<1x8x128xf32>
    %266 = arith.select %264, %260, %265 : vector<1x8x128xi1>, vector<1x8x128xf32>
    %cst_60 = arith.constant dense<0xFF800000> : vector<1x128xf32>
    %267 = vector.multi_reduction <maximumf>, %266, %cst_60 [1] : vector<1x8x128xf32> to vector<1x128xf32>
    %268 = vector.shape_cast %267 : vector<1x128xf32> to vector<1x1x128xf32>
    %269 = arith.maximumf %227, %268 : vector<1x1x128xf32>
    %c0_61 = arith.constant 0 : index
    %c48 = arith.constant 48 : index
    %c0_62 = arith.constant 0 : index
    %270 = vector.load %arg3[%c0_61, %c48, %c0_62] : memref<1x56x6xf32, #tpu.memory_space<vmem>>, vector<1x8x6xf32>
    %271 = vector.extract_strided_slice %270 {offsets = [0, 0, 0], sizes = [1, 8, 1], strides = [1, 1, 1]} : vector<1x8x6xf32> to vector<1x8x1xf32>
    %272 = vector.extract_strided_slice %270 {offsets = [0, 0, 1], sizes = [1, 8, 1], strides = [1, 1, 1]} : vector<1x8x6xf32> to vector<1x8x1xf32>
    %273 = vector.extract_strided_slice %270 {offsets = [0, 0, 2], sizes = [1, 8, 1], strides = [1, 1, 1]} : vector<1x8x6xf32> to vector<1x8x1xf32>
    %274 = vector.extract_strided_slice %270 {offsets = [0, 0, 3], sizes = [1, 8, 1], strides = [1, 1, 1]} : vector<1x8x6xf32> to vector<1x8x1xf32>
    %275 = vector.extract_strided_slice %270 {offsets = [0, 0, 4], sizes = [1, 8, 1], strides = [1, 1, 1]} : vector<1x8x6xf32> to vector<1x8x1xf32>
    %276 = vector.extract_strided_slice %270 {offsets = [0, 0, 5], sizes = [1, 8, 1], strides = [1, 1, 1]} : vector<1x8x6xf32> to vector<1x8x1xf32>
    %277 = vector.broadcast %9 : vector<1x1x128xf32> to vector<1x8x128xf32>
    %278 = vector.broadcast %272 : vector<1x8x1xf32> to vector<1x8x128xf32>
    %279 = arith.minimumf %277, %278 : vector<1x8x128xf32>
    %280 = vector.broadcast %6 : vector<1x1x128xf32> to vector<1x8x128xf32>
    %281 = vector.broadcast %271 : vector<1x8x1xf32> to vector<1x8x128xf32>
    %282 = arith.maximumf %280, %281 : vector<1x8x128xf32>
    %283 = arith.subf %279, %282 : vector<1x8x128xf32>
    %cst_63 = arith.constant 0.000000e+00 : f32
    %284 = vector.broadcast %cst_63 : f32 to vector<1x8x128xf32>
    %285 = arith.maximumf %283, %284 : vector<1x8x128xf32>
    %286 = vector.broadcast %15 : vector<1x1x128xf32> to vector<1x8x128xf32>
    %287 = vector.broadcast %274 : vector<1x8x1xf32> to vector<1x8x128xf32>
    %288 = arith.minimumf %286, %287 : vector<1x8x128xf32>
    %289 = vector.broadcast %12 : vector<1x1x128xf32> to vector<1x8x128xf32>
    %290 = vector.broadcast %273 : vector<1x8x1xf32> to vector<1x8x128xf32>
    %291 = arith.maximumf %289, %290 : vector<1x8x128xf32>
    %292 = arith.subf %288, %291 : vector<1x8x128xf32>
    %cst_64 = arith.constant 0.000000e+00 : f32
    %293 = vector.broadcast %cst_64 : f32 to vector<1x8x128xf32>
    %294 = arith.maximumf %292, %293 : vector<1x8x128xf32>
    %295 = arith.mulf %285, %294 : vector<1x8x128xf32>
    %296 = vector.broadcast %16 : vector<1x1x128xf32> to vector<1x8x128xf32>
    %297 = vector.broadcast %275 : vector<1x8x1xf32> to vector<1x8x128xf32>
    %298 = arith.addf %296, %297 : vector<1x8x128xf32>
    %299 = arith.subf %298, %295 : vector<1x8x128xf32>
    %cst_65 = arith.constant 9.99999996E-13 : f32
    %300 = vector.broadcast %cst_65 : f32 to vector<1x8x128xf32>
    %301 = arith.maximumf %299, %300 : vector<1x8x128xf32>
    %302 = arith.divf %295, %301 : vector<1x8x128xf32>
    %cst_66 = arith.constant 0.000000e+00 : f32
    %303 = vector.broadcast %cst_66 : f32 to vector<1x8x1xf32>
    %304 = arith.cmpf ogt, %276, %303 : vector<1x8x1xf32>
    %cst_67 = arith.constant 0.000000e+00 : f32
    %305 = vector.shape_cast %304 : vector<1x8x1xi1> to vector<1x8x1xi1>
    %306 = vector.broadcast %305 : vector<1x8x1xi1> to vector<1x8x128xi1>
    %307 = vector.broadcast %cst_67 : f32 to vector<1x8x128xf32>
    %308 = arith.select %306, %302, %307 : vector<1x8x128xi1>, vector<1x8x128xf32>
    %cst_68 = arith.constant dense<0xFF800000> : vector<1x128xf32>
    %309 = vector.multi_reduction <maximumf>, %308, %cst_68 [1] : vector<1x8x128xf32> to vector<1x128xf32>
    %310 = vector.shape_cast %309 : vector<1x128xf32> to vector<1x1x128xf32>
    %311 = arith.maximumf %269, %310 : vector<1x1x128xf32>
    %c0_69 = arith.constant 0 : index
    %c0_70 = arith.constant 0 : index
    %c0_71 = arith.constant 0 : index
    %312 = vector.load %arg4[%c0_69, %c0_70, %c0_71] : memref<1x1x128xf32, #tpu.memory_space<vmem>>, vector<1x1x128xf32>
    tpu.vector_store %arg4[%c0_69, %c0_70, %c0_71], %311 {strides = array<i32>} : memref<1x1x128xf32, #tpu.memory_space<vmem>>, vector<1x1x128xf32>,
    return
  }
  func.func @transform_0(%arg0: i32, %arg1: i32) -> (i32, i32, i32) {
    %c0_i32 = arith.constant 0 : i32
    %c0_i32_0 = arith.constant 0 : i32
    return %arg0, %c0_i32, %arg1 : i32, i32, i32
  }
  func.func @transform_1(%arg0: i32, %arg1: i32) -> (i32, i32, i32) {
    %c0_i32 = arith.constant 0 : i32
    %c0_i32_0 = arith.constant 0 : i32
    %c0_i32_1 = arith.constant 0 : i32
    return %arg0, %c0_i32, %c0_i32_0 : i32, i32, i32
  }
  func.func @transform_2(%arg0: i32, %arg1: i32) -> (i32, i32, i32) {
    %c0_i32 = arith.constant 0 : i32
    %c0_i32_0 = arith.constant 0 : i32
    return %arg0, %c0_i32, %arg1 : i32, i32, i32
  }
}

module attributes {stable_mosaic.version = 11 : i64} {
  func.func @_loss_kernel(%arg0: i32, %arg1: memref<2x8x128xf32, #tpu.memory_space<vmem>>, %arg2: memref<2x4x128xf32, #tpu.memory_space<vmem>>, %arg3: memref<2x3x128xf32, #tpu.memory_space<vmem>>, %arg4: memref<1x1x128xf32, #tpu.memory_space<vmem>>) attributes {dimension_semantics = [#tpu.dimension_semantics<parallel>], iteration_bounds = array<i64: 1>, scalar_prefetch = 0 : i64, scratch_operands = 0 : i64, tpu.core_type = #tpu.core_type<tc>, window_params = [{transform_indices = @transform_0, window_bounds = array<i64: 2, 8, 128>}, {transform_indices = @transform_1, window_bounds = array<i64: 2, 4, 128>}, {transform_indices = @transform_2, window_bounds = array<i64: 2, 3, 128>}, {transform_indices = @transform_3, window_bounds = array<i64: 1, 1, 128>}]} {
    %c0 = arith.constant 0 : index
    %c0_0 = arith.constant 0 : index
    %c0_1 = arith.constant 0 : index
    %0 = vector.load %arg1[%c0, %c0_0, %c0_1] : memref<2x8x128xf32, #tpu.memory_space<vmem>>, vector<2x8x128xf32>
    %c0_2 = arith.constant 0 : index
    %c0_3 = arith.constant 0 : index
    %c0_4 = arith.constant 0 : index
    %1 = vector.load %arg2[%c0_2, %c0_3, %c0_4] : memref<2x4x128xf32, #tpu.memory_space<vmem>>, vector<2x4x128xf32>
    %2 = vector.extract_strided_slice %1 {offsets = [0, 2, 0], sizes = [2, 1, 128], strides = [1, 1, 1]} : vector<2x4x128xf32> to vector<2x1x128xf32>
    %3 = vector.extract_strided_slice %0 {offsets = [0, 0, 0], sizes = [2, 4, 128], strides = [1, 1, 1]} : vector<2x8x128xf32> to vector<2x4x128xf32>
    %4 = vector.extract_strided_slice %0 {offsets = [0, 4, 0], sizes = [2, 4, 128], strides = [1, 1, 1]} : vector<2x8x128xf32> to vector<2x4x128xf32>
    %5 = arith.subf %3, %4 : vector<2x4x128xf32>
    %6 = vector.broadcast %2 : vector<2x1x128xf32> to vector<2x4x128xf32>
    %7 = arith.mulf %5, %6 : vector<2x4x128xf32>
    %8 = vector.extract_strided_slice %1 {offsets = [0, 0, 0], sizes = [2, 1, 128], strides = [1, 1, 1]} : vector<2x4x128xf32> to vector<2x1x128xf32>
    %9 = vector.extract_strided_slice %1 {offsets = [0, 1, 0], sizes = [2, 1, 128], strides = [1, 1, 1]} : vector<2x4x128xf32> to vector<2x1x128xf32>
    %10 = arith.subf %8, %9 : vector<2x1x128xf32>
    %11 = vector.extract_strided_slice %1 {offsets = [0, 3, 0], sizes = [2, 1, 128], strides = [1, 1, 1]} : vector<2x4x128xf32> to vector<2x1x128xf32>
    %12 = arith.mulf %10, %11 : vector<2x1x128xf32>
    %13 = arith.mulf %7, %7 : vector<2x4x128xf32>
    %cst = arith.constant dense<0.000000e+00> : vector<128xf32>
    %14 = vector.multi_reduction <add>, %13, %cst [0, 1] : vector<2x4x128xf32> to vector<128xf32>
    %15 = vector.shape_cast %14 : vector<128xf32> to vector<1x1x128xf32>
    %16 = arith.mulf %12, %12 : vector<2x1x128xf32>
    %cst_5 = arith.constant dense<0.000000e+00> : vector<128xf32>
    %17 = vector.multi_reduction <add>, %16, %cst_5 [0, 1] : vector<2x1x128xf32> to vector<128xf32>
    %18 = vector.shape_cast %17 : vector<128xf32> to vector<1x1x128xf32>
    %19 = arith.addf %15, %18 : vector<1x1x128xf32>
    %cst_6 = arith.constant 5.000000e-01 : f32
    %20 = vector.broadcast %cst_6 : f32 to vector<1x1x128xf32>
    %21 = arith.mulf %20, %19 : vector<1x1x128xf32>
    %c0_7 = arith.constant 0 : index
    %c0_8 = arith.constant 0 : index
    %c0_9 = arith.constant 0 : index
    %22 = vector.load %arg3[%c0_7, %c0_8, %c0_9] : memref<2x3x128xf32, #tpu.memory_space<vmem>>, vector<2x3x128xf32>
    %cst_10 = arith.constant 1.000000e+00 : f32
    %23 = vector.broadcast %cst_10 : f32 to vector<2x3x128xf32>
    %24 = arith.subf %23, %22 : vector<2x3x128xf32>
    %25 = math.log %24 : vector<2x3x128xf32>
    %cst_11 = arith.constant -1.000000e+02 : f32
    %26 = vector.broadcast %cst_11 : f32 to vector<2x3x128xf32>
    %27 = arith.maximumf %25, %26 : vector<2x3x128xf32>
    %cst_12 = arith.constant dense<0.000000e+00> : vector<128xf32>
    %28 = vector.multi_reduction <add>, %27, %cst_12 [0, 1] : vector<2x3x128xf32> to vector<128xf32>
    %29 = vector.shape_cast %28 : vector<128xf32> to vector<1x1x128xf32>
    %30 = arith.subf %21, %29 : vector<1x1x128xf32>
    %c0_13 = arith.constant 0 : index
    %c0_14 = arith.constant 0 : index
    %c0_15 = arith.constant 0 : index
    %31 = vector.load %arg4[%c0_13, %c0_14, %c0_15] : memref<1x1x128xf32, #tpu.memory_space<vmem>>, vector<1x1x128xf32>
    tpu.vector_store %arg4[%c0_13, %c0_14, %c0_15], %30 {strides = array<i32>} : memref<1x1x128xf32, #tpu.memory_space<vmem>>, vector<1x1x128xf32>,
    return
  }
  func.func @transform_0(%arg0: i32) -> (i32, i32, i32) {
    %c0_i32 = arith.constant 0 : i32
    %c0_i32_0 = arith.constant 0 : i32
    %c0_i32_1 = arith.constant 0 : i32
    return %c0_i32, %c0_i32_0, %arg0 : i32, i32, i32
  }
  func.func @transform_1(%arg0: i32) -> (i32, i32, i32) {
    %c0_i32 = arith.constant 0 : i32
    %c0_i32_0 = arith.constant 0 : i32
    %c0_i32_1 = arith.constant 0 : i32
    return %c0_i32, %c0_i32_0, %arg0 : i32, i32, i32
  }
  func.func @transform_2(%arg0: i32) -> (i32, i32, i32) {
    %c0_i32 = arith.constant 0 : i32
    %c0_i32_0 = arith.constant 0 : i32
    %c0_i32_1 = arith.constant 0 : i32
    return %c0_i32, %c0_i32_0, %arg0 : i32, i32, i32
  }
  func.func @transform_3(%arg0: i32) -> (i32, i32, i32) {
    %c0_i32 = arith.constant 0 : i32
    %c0_i32_0 = arith.constant 0 : i32
    %c0_i32_1 = arith.constant 0 : i32
    return %arg0, %c0_i32, %c0_i32_0 : i32, i32, i32
  }
}

</mosaic_0001>

<llo_original>
// kernel: v3_loss_forward.6
$region0: #{v3_loss_forward.6}
  #allocation0 [shape = 'u32[]', space=smem, size = 0x4, offset = 0x4, fixed_abs, tag = 'smem constant byte address 0x4 - core index']
  #allocation1 [shape = 'u32[144,128]{1,0:T(1,128)}', space=vmem, size = 0x12000, scoped, tag = 'internal scratch']
  %s0 = inlined_call_operand.vmem [shape: f32[2,4,256], index: 0, kind: input, shape index: {}]
  %s1 = inlined_call_operand.vmem [shape: f32[2,56,6], index: 1, kind: input, shape index: {}]
  %s2 = inlined_call_operand.vmem [shape: f32[2,1,256], index: 2, kind: output, shape index: {}]
  %s3 = sld [smem:[#allocation0]]
  $region41: #{v3_loss_forward.6} parent=0
    _
  %s5 = ssub.s32 1, %s3
  %s6 = scalar_select 0, %s5, %s3
  loop: start=0, step=1, limit=6
  $region2: #{v3_loss_forward.6} parent=0 // loop_pre_header
    _
  $region3: #{v3_loss_forward.6} parent=0 // loop_header
    %s8 = sphi 0, %s12
    %p9 = scmp.ge.s32.totalorder %s8, 6
    %s15 = sphi 0, %s27
    %s16 = sphi 0, %s23
    %s17 = sphi 0, %s15
    %s18 = sphi 0, %s16
    %s19 = sphi 0, %s17
    %s20 = sphi 0, %s18
    %s32 = sphi 0, %s34
    %s35 = sphi 0, %s32
    %s36 = sphi 0, %s35
    %s52 = sphi 0, %s36
    %s58 = sphi 0, %s60
    %s61 = sphi 0, %s58
    %s62 = sphi 0, %s61
    %s78 = sphi 0, %s62
    %s86 = sphi 0, %s88
    %s89 = sphi 0, %s86
    %s90 = sphi 0, %s89
    %s106 = sphi 0, %s90
  $region4: #{v3_loss_forward.6} parent=0 // loop_header_branch
    %11 = sbr.rel (%p9) target = $region8
  $region5: #{v3_loss_forward.6} parent=0 // loop_body
    %s13 = ssub.s32 %s8, 1
    %s14 = ssub.s32 %s8, 2
    %s21 = sadd.s32 1, %s16
    %p22 = scmp.ge.s32.totalorder %s21, 2
    %s23 = scalar_select %p22, 0, %s21
    %s24 = sadd.s32 1, %s15
    %s25 = scalar_select %p22, %s24, %s15
    %p26 = scmp.ge.s32.totalorder %s25, 2
    %s27 = scalar_select %p26, 0, %s25
    %s28 = ssub.s32 %s15, %s27
    %s29 = ssub.s32 %s16, %s23
    %s30 = sor.u32 %s28, %s29
    %p31 = scmp.eq.s32.totalorder %s30, 0
    %s33 = sadd.s32 %s32, 1
    %s34 = scalar_select %p31, %s32, %s33
    %p37 = pneg %p31
    %p38 = scmp.eq.s32.totalorder %s8, 3
    %p39 = por %p37, %p38
    %p40 = scmp.ne.s32.totalorder %s32, %s35
    %p41 = scmp.eq.s32.totalorder %s8, 0
    %p42 = por %p40, %p41
    %p43 = scmp.ne.s32.totalorder %s32, %s35
    %p44 = scmp.eq.s32.totalorder %s13, 3
    %p45 = por %p43, %p44
    %p46 = scmp.ne.s32.totalorder %s35, %s36
    %p47 = scmp.eq.s32.totalorder %s13, 0
    %p48 = por %p46, %p47
    %p49 = scmp.ne.s32.totalorder %s35, %s36
    %p50 = scmp.eq.s32.totalorder %s14, 3
    %p51 = por %p49, %p50
    %p53 = scmp.ne.s32.totalorder %s36, %s52
    %p54 = scmp.eq.s32.totalorder %s14, 0
    %p55 = por %p53, %p54
    %s56 = ssub.s32 %s15, %s27
    %p57 = scmp.eq.s32.totalorder %s56, 0
    %s59 = sadd.s32 %s58, 1
    %s60 = scalar_select %p57, %s58, %s59
    %p63 = pneg %p57
    %p64 = scmp.eq.s32.totalorder %s8, 3
    %p65 = por %p63, %p64
    %p66 = scmp.ne.s32.totalorder %s58, %s61
    %p67 = scmp.eq.s32.totalorder %s8, 0
    %p68 = por %p66, %p67
    %p69 = scmp.ne.s32.totalorder %s58, %s61
    %p70 = scmp.eq.s32.totalorder %s13, 3
    %p71 = por %p69, %p70
    %p72 = scmp.ne.s32.totalorder %s61, %s62
    %p73 = scmp.eq.s32.totalorder %s13, 0
    %p74 = por %p72, %p73
    %p75 = scmp.ne.s32.totalorder %s61, %s62
    %p76 = scmp.eq.s32.totalorder %s14, 3
    %p77 = por %p75, %p76
    %p79 = scmp.ne.s32.totalorder %s62, %s78
    %p80 = scmp.eq.s32.totalorder %s14, 0
    %p81 = por %p79, %p80
    %s82 = ssub.s32 %s15, %s27
    %s83 = ssub.s32 %s16, %s23
    %s84 = sor.u32 %s82, %s83
    %p85 = scmp.eq.s32.totalorder %s84, 0
    %s87 = sadd.s32 %s86, 1
    %s88 = scalar_select %p85, %s86, %s87
    %p91 = pneg %p85
    %p92 = scmp.eq.s32.totalorder %s8, 3
    %p93 = por %p91, %p92
    %p94 = scmp.ne.s32.totalorder %s86, %s89
    %p95 = scmp.eq.s32.totalorder %s8, 0
    %p96 = por %p94, %p95
    %p97 = scmp.ne.s32.totalorder %s86, %s89
    %p98 = scmp.eq.s32.totalorder %s13, 3
    %p99 = por %p97, %p98
    %p100 = scmp.ne.s32.totalorder %s89, %s90
    %p101 = scmp.eq.s32.totalorder %s13, 0
    %p102 = por %p100, %p101
    %p103 = scmp.ne.s32.totalorder %s89, %s90
    %p104 = scmp.eq.s32.totalorder %s14, 3
    %p105 = por %p103, %p104
    %p107 = scmp.ne.s32.totalorder %s90, %s106
    %p108 = scmp.eq.s32.totalorder %s14, 0
    %p109 = por %p107, %p108
    %p110 = scmp.le.s32.totalorder 1, %s8
    %p111 = scmp.lt.s32.totalorder %s8, 5
    %p112 = pnand %p110, %p111
    %p113 = pneg %p112
    // Predicated region
    $region9: #{v3_loss_forward.6} parent=5 // pred_check
      _
    $region10: #{v3_loss_forward.6} parent=5 // pred_check_branch
      %115 = sbr.rel (%p112) target = $region12
    $region11: #{v3_loss_forward.6} parent=5 // pred_region
      %s116 = ssub.s32 %s8, 1
    $region12: #{v3_loss_forward.6} parent=5 // pred_fallthru
      _
    %p117 = scmp.lt.s32.totalorder %s8, 4
    // Predicated region
    $region13: #{v3_loss_forward.6} parent=5 // pred_check
      %p118 = pneg %p117
    $region14: #{v3_loss_forward.6} parent=5 // pred_check_branch
      %120 = sbr.rel (%p118) target = $region16
    $region15: #{v3_loss_forward.6} parent=5 // pred_region
      // Predicated region
      $region17: #{v3_loss_forward.6} parent=15 // pred_check
        %p121 = pneg %p42
      $region18: #{v3_loss_forward.6} parent=15 // pred_check_branch
        %123 = sbr.rel (%p121) target = $region20
      $region19: #{v3_loss_forward.6} parent=15 // pred_region
        %p124 = scmp.lt.s32.totalorder %s15, 1
        %s125 = scalar_select %p124, %s15, 1
        %p126 = scmp.lt.s32.totalorder %s16, 1
        %s127 = scalar_select %p126, %s16, 1
        %s128 = smul.addr %s125, 2
        %s129 = sadd.s32 %s127, %s128
        %s130 = smul.addr %s129, 4
        %s131 = scalar_lea.vmem %s0, %s130
      $region20: #{v3_loss_forward.6} parent=15 // pred_fallthru
        _
      // Predicated region
      $region21: #{v3_loss_forward.6} parent=15 // pred_check
        %p132 = pneg %p68
      $region22: #{v3_loss_forward.6} parent=15 // pred_check_branch
        %134 = sbr.rel (%p132) target = $region24
      $region23: #{v3_loss_forward.6} parent=15 // pred_region
        %p135 = scmp.lt.s32.totalorder %s15, 1
        %s136 = scalar_select %p135, %s15, 1
        %s137 = smul.addr %s136, 7
        %s138 = smul.addr %s137, 8
        %s139 = scalar_lea.vmem %s1, %s138
      $region24: #{v3_loss_forward.6} parent=15 // pred_fallthru
        _
    $region16: #{v3_loss_forward.6} parent=5 // pred_fallthru
      _
    %p140 = scmp.le.s32.totalorder 1, %s8
    %p141 = scmp.lt.s32.totalorder %s8, 5
    %p142 = pnand %p140, %p141
    %p143 = pneg %p142
    // Predicated region
    $region25: #{v3_loss_forward.6} parent=5 // pred_check
      _
    $region26: #{v3_loss_forward.6} parent=5 // pred_check_branch
      %145 = sbr.rel (%p142) target = $region28
    $region27: #{v3_loss_forward.6} parent=5 // pred_region
      %s146 = ssub.s32 %s8, 1
      %p147 = scmp.lt.s32.totalorder %s17, 1
      %s148 = scalar_select %p147, %s17, 1
      %p149 = scmp.lt.s32.totalorder %s18, 1
      %s150 = scalar_select %p149, %s18, 1
      %s151 = smul.addr %s148, 2
      %s152 = sadd.s32 %s150, %s151
      %s153 = smul.addr %s152, 4
      %s154 = scalar_lea.vmem %s0, %s153
      %p155 = pneg %p48
      %p156 = pneg %p45
      %p157 = scmp.lt.s32.totalorder %s17, 1
      %s158 = scalar_select %p157, %s17, 1
      %s159 = smul.addr %s158, 7
      %s160 = smul.addr %s159, 8
      %s161 = scalar_lea.vmem %s1, %s160
      %p162 = pneg %p74
      %p163 = pneg %p71
      %p164 = pneg %p102
      %p165 = pneg %p99
      %p166 = scmp.lt.s32.totalorder %s17, 1
      %s167 = scalar_select %p166, %s17, 1
      %p168 = scmp.lt.s32.totalorder %s18, 1
      %s169 = scalar_select %p168, %s18, 1
      %s170 = smul.addr %s167, 2
      %s171 = sadd.s32 %s169, %s170
      %s172 = scalar_lea.vmem %s2, %s171
      %p173 = scmp.lt.s32.totalorder %s17, 1
      %s174 = scalar_select %p173, %s17, 1
      %p175 = scmp.lt.s32.totalorder %s18, 1
      %s176 = scalar_select %p175, %s18, 1
      %s177 = smul.addr %s174, 2
      %s178 = sadd.s32 %s176, %s177
      %s179 = smul.addr %s178, 4
      %s180 = scalar_lea.vmem %s0, %s179
      %p181 = scmp.lt.s32.totalorder %s17, 1
      %s182 = scalar_select %p181, %s17, 1
      %s183 = smul.addr %s182, 7
      %s184 = smul.addr %s183, 8
      %s185 = scalar_lea.vmem %s1, %s184
      %p186 = scmp.lt.s32.totalorder %s17, 1
      %s187 = scalar_select %p186, %s17, 1
      %p188 = scmp.lt.s32.totalorder %s18, 1
      %s189 = scalar_select %p188, %s18, 1
      %s190 = smul.addr %s187, 2
      %s191 = sadd.s32 %s189, %s190
      %s192 = scalar_lea.vmem %s2, %s191
      %v193 = vld [vmem:[%s180] sm:$0x1]
      %v194 = vld [vmem:[%s180 + $0x1] sm:$0x1]
      %v195 = vld [vmem:[%s180 + $0x2] sm:$0x1]
      %v196 = vld [vmem:[%s180 + $0x3] sm:$0x1]
      %v197 = vmul.f32 %v195, 0.5
      %v198 = vsub.f32 %v193, %v197
      %v199 = vadd.f32 %v193, %v197
      %v200 = vmul.f32 %v196, 0.5
      %v201 = vsub.f32 %v194, %v200
      %v202 = vadd.f32 %v194, %v200
      %v203 = vmul.f32 %v195, %v196
      %v204 = vld [vmem:[%s185] sm:$0xff]
      %v205 = vlaneseq
      %v206 = vshrl.u32 %v205, 7
      %v207 = vsub.s32 0, %v206
      %v208 = vrot.slane %v199, %v207
      %210 = vset.pattern.permute.xlu0 1
      %211 = vperm.xlu0 %210, %v204
      %v212 = vpop.permute.xlu0 %211
      %v214 = vmin.f32 %v208, %v212
      %v215 = vlaneseq
      %v216 = vshrl.u32 %v215, 7
      %v217 = vsub.s32 0, %v216
      %v218 = vrot.slane %v198, %v217
      %219 = vset.pattern.permute.xlu0 0
      %220 = vperm.xlu0 %219, %v204
      %v221 = vpop.permute.xlu0 %220
      %v223 = vmax.f32 %v218, %v221
      %v224 = vsub.f32 %v214, %v223
      %v225 = vmax.f32 %v224, 0.0
      %v226 = vlaneseq
      %v227 = vshrl.u32 %v226, 7
      %v228 = vsub.s32 0, %v227
      %v229 = vrot.slane %v202, %v228
      %230 = vset.pattern.permute.xlu0 3
      %231 = vperm.xlu0 %230, %v204
      %v232 = vpop.permute.xlu0 %231
      %v234 = vmin.f32 %v229, %v232
      %v235 = vlaneseq
      %v236 = vshrl.u32 %v235, 7
      %v237 = vsub.s32 0, %v236
      %v238 = vrot.slane %v201, %v237
      %239 = vset.pattern.permute.xlu0 2
      %240 = vperm.xlu0 %239, %v204
      %v241 = vpop.permute.xlu0 %240
      %v243 = vmax.f32 %v238, %v241
      %v244 = vsub.f32 %v234, %v243
      %v245 = vmax.f32 %v244, 0.0
      %v246 = vmul.f32 %v225, %v245
      %v247 = vlaneseq
      %v248 = vshrl.u32 %v247, 7
      %v249 = vsub.s32 0, %v248
      %v250 = vrot.slane %v203, %v249
      %251 = vset.pattern.permute.xlu0 4
      %252 = vperm.xlu0 %251, %v204
      %v253 = vpop.permute.xlu0 %252
      %v255 = vadd.f32 %v250, %v253
      %v256 = vsub.f32 %v255, %v246
      %v257 = vmax.f32 %v256, 1e-12
      %v258 = vrcp.pop %v257
      %v259 = vmul.f32 %v246, %v258
      %vm260 = vcmp.gt.f32.partialorder %v204, 0.0
      %v261 = vsel %vm260, 1, 0
      %262 = vset.pattern.permute.xlu0 5
      %263 = vperm.xlu0 %262, %v261
      %v264 = vpop.permute.xlu0 %263
      %vm265 = vcmp.eq.s32.totalorder %v264, 1
      %v266 = vsel %vm265, %v259, 0.0
      %v267 = vrot.slane %v266, 4
      %v268 = vmax.f32 %v266, %v267
      %v269 = vrot.slane %v268, 2
      %v270 = vmax.f32 %v268, %v269
      %v271 = vrot.slane %v270, 1
      %v272 = vmax.f32 %v270, %v271
      %v273 = vmax.f32 %v272, 0.0
      %v274 = vld [vmem:[%s185 + $0x8] sm:$0xff]
      %276 = vset.pattern.permute.xlu0 1
      %277 = vperm.xlu0 %276, %v274
      %v278 = vpop.permute.xlu0 %277
      %v280 = vmin.f32 %v208, %v278
      %281 = vset.pattern.permute.xlu0 0
      %282 = vperm.xlu0 %281, %v274
      %v283 = vpop.permute.xlu0 %282
      %v285 = vmax.f32 %v218, %v283
      %v286 = vsub.f32 %v280, %v285
      %v287 = vmax.f32 %v286, 0.0
      %288 = vset.pattern.permute.xlu0 3
      %289 = vperm.xlu0 %288, %v274
      %v290 = vpop.permute.xlu0 %289
      %v292 = vmin.f32 %v229, %v290
      %293 = vset.pattern.permute.xlu0 2
      %294 = vperm.xlu0 %293, %v274
      %v295 = vpop.permute.xlu0 %294
      %v297 = vmax.f32 %v238, %v295
      %v298 = vsub.f32 %v292, %v297
      %v299 = vmax.f32 %v298, 0.0
      %v300 = vmul.f32 %v287, %v299
      %301 = vset.pattern.permute.xlu0 4
      %302 = vperm.xlu0 %301, %v274
      %v303 = vpop.permute.xlu0 %302
      %v305 = vadd.f32 %v250, %v303
      %v306 = vsub.f32 %v305, %v300
      %v307 = vmax.f32 %v306, 1e-12
      %v308 = vrcp.pop %v307
      %v309 = vmul.f32 %v300, %v308
      %vm310 = vcmp.gt.f32.partialorder %v274, 0.0
      %v311 = vsel %vm310, 1, 0
      %312 = vset.pattern.permute.xlu0 5
      %313 = vperm.xlu0 %312, %v311
      %v314 = vpop.permute.xlu0 %313
      %vm315 = vcmp.eq.s32.totalorder %v314, 1
      %v316 = vsel %vm315, %v309, 0.0
      %v317 = vrot.slane %v316, 4
      %v318 = vmax.f32 %v316, %v317
      %v319 = vrot.slane %v318, 2
      %v320 = vmax.f32 %v318, %v319
      %v321 = vrot.slane %v320, 1
      %v322 = vmax.f32 %v320, %v321
      %v323 = vmax.f32 %v273, %v322
      %v324 = vld [vmem:[%s185 + $0x10] sm:$0xff]
      %326 = vset.pattern.permute.xlu0 1
      %327 = vperm.xlu0 %326, %v324
      %v328 = vpop.permute.xlu0 %327
      %v330 = vmin.f32 %v208, %v328
      %331 = vset.pattern.permute.xlu0 0
      %332 = vperm.xlu0 %331, %v324
      %v333 = vpop.permute.xlu0 %332
      %v335 = vmax.f32 %v218, %v333
      %v336 = vsub.f32 %v330, %v335
      %v337 = vmax.f32 %v336, 0.0
      %338 = vset.pattern.permute.xlu0 3
      %339 = vperm.xlu0 %338, %v324
      %v340 = vpop.permute.xlu0 %339
      %v342 = vmin.f32 %v229, %v340
      %343 = vset.pattern.permute.xlu0 2
      %344 = vperm.xlu0 %343, %v324
      %v345 = vpop.permute.xlu0 %344
      %v347 = vmax.f32 %v238, %v345
      %v348 = vsub.f32 %v342, %v347
      %v349 = vmax.f32 %v348, 0.0
      %v350 = vmul.f32 %v337, %v349
      %351 = vset.pattern.permute.xlu0 4
      %352 = vperm.xlu0 %351, %v324
      %v353 = vpop.permute.xlu0 %352
      %v355 = vadd.f32 %v250, %v353
      %v356 = vsub.f32 %v355, %v350
      %v357 = vmax.f32 %v356, 1e-12
      %v358 = vrcp.pop %v357
      %v359 = vmul.f32 %v350, %v358
      %vm360 = vcmp.gt.f32.partialorder %v324, 0.0
      %v361 = vsel %vm360, 1, 0
      %362 = vset.pattern.permute.xlu0 5
      %363 = vperm.xlu0 %362, %v361
      %v364 = vpop.permute.xlu0 %363
      %vm365 = vcmp.eq.s32.totalorder %v364, 1
      %v366 = vsel %vm365, %v359, 0.0
      %v367 = vrot.slane %v366, 4
      %v368 = vmax.f32 %v366, %v367
      %v369 = vrot.slane %v368, 2
      %v370 = vmax.f32 %v368, %v369
      %v371 = vrot.slane %v370, 1
      %v372 = vmax.f32 %v370, %v371
      %v373 = vmax.f32 %v323, %v372
      %v374 = vld [vmem:[%s185 + $0x18] sm:$0xff]
      %376 = vset.pattern.permute.xlu0 1
      %377 = vperm.xlu0 %376, %v374
      %v378 = vpop.permute.xlu0 %377
      %v380 = vmin.f32 %v208, %v378
      %381 = vset.pattern.permute.xlu0 0
      %382 = vperm.xlu0 %381, %v374
      %v383 = vpop.permute.xlu0 %382
      %v385 = vmax.f32 %v218, %v383
      %v386 = vsub.f32 %v380, %v385
      %v387 = vmax.f32 %v386, 0.0
      %388 = vset.pattern.permute.xlu0 3
      %389 = vperm.xlu0 %388, %v374
      %v390 = vpop.permute.xlu0 %389
      %v392 = vmin.f32 %v229, %v390
      %393 = vset.pattern.permute.xlu0 2
      %394 = vperm.xlu0 %393, %v374
      %v395 = vpop.permute.xlu0 %394
      %v397 = vmax.f32 %v238, %v395
      %v398 = vsub.f32 %v392, %v397
      %v399 = vmax.f32 %v398, 0.0
      %v400 = vmul.f32 %v387, %v399
      %401 = vset.pattern.permute.xlu0 4
      %402 = vperm.xlu0 %401, %v374
      %v403 = vpop.permute.xlu0 %402
      %v405 = vadd.f32 %v250, %v403
      %v406 = vsub.f32 %v405, %v400
      %v407 = vmax.f32 %v406, 1e-12
      %v408 = vrcp.pop %v407
      %v409 = vmul.f32 %v400, %v408
      %vm410 = vcmp.gt.f32.partialorder %v374, 0.0
      %v411 = vsel %vm410, 1, 0
      %412 = vset.pattern.permute.xlu0 5
      %413 = vperm.xlu0 %412, %v411
      %v414 = vpop.permute.xlu0 %413
      %vm415 = vcmp.eq.s32.totalorder %v414, 1
      %v416 = vsel %vm415, %v409, 0.0
      %v417 = vrot.slane %v416, 4
      %v418 = vmax.f32 %v416, %v417
      %v419 = vrot.slane %v418, 2
      %v420 = vmax.f32 %v418, %v419
      %v421 = vrot.slane %v420, 1
      %v422 = vmax.f32 %v420, %v421
      %v423 = vmax.f32 %v373, %v422
      %v424 = vld [vmem:[%s185 + $0x20] sm:$0xff]
      %426 = vset.pattern.permute.xlu0 1
      %427 = vperm.xlu0 %426, %v424
      %v428 = vpop.permute.xlu0 %427
      %v430 = vmin.f32 %v208, %v428
      %431 = vset.pattern.permute.xlu0 0
      %432 = vperm.xlu0 %431, %v424
      %v433 = vpop.permute.xlu0 %432
      %v435 = vmax.f32 %v218, %v433
      %v436 = vsub.f32 %v430, %v435
      %v437 = vmax.f32 %v436, 0.0
      %438 = vset.pattern.permute.xlu0 3
      %439 = vperm.xlu0 %438, %v424
      %v440 = vpop.permute.xlu0 %439
      %v442 = vmin.f32 %v229, %v440
      %443 = vset.pattern.permute.xlu0 2
      %444 = vperm.xlu0 %443, %v424
      %v445 = vpop.permute.xlu0 %444
      %v447 = vmax.f32 %v238, %v445
      %v448 = vsub.f32 %v442, %v447
      %v449 = vmax.f32 %v448, 0.0
      %v450 = vmul.f32 %v437, %v449
      %451 = vset.pattern.permute.xlu0 4
      %452 = vperm.xlu0 %451, %v424
      %v453 = vpop.permute.xlu0 %452
      %v455 = vadd.f32 %v250, %v453
      %v456 = vsub.f32 %v455, %v450
      %v457 = vmax.f32 %v456, 1e-12
      %v458 = vrcp.pop %v457
      %v459 = vmul.f32 %v450, %v458
      %vm460 = vcmp.gt.f32.partialorder %v424, 0.0
      %v461 = vsel %vm460, 1, 0
      %462 = vset.pattern.permute.xlu0 5
      %463 = vperm.xlu0 %462, %v461
      %v464 = vpop.permute.xlu0 %463
      %vm465 = vcmp.eq.s32.totalorder %v464, 1
      %v466 = vsel %vm465, %v459, 0.0
      %v467 = vrot.slane %v466, 4
      %v468 = vmax.f32 %v466, %v467
      %v469 = vrot.slane %v468, 2
      %v470 = vmax.f32 %v468, %v469
      %v471 = vrot.slane %v470, 1
      %v472 = vmax.f32 %v470, %v471
      %v473 = vmax.f32 %v423, %v472
      %v474 = vld [vmem:[%s185 + $0x28] sm:$0xff]
      %476 = vset.pattern.permute.xlu0 1
      %477 = vperm.xlu0 %476, %v474
      %v478 = vpop.permute.xlu0 %477
      %v480 = vmin.f32 %v208, %v478
      %481 = vset.pattern.permute.xlu0 0
      %482 = vperm.xlu0 %481, %v474
      %v483 = vpop.permute.xlu0 %482
      %v485 = vmax.f32 %v218, %v483
      %v486 = vsub.f32 %v480, %v485
      %v487 = vmax.f32 %v486, 0.0
      %488 = vset.pattern.permute.xlu0 3
      %489 = vperm.xlu0 %488, %v474
      %v490 = vpop.permute.xlu0 %489
      %v492 = vmin.f32 %v229, %v490
      %493 = vset.pattern.permute.xlu0 2
      %494 = vperm.xlu0 %493, %v474
      %v495 = vpop.permute.xlu0 %494
      %v497 = vmax.f32 %v238, %v495
      %v498 = vsub.f32 %v492, %v497
      %v499 = vmax.f32 %v498, 0.0
      %v500 = vmul.f32 %v487, %v499
      %501 = vset.pattern.permute.xlu0 4
      %502 = vperm.xlu0 %501, %v474
      %v503 = vpop.permute.xlu0 %502
      %v505 = vadd.f32 %v250, %v503
      %v506 = vsub.f32 %v505, %v500
      %v507 = vmax.f32 %v506, 1e-12
      %v508 = vrcp.pop %v507
      %v509 = vmul.f32 %v500, %v508
      %vm510 = vcmp.gt.f32.partialorder %v474, 0.0
      %v511 = vsel %vm510, 1, 0
      %512 = vset.pattern.permute.xlu0 5
      %513 = vperm.xlu0 %512, %v511
      %v514 = vpop.permute.xlu0 %513
      %vm515 = vcmp.eq.s32.totalorder %v514, 1
      %v516 = vsel %vm515, %v509, 0.0
      %v517 = vrot.slane %v516, 4
      %v518 = vmax.f32 %v516, %v517
      %v519 = vrot.slane %v518, 2
      %v520 = vmax.f32 %v518, %v519
      %v521 = vrot.slane %v520, 1
      %v522 = vmax.f32 %v520, %v521
      %v523 = vmax.f32 %v473, %v522
      %v524 = vld [vmem:[%s185 + $0x30] sm:$0xff]
      %526 = vset.pattern.permute.xlu0 1
      %527 = vperm.xlu0 %526, %v524
      %v528 = vpop.permute.xlu0 %527
      %v530 = vmin.f32 %v208, %v528
      %531 = vset.pattern.permute.xlu0 0
      %532 = vperm.xlu0 %531, %v524
      %v533 = vpop.permute.xlu0 %532
      %v535 = vmax.f32 %v218, %v533
      %v536 = vsub.f32 %v530, %v535
      %v537 = vmax.f32 %v536, 0.0
      %538 = vset.pattern.permute.xlu0 3
      %539 = vperm.xlu0 %538, %v524
      %v540 = vpop.permute.xlu0 %539
      %v542 = vmin.f32 %v229, %v540
      %543 = vset.pattern.permute.xlu0 2
      %544 = vperm.xlu0 %543, %v524
      %v545 = vpop.permute.xlu0 %544
      %v547 = vmax.f32 %v238, %v545
      %v548 = vsub.f32 %v542, %v547
      %v549 = vmax.f32 %v548, 0.0
      %v550 = vmul.f32 %v537, %v549
      %551 = vset.pattern.permute.xlu0 4
      %552 = vperm.xlu0 %551, %v524
      %v553 = vpop.permute.xlu0 %552
      %v555 = vadd.f32 %v250, %v553
      %v556 = vsub.f32 %v555, %v550
      %v557 = vmax.f32 %v556, 1e-12
      %v558 = vrcp.pop %v557
      %v559 = vmul.f32 %v550, %v558
      %vm560 = vcmp.gt.f32.partialorder %v524, 0.0
      %v561 = vsel %vm560, 1, 0
      %562 = vset.pattern.permute.xlu0 5
      %563 = vperm.xlu0 %562, %v561
      %v564 = vpop.permute.xlu0 %563
      %vm565 = vcmp.eq.s32.totalorder %v564, 1
      %v566 = vsel %vm565, %v559, 0.0
      %v567 = vrot.slane %v566, 4
      %v568 = vmax.f32 %v566, %v567
      %v569 = vrot.slane %v568, 2
      %v570 = vmax.f32 %v568, %v569
      %v571 = vrot.slane %v570, 1
      %v572 = vmax.f32 %v570, %v571
      %v573 = vmax.f32 %v523, %v572
      %574 = vst [vmem:[%s192] sm:$0x1] %v573
      %p575 = scmp.lt.s32.totalorder %s17, 1
      %s576 = scalar_select %p575, %s17, 1
      %p577 = scmp.lt.s32.totalorder %s18, 1
      %s578 = scalar_select %p577, %s18, 1
      %s579 = smul.addr %s576, 2
      %s580 = sadd.s32 %s578, %s579
      %s581 = scalar_lea.vmem %s2, %s580
      // Predicated region
      $region29: #{v3_loss_forward.6} parent=27 // pred_check
        %p582 = pneg %p99
      $region30: #{v3_loss_forward.6} parent=27 // pred_check_branch
        %584 = sbr.rel (%p582) target = $region32
      $region31: #{v3_loss_forward.6} parent=27 // pred_region
        _
      $region32: #{v3_loss_forward.6} parent=27 // pred_fallthru
        _
    $region28: #{v3_loss_forward.6} parent=5 // pred_fallthru
      _
    %p585 = scmp.le.s32.totalorder 2, %s8
    // Predicated region
    $region33: #{v3_loss_forward.6} parent=5 // pred_check
      %p586 = pneg %p585
    $region34: #{v3_loss_forward.6} parent=5 // pred_check_branch
      %588 = sbr.rel (%p586) target = $region36
    $region35: #{v3_loss_forward.6} parent=5 // pred_region
      %s589 = ssub.s32 %s8, 2
      // Predicated region
      $region37: #{v3_loss_forward.6} parent=35 // pred_check
        %p590 = pneg %p105
      $region38: #{v3_loss_forward.6} parent=35 // pred_check_branch
        %592 = sbr.rel (%p590) target = $region40
      $region39: #{v3_loss_forward.6} parent=35 // pred_region
        %p593 = scmp.lt.s32.totalorder %s19, 1
        %s594 = scalar_select %p593, %s19, 1
        %p595 = scmp.lt.s32.totalorder %s20, 1
        %s596 = scalar_select %p595, %s20, 1
        %s597 = smul.addr %s594, 2
        %s598 = sadd.s32 %s596, %s597
        %s599 = scalar_lea.vmem %s2, %s598
      $region40: #{v3_loss_forward.6} parent=35 // pred_fallthru
        _
    $region36: #{v3_loss_forward.6} parent=5 // pred_fallthru
      _
  $region6: #{v3_loss_forward.6} parent=0 // loop_footer
    %s12 = sadd.s32 1, %s8
  $region7: #{v3_loss_forward.6} parent=0 // loop_footer_branch
    %7 = sbr.rel target = $region3
  $region8: #{v3_loss_forward.6} parent=0 // loop_exit
    _

// kernel: v3_loss_forward.7
$region0: #{v3_loss_forward.7}
  #allocation0 [shape = 'u32[]', space=smem, size = 0x4, offset = 0x4, fixed_abs, tag = 'smem constant byte address 0x4 - core index']
  #allocation1 [shape = 'u32[144,128]{1,0:T(1,128)}', space=vmem, size = 0x12000, scoped, tag = 'internal scratch']
  %s0 = inlined_call_operand.vmem [shape: f32[2,8,256], index: 0, kind: input, shape index: {}]
  %s1 = inlined_call_operand.vmem [shape: f32[2,4,256], index: 1, kind: input, shape index: {}]
  %s2 = inlined_call_operand.vmem [shape: f32[2,3,256], index: 2, kind: input, shape index: {}]
  %s3 = inlined_call_operand.vmem [shape: f32[2,1,128], index: 3, kind: output, shape index: {}]
  %s4 = sld [smem:[#allocation0]]
  $region165: #{v3_loss_forward.7} parent=0
    _
  %s6 = ssub.s32 1, %s4
  %s7 = scalar_select 0, %s6, %s4
  $region1: #{v3_loss_forward.7} parent=0
    #allocation2 [shape = 'u8[16384]{0}', space=vmem, size = 0x4000, scoped, tag = 'input window, operand 0']
    #allocation3 [shape = 'u8[8192]{0}', space=vmem, size = 0x2000, scoped, tag = 'input window, operand 1']
    #allocation4 [shape = 'u8[8192]{0}', space=vmem, size = 0x2000, scoped, tag = 'input window, operand 2']
    loop: start=0, step=1, limit=4
    $region2: #{v3_loss_forward.7} parent=1 // loop_pre_header
      _
    $region3: #{v3_loss_forward.7} parent=1 // loop_header
      %s9 = sphi 0, %s13
      %p10 = scmp.ge.s32.totalorder %s9, 4
      %s19 = sphi 0, %s21
      %s22 = sphi 0, %s19
      %s23 = sphi 0, %s22
      %s39 = sphi 0, %s23
      %s45 = sphi 0, %s47
      %s48 = sphi 0, %s45
      %s49 = sphi 0, %s48
      %s65 = sphi 0, %s49
      %s71 = sphi 0, %s73
      %s74 = sphi 0, %s71
      %s75 = sphi 0, %s74
      %s91 = sphi 0, %s75
      %s97 = sphi 0, %s99
      %s100 = sphi 0, %s97
      %s101 = sphi 0, %s100
      %s117 = sphi 0, %s101
    $region4: #{v3_loss_forward.7} parent=1 // loop_header_branch
      %12 = sbr.rel (%p10) target = $region8
    $region5: #{v3_loss_forward.7} parent=1 // loop_body
      %s14 = ssub.s32 %s9, 1
      %s15 = ssub.s32 %s9, 2
      %s16 = sadd.s32 %s9, 1
      %s17 = ssub.s32 %s9, %s16
      %p18 = scmp.eq.s32.totalorder %s17, 0
      %s20 = sadd.s32 %s19, 1
      %s21 = scalar_select %p18, %s19, %s20
      %p24 = pneg %p18
      %p25 = scmp.eq.s32.totalorder %s9, 1
      %p26 = por %p24, %p25
      %p27 = scmp.ne.s32.totalorder %s19, %s22
      %p28 = scmp.eq.s32.totalorder %s9, 0
      %p29 = por %p27, %p28
      %p30 = scmp.ne.s32.totalorder %s19, %s22
      %p31 = scmp.eq.s32.totalorder %s14, 1
      %p32 = por %p30, %p31
      %p33 = scmp.ne.s32.totalorder %s22, %s23
      %p34 = scmp.eq.s32.totalorder %s14, 0
      %p35 = por %p33, %p34
      %p36 = scmp.ne.s32.totalorder %s22, %s23
      %p37 = scmp.eq.s32.totalorder %s15, 1
      %p38 = por %p36, %p37
      %p40 = scmp.ne.s32.totalorder %s23, %s39
      %p41 = scmp.eq.s32.totalorder %s15, 0
      %p42 = por %p40, %p41
      %s43 = ssub.s32 %s9, %s16
      %p44 = scmp.eq.s32.totalorder %s43, 0
      %s46 = sadd.s32 %s45, 1
      %s47 = scalar_select %p44, %s45, %s46
      %p50 = pneg %p44
      %p51 = scmp.eq.s32.totalorder %s9, 1
      %p52 = por %p50, %p51
      %p53 = scmp.ne.s32.totalorder %s45, %s48
      %p54 = scmp.eq.s32.totalorder %s9, 0
      %p55 = por %p53, %p54
      %p56 = scmp.ne.s32.totalorder %s45, %s48
      %p57 = scmp.eq.s32.totalorder %s14, 1
      %p58 = por %p56, %p57
      %p59 = scmp.ne.s32.totalorder %s48, %s49
      %p60 = scmp.eq.s32.totalorder %s14, 0
      %p61 = por %p59, %p60
      %p62 = scmp.ne.s32.totalorder %s48, %s49
      %p63 = scmp.eq.s32.totalorder %s15, 1
      %p64 = por %p62, %p63
      %p66 = scmp.ne.s32.totalorder %s49, %s65
      %p67 = scmp.eq.s32.totalorder %s15, 0
      %p68 = por %p66, %p67
      %s69 = ssub.s32 %s9, %s16
      %p70 = scmp.eq.s32.totalorder %s69, 0
      %s72 = sadd.s32 %s71, 1
      %s73 = scalar_select %p70, %s71, %s72
      %p76 = pneg %p70
      %p77 = scmp.eq.s32.totalorder %s9, 1
      %p78 = por %p76, %p77
      %p79 = scmp.ne.s32.totalorder %s71, %s74
      %p80 = scmp.eq.s32.totalorder %s9, 0
      %p81 = por %p79, %p80
      %p82 = scmp.ne.s32.totalorder %s71, %s74
      %p83 = scmp.eq.s32.totalorder %s14, 1
      %p84 = por %p82, %p83
      %p85 = scmp.ne.s32.totalorder %s74, %s75
      %p86 = scmp.eq.s32.totalorder %s14, 0
      %p87 = por %p85, %p86
      %p88 = scmp.ne.s32.totalorder %s74, %s75
      %p89 = scmp.eq.s32.totalorder %s15, 1
      %p90 = por %p88, %p89
      %p92 = scmp.ne.s32.totalorder %s75, %s91
      %p93 = scmp.eq.s32.totalorder %s15, 0
      %p94 = por %p92, %p93
      %s95 = ssub.s32 %s9, %s16
      %p96 = scmp.eq.s32.totalorder %s95, 0
      %s98 = sadd.s32 %s97, 1
      %s99 = scalar_select %p96, %s97, %s98
      %p102 = pneg %p96
      %p103 = scmp.eq.s32.totalorder %s9, 1
      %p104 = por %p102, %p103
      %p105 = scmp.ne.s32.totalorder %s97, %s100
      %p106 = scmp.eq.s32.totalorder %s9, 0
      %p107 = por %p105, %p106
      %p108 = scmp.ne.s32.totalorder %s97, %s100
      %p109 = scmp.eq.s32.totalorder %s14, 1
      %p110 = por %p108, %p109
      %p111 = scmp.ne.s32.totalorder %s100, %s101
      %p112 = scmp.eq.s32.totalorder %s14, 0
      %p113 = por %p111, %p112
      %p114 = scmp.ne.s32.totalorder %s100, %s101
      %p115 = scmp.eq.s32.totalorder %s15, 1
      %p116 = por %p114, %p115
      %p118 = scmp.ne.s32.totalorder %s101, %s117
      %p119 = scmp.eq.s32.totalorder %s15, 0
      %p120 = por %p118, %p119
      %p121 = scmp.le.s32.totalorder 1, %s9
      %p122 = scmp.lt.s32.totalorder %s9, 3
      %p123 = pnand %p121, %p122
      %p124 = pneg %p123
      // Predicated region
      $region9: #{v3_loss_forward.7} parent=5 // pred_check
        _
      $region10: #{v3_loss_forward.7} parent=5 // pred_check_branch
        %126 = sbr.rel (%p123) target = $region12
      $region11: #{v3_loss_forward.7} parent=5 // pred_region
        %s127 = ssub.s32 %s9, 1
      $region12: #{v3_loss_forward.7} parent=5 // pred_fallthru
        _
      %p128 = scmp.lt.s32.totalorder %s9, 2
      // Predicated region
      $region13: #{v3_loss_forward.7} parent=5 // pred_check
        %p129 = pneg %p128
      $region14: #{v3_loss_forward.7} parent=5 // pred_check_branch
        %131 = sbr.rel (%p129) target = $region16
      $region15: #{v3_loss_forward.7} parent=5 // pred_region
        // Predicated region
        $region17: #{v3_loss_forward.7} parent=15 // pred_check
          %p132 = pneg %p29
        $region18: #{v3_loss_forward.7} parent=15 // pred_check_branch
          %134 = sbr.rel (%p132) target = $region20
        $region19: #{v3_loss_forward.7} parent=15 // pred_region
          %s135 = sand.u32 %s19, 1
          %s136 = sand.u32 %s19, 1
          %s137 = smul.addr %s136, 16
          %s138 = scalar_lea.vmem [#allocation2], %s137
          %s139 = smul.addr %s9, 8
          %s140 = scalar_lea.vmem %s0, %s139
          // Predicated region
          $region21: #{v3_loss_forward.7} parent=19 // pred_check
            _
          $region22: #{v3_loss_forward.7} parent=19 // pred_check_branch
            %142 = sbr.rel (0) target = $region24
          $region23: #{v3_loss_forward.7} parent=19 // pred_region
            // Predicated region
            $region25: #{v3_loss_forward.7} parent=23 // pred_check
              _
            $region26: #{v3_loss_forward.7} parent=23 // pred_check_branch
              %144 = sbr.rel (0) target = $region28
            $region27: #{v3_loss_forward.7} parent=23 // pred_region
              // Predicated region
              $region40: #{v3_loss_forward.7} parent=27 // pred_check
                _
              $region41: #{v3_loss_forward.7} parent=27 // pred_check_branch
                %162 = sbr.rel (0) target = $region43
              $region42: #{v3_loss_forward.7} parent=27 // pred_region
                loop: start=0, step=1, limit=1
                $region44: #{v3_loss_forward.7} parent=42 // loop_pre_header
                  _
                $region45: #{v3_loss_forward.7} parent=42 // loop_header
                  %s164 = sphi 0, %s168
                  %p165 = scmp.ge.s32.totalorder %s164, 1
                  %s169 = sphi %s140, %s140
                  %s170 = sphi %s138, %s138
                $region46: #{v3_loss_forward.7} parent=42 // loop_header_branch
                  %167 = sbr.rel (%p165) target = $region50
                $region47: #{v3_loss_forward.7} parent=42 // loop_body
                  %v171 = vld [vmem:[%s169] sm:$0xff]
                  %172 = vst [vmem:[%s170] sm:$0xff] %v171
                  %v173 = vld [vmem:[%s169 + $0x10] sm:$0xff]
                  %174 = vst [vmem:[%s170 + $0x8] sm:$0xff] %v173
                $region48: #{v3_loss_forward.7} parent=42 // loop_footer
                  %s168 = sadd.s32 1, %s164
                $region49: #{v3_loss_forward.7} parent=42 // loop_footer_branch
                  %163 = sbr.rel target = $region45
                $region50: #{v3_loss_forward.7} parent=42 // loop_exit
                  _
              $region43: #{v3_loss_forward.7} parent=27 // pred_fallthru
                _
              // Predicated region
              $region51: #{v3_loss_forward.7} parent=27 // pred_check
                _
              $region52: #{v3_loss_forward.7} parent=27 // pred_check_branch
                %176 = sbr.rel target = $region54
              $region53: #{v3_loss_forward.7} parent=27 // pred_region
                _
              $region54: #{v3_loss_forward.7} parent=27 // pred_fallthru
                _
            $region28: #{v3_loss_forward.7} parent=23 // pred_fallthru
              _
            // Predicated region
            $region29: #{v3_loss_forward.7} parent=23 // pred_check
              _
            $region30: #{v3_loss_forward.7} parent=23 // pred_check_branch
              %146 = sbr.rel target = $region32
            $region31: #{v3_loss_forward.7} parent=23 // pred_region
              %s148 = ssub.s32 256, 1
              loop: start=0, step=1, limit=1
              $region33: #{v3_loss_forward.7} parent=31 // loop_pre_header
                _
              $region34: #{v3_loss_forward.7} parent=31 // loop_header
                %s150 = sphi 0, %s154
                %p151 = scmp.ge.s32.totalorder %s150, 1
                %s155 = sphi %s140, %s140
                %s156 = sphi %s138, %s138
              $region35: #{v3_loss_forward.7} parent=31 // loop_header_branch
                %153 = sbr.rel (%p151) target = $region39
              $region36: #{v3_loss_forward.7} parent=31 // loop_body
                %v157 = vld [vmem:[%s155] sm:%s148]
                %158 = vst [vmem:[%s156] sm:%s148] %v157
                %v159 = vld [vmem:[%s155 + $0x10] sm:%s148]
                %160 = vst [vmem:[%s156 + $0x8] sm:%s148] %v159
              $region37: #{v3_loss_forward.7} parent=31 // loop_footer
                %s154 = sadd.s32 1, %s150
              $region38: #{v3_loss_forward.7} parent=31 // loop_footer_branch
                %149 = sbr.rel target = $region34
              $region39: #{v3_loss_forward.7} parent=31 // loop_exit
                _
            $region32: #{v3_loss_forward.7} parent=23 // pred_fallthru
              _
          $region24: #{v3_loss_forward.7} parent=19 // pred_fallthru
            _
          %177 = vnop
        $region20: #{v3_loss_forward.7} parent=15 // pred_fallthru
          _
        // Predicated region
        $region55: #{v3_loss_forward.7} parent=15 // pred_check
          %p178 = pneg %p55
        $region56: #{v3_loss_forward.7} parent=15 // pred_check_branch
          %180 = sbr.rel (%p178) target = $region58
        $region57: #{v3_loss_forward.7} parent=15 // pred_region
          %s181 = sand.u32 %s45, 1
          %s182 = sand.u32 %s45, 1
          %s183 = smul.addr %s182, 8
          %s184 = scalar_lea.vmem [#allocation3], %s183
          %s185 = smul.addr %s9, 4
          %s186 = scalar_lea.vmem %s1, %s185
          // Predicated region
          $region59: #{v3_loss_forward.7} parent=57 // pred_check
            _
          $region60: #{v3_loss_forward.7} parent=57 // pred_check_branch
            %188 = sbr.rel (0) target = $region62
          $region61: #{v3_loss_forward.7} parent=57 // pred_region
            // Predicated region
            $region63: #{v3_loss_forward.7} parent=61 // pred_check
              _
            $region64: #{v3_loss_forward.7} parent=61 // pred_check_branch
              %190 = sbr.rel target = $region66
            $region65: #{v3_loss_forward.7} parent=61 // pred_region
              // Predicated region
              $region78: #{v3_loss_forward.7} parent=65 // pred_check
                _
              $region79: #{v3_loss_forward.7} parent=65 // pred_check_branch
                %208 = sbr.rel (0) target = $region81
              $region80: #{v3_loss_forward.7} parent=65 // pred_region
                loop: start=0, step=1, limit=1
                $region82: #{v3_loss_forward.7} parent=80 // loop_pre_header
                  _
                $region83: #{v3_loss_forward.7} parent=80 // loop_header
                  %s210 = sphi 0, %s214
                  %p211 = scmp.ge.s32.totalorder %s210, 1
                  %s215 = sphi %s186, %s186
                  %s216 = sphi %s184, %s184
                $region84: #{v3_loss_forward.7} parent=80 // loop_header_branch
                  %213 = sbr.rel (%p211) target = $region88
                $region85: #{v3_loss_forward.7} parent=80 // loop_body
                  _
                $region86: #{v3_loss_forward.7} parent=80 // loop_footer
                  %s214 = sadd.s32 1, %s210
                $region87: #{v3_loss_forward.7} parent=80 // loop_footer_branch
                  %209 = sbr.rel target = $region83
                $region88: #{v3_loss_forward.7} parent=80 // loop_exit
                  _
                %s218 = ssub.s32 16, 1
                loop: start=0, step=1, limit=1
                $region89: #{v3_loss_forward.7} parent=80 // loop_pre_header
                  _
                $region90: #{v3_loss_forward.7} parent=80 // loop_header
                  %s220 = sphi 0, %s224
                  %p221 = scmp.ge.s32.totalorder %s220, 1
                  %s225 = sphi %s186, %s186
                  %s226 = sphi %s184, %s184
                $region91: #{v3_loss_forward.7} parent=80 // loop_header_branch
                  %223 = sbr.rel (%p221) target = $region95
                $region92: #{v3_loss_forward.7} parent=80 // loop_body
                  %v227 = vld [vmem:[%s225] sm:%s218]
                  %228 = vst [vmem:[%s226] sm:%s218] %v227
                  %v229 = vld [vmem:[%s225 + $0x8] sm:%s218]
                  %230 = vst [vmem:[%s226 + $0x4] sm:%s218] %v229
                $region93: #{v3_loss_forward.7} parent=80 // loop_footer
                  %s224 = sadd.s32 1, %s220
                $region94: #{v3_loss_forward.7} parent=80 // loop_footer_branch
                  %219 = sbr.rel target = $region90
                $region95: #{v3_loss_forward.7} parent=80 // loop_exit
                  _
              $region81: #{v3_loss_forward.7} parent=65 // pred_fallthru
                _
            $region66: #{v3_loss_forward.7} parent=61 // pred_fallthru
              _
            // Predicated region
            $region67: #{v3_loss_forward.7} parent=61 // pred_check
              _
            $region68: #{v3_loss_forward.7} parent=61 // pred_check_branch
              %192 = sbr.rel (0) target = $region70
            $region69: #{v3_loss_forward.7} parent=61 // pred_region
              %s194 = ssub.s32 16, 1
              loop: start=0, step=1, limit=1
              $region71: #{v3_loss_forward.7} parent=69 // loop_pre_header
                _
              $region72: #{v3_loss_forward.7} parent=69 // loop_header
                %s196 = sphi 0, %s200
                %p197 = scmp.ge.s32.totalorder %s196, 1
                %s201 = sphi %s186, %s186
                %s202 = sphi %s184, %s184
              $region73: #{v3_loss_forward.7} parent=69 // loop_header_branch
                %199 = sbr.rel (%p197) target = $region77
              $region74: #{v3_loss_forward.7} parent=69 // loop_body
                %v203 = vld [vmem:[%s201] sm:%s194]
                %204 = vst [vmem:[%s202] sm:%s194] %v203
                %v205 = vld [vmem:[%s201 + $0x8] sm:%s194]
                %206 = vst [vmem:[%s202 + $0x4] sm:%s194] %v205
              $region75: #{v3_loss_forward.7} parent=69 // loop_footer
                %s200 = sadd.s32 1, %s196
              $region76: #{v3_loss_forward.7} parent=69 // loop_footer_branch
                %195 = sbr.rel target = $region72
              $region77: #{v3_loss_forward.7} parent=69 // loop_exit
                _
            $region70: #{v3_loss_forward.7} parent=61 // pred_fallthru
              _
          $region62: #{v3_loss_forward.7} parent=57 // pred_fallthru
            _
          %231 = vnop
        $region58: #{v3_loss_forward.7} parent=15 // pred_fallthru
          _
        // Predicated region
        $region96: #{v3_loss_forward.7} parent=15 // pred_check
          %p232 = pneg %p81
        $region97: #{v3_loss_forward.7} parent=15 // pred_check_branch
          %234 = sbr.rel (%p232) target = $region99
        $region98: #{v3_loss_forward.7} parent=15 // pred_region
          %s235 = sand.u32 %s71, 1
          %s236 = sand.u32 %s71, 1
          %s237 = smul.addr %s236, 8
          %s238 = scalar_lea.vmem [#allocation4], %s237
          %s239 = smul.addr %s9, 4
          %s240 = scalar_lea.vmem %s2, %s239
          // Predicated region
          $region100: #{v3_loss_forward.7} parent=98 // pred_check
            _
          $region101: #{v3_loss_forward.7} parent=98 // pred_check_branch
            %242 = sbr.rel (0) target = $region103
          $region102: #{v3_loss_forward.7} parent=98 // pred_region
            // Predicated region
            $region104: #{v3_loss_forward.7} parent=102 // pred_check
              _
            $region105: #{v3_loss_forward.7} parent=102 // pred_check_branch
              %244 = sbr.rel target = $region107
            $region106: #{v3_loss_forward.7} parent=102 // pred_region
              // Predicated region
              $region119: #{v3_loss_forward.7} parent=106 // pred_check
                _
              $region120: #{v3_loss_forward.7} parent=106 // pred_check_branch
                %262 = sbr.rel (0) target = $region122
              $region121: #{v3_loss_forward.7} parent=106 // pred_region
                loop: start=0, step=1, limit=1
                $region123: #{v3_loss_forward.7} parent=121 // loop_pre_header
                  _
                $region124: #{v3_loss_forward.7} parent=121 // loop_header
                  %s264 = sphi 0, %s268
                  %p265 = scmp.ge.s32.totalorder %s264, 1
                  %s269 = sphi %s240, %s240
                  %s270 = sphi %s238, %s238
                $region125: #{v3_loss_forward.7} parent=121 // loop_header_branch
                  %267 = sbr.rel (%p265) target = $region129
                $region126: #{v3_loss_forward.7} parent=121 // loop_body
                  _
                $region127: #{v3_loss_forward.7} parent=121 // loop_footer
                  %s268 = sadd.s32 1, %s264
                $region128: #{v3_loss_forward.7} parent=121 // loop_footer_branch
                  %263 = sbr.rel target = $region124
                $region129: #{v3_loss_forward.7} parent=121 // loop_exit
                  _
                %s272 = ssub.s32 16, 1
                loop: start=0, step=1, limit=1
                $region130: #{v3_loss_forward.7} parent=121 // loop_pre_header
                  _
                $region131: #{v3_loss_forward.7} parent=121 // loop_header
                  %s274 = sphi 0, %s278
                  %p275 = scmp.ge.s32.totalorder %s274, 1
                  %s279 = sphi %s240, %s240
                  %s280 = sphi %s238, %s238
                $region132: #{v3_loss_forward.7} parent=121 // loop_header_branch
                  %277 = sbr.rel (%p275) target = $region136
                $region133: #{v3_loss_forward.7} parent=121 // loop_body
                  %v281 = vld [vmem:[%s279] sm:%s272]
                  %282 = vst [vmem:[%s280] sm:%s272] %v281
                  %v283 = vld [vmem:[%s279 + $0x8] sm:%s272]
                  %284 = vst [vmem:[%s280 + $0x4] sm:%s272] %v283
                $region134: #{v3_loss_forward.7} parent=121 // loop_footer
                  %s278 = sadd.s32 1, %s274
                $region135: #{v3_loss_forward.7} parent=121 // loop_footer_branch
                  %273 = sbr.rel target = $region131
                $region136: #{v3_loss_forward.7} parent=121 // loop_exit
                  _
              $region122: #{v3_loss_forward.7} parent=106 // pred_fallthru
                _
            $region107: #{v3_loss_forward.7} parent=102 // pred_fallthru
              _
            // Predicated region
            $region108: #{v3_loss_forward.7} parent=102 // pred_check
              _
            $region109: #{v3_loss_forward.7} parent=102 // pred_check_branch
              %246 = sbr.rel (0) target = $region111
            $region110: #{v3_loss_forward.7} parent=102 // pred_region
              %s248 = ssub.s32 16, 1
              loop: start=0, step=1, limit=1
              $region112: #{v3_loss_forward.7} parent=110 // loop_pre_header
                _
              $region113: #{v3_loss_forward.7} parent=110 // loop_header
                %s250 = sphi 0, %s254
                %p251 = scmp.ge.s32.totalorder %s250, 1
                %s255 = sphi %s240, %s240
                %s256 = sphi %s238, %s238
              $region114: #{v3_loss_forward.7} parent=110 // loop_header_branch
                %253 = sbr.rel (%p251) target = $region118
              $region115: #{v3_loss_forward.7} parent=110 // loop_body
                %v257 = vld [vmem:[%s255] sm:%s248]
                %258 = vst [vmem:[%s256] sm:%s248] %v257
                %v259 = vld [vmem:[%s255 + $0x8] sm:%s248]
                %260 = vst [vmem:[%s256 + $0x4] sm:%s248] %v259
              $region116: #{v3_loss_forward.7} parent=110 // loop_footer
                %s254 = sadd.s32 1, %s250
              $region117: #{v3_loss_forward.7} parent=110 // loop_footer_branch
                %249 = sbr.rel target = $region113
              $region118: #{v3_loss_forward.7} parent=110 // loop_exit
                _
            $region111: #{v3_loss_forward.7} parent=102 // pred_fallthru
              _
          $region103: #{v3_loss_forward.7} parent=98 // pred_fallthru
            _
          %285 = vnop
        $region99: #{v3_loss_forward.7} parent=15 // pred_fallthru
          _
      $region16: #{v3_loss_forward.7} parent=5 // pred_fallthru
        _
      %p286 = scmp.le.s32.totalorder 1, %s9
      %p287 = scmp.lt.s32.totalorder %s9, 3
      %p288 = pnand %p286, %p287
      %p289 = pneg %p288
      // Predicated region
      $region137: #{v3_loss_forward.7} parent=5 // pred_check
        _
      $region138: #{v3_loss_forward.7} parent=5 // pred_check_branch
        %291 = sbr.rel (%p288) target = $region140
      $region139: #{v3_loss_forward.7} parent=5 // pred_region
        %s292 = ssub.s32 %s9, 1
        %s293 = sand.u32 %s22, 1
        %s294 = sand.u32 %s22, 1
        %s295 = smul.addr %s294, 16
        %s296 = scalar_lea.vmem [#allocation2], %s295
        // Predicated region
        $region141: #{v3_loss_forward.7} parent=139 // pred_check
          %p297 = pneg %p35
        $region142: #{v3_loss_forward.7} parent=139 // pred_check_branch
          %299 = sbr.rel (%p297) target = $region144
        $region143: #{v3_loss_forward.7} parent=139 // pred_region
          _
        $region144: #{v3_loss_forward.7} parent=139 // pred_fallthru
          _
        %s300 = sand.u32 %s48, 1
        %s301 = sand.u32 %s48, 1
        %s302 = smul.addr %s301, 8
        %s303 = scalar_lea.vmem [#allocation3], %s302
        // Predicated region
        $region145: #{v3_loss_forward.7} parent=139 // pred_check
          %p304 = pneg %p61
        $region146: #{v3_loss_forward.7} parent=139 // pred_check_branch
          %306 = sbr.rel (%p304) target = $region148
        $region147: #{v3_loss_forward.7} parent=139 // pred_region
          _
        $region148: #{v3_loss_forward.7} parent=139 // pred_fallthru
          _
        %s307 = sand.u32 %s74, 1
        %s308 = sand.u32 %s74, 1
        %s309 = smul.addr %s308, 8
        %s310 = scalar_lea.vmem [#allocation4], %s309
        // Predicated region
        $region149: #{v3_loss_forward.7} parent=139 // pred_check
          %p311 = pneg %p87
        $region150: #{v3_loss_forward.7} parent=139 // pred_check_branch
          %313 = sbr.rel (%p311) target = $region152
        $region151: #{v3_loss_forward.7} parent=139 // pred_region
          _
        $region152: #{v3_loss_forward.7} parent=139 // pred_fallthru
          _
        %s314 = sand.u32 %s22, 1
        %s315 = sand.u32 %s22, 1
        %s316 = smul.addr %s315, 16
        %s317 = scalar_lea.vmem [#allocation2], %s316
        %p318 = pneg %p35
        %p319 = pneg %p32
        %s320 = sand.u32 %s48, 1
        %s321 = sand.u32 %s48, 1
        %s322 = smul.addr %s321, 8
        %s323 = scalar_lea.vmem [#allocation3], %s322
        %p324 = pneg %p61
        %p325 = pneg %p58
        %s326 = sand.u32 %s74, 1
        %s327 = sand.u32 %s74, 1
        %s328 = smul.addr %s327, 8
        %s329 = scalar_lea.vmem [#allocation4], %s328
        %p330 = pneg %p87
        %p331 = pneg %p84
        %p332 = pneg %p113
        %p333 = pneg %p110
        %p334 = scmp.lt.s32.totalorder %s14, 1
        %s335 = scalar_select %p334, %s14, 1
        %s336 = scalar_lea.vmem %s3, %s335
        %p337 = scmp.lt.s32.totalorder %s14, 1
        %s338 = scalar_select %p337, %s14, 1
        %s339 = scalar_lea.vmem %s3, %s338
        %v340 = vld [vmem:[%s296] sm:$0xff]
        %v341 = vld [vmem:[%s296 + $0x8] sm:$0xff]
        %v342 = vld [vmem:[%s303] sm:$0xf]
        %v343 = vld [vmem:[%s303 + $0x4] sm:$0xf]
        %v346 = vrot.slane %v340, 4
        %v347 = vrot.slane %v341, 4
        %v350 = vsub.f32 %v340, %v346
        %v351 = vsub.f32 %v341, %v347
        %v352 = vlaneseq
        %v353 = vshrl.u32 %v352, 7
        %v354 = vsub.s32 2, %v353
        %v355 = vrot.slane %v342, %v354
        %v356 = vlaneseq
        %v357 = vshrl.u32 %v356, 7
        %v358 = vsub.s32 2, %v357
        %v359 = vrot.slane %v343, %v358
        %v360 = vmul.f32 %v350, %v355
        %v361 = vmul.f32 %v351, %v359
        %v364 = vrot.slane %v342, 1
        %v365 = vrot.slane %v343, 1
        %v368 = vsub.f32 %v342, %v364
        %v369 = vsub.f32 %v343, %v365
        %v370 = vrot.slane %v342, 3
        %v371 = vrot.slane %v343, 3
        %v374 = vmul.f32 %v368, %v370
        %v375 = vmul.f32 %v369, %v371
        %v376 = vmul.f32 %v360, %v360
        %v377 = vmul.f32 %v361, %v361
        %vm378 = vcmask 1043456
        %v379 = vsel %vm378, %v376, 0.0
        %v380 = vsel %vm378, %v377, 0.0
        %v381 = vadd.f32 %v379, %v380
        %v382 = vrot.slane %v381, 4
        %v383 = vadd.f32 %v381, %v382
        %v384 = vrot.slane %v383, 2
        %v385 = vadd.f32 %v383, %v384
        %v386 = vrot.slane %v385, 1
        %v387 = vadd.f32 %v385, %v386
        %v388 = vmul.f32 %v374, %v374
        %v389 = vmul.f32 %v375, %v375
        %vm390 = vcmask 1040384
        %v391 = vsel %vm390, %v388, 0.0
        %v392 = vsel %vm390, %v389, 0.0
        %v393 = vadd.f32 %v391, %v392
        %v394 = vrot.slane %v393, 4
        %v395 = vadd.f32 %v393, %v394
        %v396 = vrot.slane %v395, 2
        %v397 = vadd.f32 %v395, %v396
        %v398 = vrot.slane %v397, 1
        %v399 = vadd.f32 %v397, %v398
        %v400 = vadd.f32 %v387, %v399
        %v401 = vmul.f32 %v400, 0.5
        %v402 = vld [vmem:[%s310] sm:$0x7]
        %v403 = vld [vmem:[%s310 + $0x4] sm:$0x7]
        %v404 = vsub.f32 1.0, %v402
        %v405 = vsub.f32 1.0, %v403
        %v406 = vlog2.pop %v404
        %v407 = vmul.f32 %v406, 0.6931472
        %v408 = vlog2.pop %v405
        %v409 = vmul.f32 %v408, 0.6931472
        %v410 = vmax.f32 %v407, -100.0
        %v411 = vmax.f32 %v409, -100.0
        %vm412 = vcmask 1042432
        %v413 = vsel %vm412, %v410, 0.0
        %v414 = vsel %vm412, %v411, 0.0
        %v415 = vadd.f32 %v413, %v414
        %v416 = vrot.slane %v415, 4
        %v417 = vadd.f32 %v415, %v416
        %v418 = vrot.slane %v417, 2
        %v419 = vadd.f32 %v417, %v418
        %v420 = vrot.slane %v419, 1
        %v421 = vadd.f32 %v419, %v420
        %v422 = vsub.f32 %v401, %v421
        %423 = vst [vmem:[%s339] sm:$0x1] %v422
        %p424 = scmp.lt.s32.totalorder %s14, 1
        %s425 = scalar_select %p424, %s14, 1
        %s426 = scalar_lea.vmem %s3, %s425
        // Predicated region
        $region153: #{v3_loss_forward.7} parent=139 // pred_check
          %p427 = pneg %p110
        $region154: #{v3_loss_forward.7} parent=139 // pred_check_branch
          %429 = sbr.rel (%p427) target = $region156
        $region155: #{v3_loss_forward.7} parent=139 // pred_region
          _
        $region156: #{v3_loss_forward.7} parent=139 // pred_fallthru
          _
      $region140: #{v3_loss_forward.7} parent=5 // pred_fallthru
        _
      %p430 = scmp.le.s32.totalorder 2, %s9
      // Predicated region
      $region157: #{v3_loss_forward.7} parent=5 // pred_check
        %p431 = pneg %p430
      $region158: #{v3_loss_forward.7} parent=5 // pred_check_branch
        %433 = sbr.rel (%p431) target = $region160
      $region159: #{v3_loss_forward.7} parent=5 // pred_region
        %s434 = ssub.s32 %s9, 2
        // Predicated region
        $region161: #{v3_loss_forward.7} parent=159 // pred_check
          %p435 = pneg %p116
        $region162: #{v3_loss_forward.7} parent=159 // pred_check_branch
          %437 = sbr.rel (%p435) target = $region164
        $region163: #{v3_loss_forward.7} parent=159 // pred_region
          %p438 = scmp.lt.s32.totalorder %s15, 1
          %s439 = scalar_select %p438, %s15, 1
          %s440 = scalar_lea.vmem %s3, %s439
        $region164: #{v3_loss_forward.7} parent=159 // pred_fallthru
          _
      $region160: #{v3_loss_forward.7} parent=5 // pred_fallthru
        _
    $region6: #{v3_loss_forward.7} parent=1 // loop_footer
      %s13 = sadd.s32 1, %s9
    $region7: #{v3_loss_forward.7} parent=1 // loop_footer_branch
      %8 = sbr.rel target = $region3
    $region8: #{v3_loss_forward.7} parent=1 // loop_exit
      _

// kernel: v3_loss_forward.4
$region0: #{v3_loss_forward.4}
  #allocation0 [shape = 'u32[]', space=smem, size = 0x4, offset = 0x4, fixed_abs, tag = 'smem constant byte address 0x4 - core index']
  #allocation1 [shape = 'u32[144,128]{1,0:T(1,128)}', space=vmem, size = 0x12000, scoped, tag = 'internal scratch']
  %s0 = inlined_call_operand.vmem [shape: f32[2,4,128], index: 0, kind: input, shape index: {}]
  %s1 = inlined_call_operand.vmem [shape: f32[2,56,6], index: 1, kind: input, shape index: {}]
  %s2 = inlined_call_operand.vmem [shape: f32[2,1,128], index: 2, kind: output, shape index: {}]
  %s3 = sld [smem:[#allocation0]]
  $region41: #{v3_loss_forward.4} parent=0
    _
  %s5 = ssub.s32 1, %s3
  %s6 = scalar_select 0, %s5, %s3
  loop: start=0, step=1, limit=4
  $region2: #{v3_loss_forward.4} parent=0 // loop_pre_header
    _
  $region3: #{v3_loss_forward.4} parent=0 // loop_header
    %s8 = sphi 0, %s12
    %p9 = scmp.ge.s32.totalorder %s8, 4
    %s15 = sphi 0, %s27
    %s16 = sphi 0, %s23
    %s17 = sphi 0, %s15
    %s18 = sphi 0, %s16
    %s19 = sphi 0, %s17
    %s20 = sphi 0, %s18
    %s32 = sphi 0, %s34
    %s35 = sphi 0, %s32
    %s36 = sphi 0, %s35
    %s52 = sphi 0, %s36
    %s58 = sphi 0, %s60
    %s61 = sphi 0, %s58
    %s62 = sphi 0, %s61
    %s78 = sphi 0, %s62
    %s86 = sphi 0, %s88
    %s89 = sphi 0, %s86
    %s90 = sphi 0, %s89
    %s106 = sphi 0, %s90
  $region4: #{v3_loss_forward.4} parent=0 // loop_header_branch
    %11 = sbr.rel (%p9) target = $region8
  $region5: #{v3_loss_forward.4} parent=0 // loop_body
    %s13 = ssub.s32 %s8, 1
    %s14 = ssub.s32 %s8, 2
    %s21 = sadd.s32 1, %s16
    %p22 = scmp.ge.s32.totalorder %s21, 1
    %s23 = scalar_select %p22, 0, %s21
    %s24 = sadd.s32 1, %s15
    %s25 = scalar_select %p22, %s24, %s15
    %p26 = scmp.ge.s32.totalorder %s25, 2
    %s27 = scalar_select %p26, 0, %s25
    %s28 = ssub.s32 %s15, %s27
    %s29 = ssub.s32 %s16, %s23
    %s30 = sor.u32 %s28, %s29
    %p31 = scmp.eq.s32.totalorder %s30, 0
    %s33 = sadd.s32 %s32, 1
    %s34 = scalar_select %p31, %s32, %s33
    %p37 = pneg %p31
    %p38 = scmp.eq.s32.totalorder %s8, 1
    %p39 = por %p37, %p38
    %p40 = scmp.ne.s32.totalorder %s32, %s35
    %p41 = scmp.eq.s32.totalorder %s8, 0
    %p42 = por %p40, %p41
    %p43 = scmp.ne.s32.totalorder %s32, %s35
    %p44 = scmp.eq.s32.totalorder %s13, 1
    %p45 = por %p43, %p44
    %p46 = scmp.ne.s32.totalorder %s35, %s36
    %p47 = scmp.eq.s32.totalorder %s13, 0
    %p48 = por %p46, %p47
    %p49 = scmp.ne.s32.totalorder %s35, %s36
    %p50 = scmp.eq.s32.totalorder %s14, 1
    %p51 = por %p49, %p50
    %p53 = scmp.ne.s32.totalorder %s36, %s52
    %p54 = scmp.eq.s32.totalorder %s14, 0
    %p55 = por %p53, %p54
    %s56 = ssub.s32 %s15, %s27
    %p57 = scmp.eq.s32.totalorder %s56, 0
    %s59 = sadd.s32 %s58, 1
    %s60 = scalar_select %p57, %s58, %s59
    %p63 = pneg %p57
    %p64 = scmp.eq.s32.totalorder %s8, 1
    %p65 = por %p63, %p64
    %p66 = scmp.ne.s32.totalorder %s58, %s61
    %p67 = scmp.eq.s32.totalorder %s8, 0
    %p68 = por %p66, %p67
    %p69 = scmp.ne.s32.totalorder %s58, %s61
    %p70 = scmp.eq.s32.totalorder %s13, 1
    %p71 = por %p69, %p70
    %p72 = scmp.ne.s32.totalorder %s61, %s62
    %p73 = scmp.eq.s32.totalorder %s13, 0
    %p74 = por %p72, %p73
    %p75 = scmp.ne.s32.totalorder %s61, %s62
    %p76 = scmp.eq.s32.totalorder %s14, 1
    %p77 = por %p75, %p76
    %p79 = scmp.ne.s32.totalorder %s62, %s78
    %p80 = scmp.eq.s32.totalorder %s14, 0
    %p81 = por %p79, %p80
    %s82 = ssub.s32 %s15, %s27
    %s83 = ssub.s32 %s16, %s23
    %s84 = sor.u32 %s82, %s83
    %p85 = scmp.eq.s32.totalorder %s84, 0
    %s87 = sadd.s32 %s86, 1
    %s88 = scalar_select %p85, %s86, %s87
    %p91 = pneg %p85
    %p92 = scmp.eq.s32.totalorder %s8, 1
    %p93 = por %p91, %p92
    %p94 = scmp.ne.s32.totalorder %s86, %s89
    %p95 = scmp.eq.s32.totalorder %s8, 0
    %p96 = por %p94, %p95
    %p97 = scmp.ne.s32.totalorder %s86, %s89
    %p98 = scmp.eq.s32.totalorder %s13, 1
    %p99 = por %p97, %p98
    %p100 = scmp.ne.s32.totalorder %s89, %s90
    %p101 = scmp.eq.s32.totalorder %s13, 0
    %p102 = por %p100, %p101
    %p103 = scmp.ne.s32.totalorder %s89, %s90
    %p104 = scmp.eq.s32.totalorder %s14, 1
    %p105 = por %p103, %p104
    %p107 = scmp.ne.s32.totalorder %s90, %s106
    %p108 = scmp.eq.s32.totalorder %s14, 0
    %p109 = por %p107, %p108
    %p110 = scmp.le.s32.totalorder 1, %s8
    %p111 = scmp.lt.s32.totalorder %s8, 3
    %p112 = pnand %p110, %p111
    %p113 = pneg %p112
    // Predicated region
    $region9: #{v3_loss_forward.4} parent=5 // pred_check
      _
    $region10: #{v3_loss_forward.4} parent=5 // pred_check_branch
      %115 = sbr.rel (%p112) target = $region12
    $region11: #{v3_loss_forward.4} parent=5 // pred_region
      %s116 = ssub.s32 %s8, 1
    $region12: #{v3_loss_forward.4} parent=5 // pred_fallthru
      _
    %p117 = scmp.lt.s32.totalorder %s8, 2
    // Predicated region
    $region13: #{v3_loss_forward.4} parent=5 // pred_check
      %p118 = pneg %p117
    $region14: #{v3_loss_forward.4} parent=5 // pred_check_branch
      %120 = sbr.rel (%p118) target = $region16
    $region15: #{v3_loss_forward.4} parent=5 // pred_region
      // Predicated region
      $region17: #{v3_loss_forward.4} parent=15 // pred_check
        %p121 = pneg %p42
      $region18: #{v3_loss_forward.4} parent=15 // pred_check_branch
        %123 = sbr.rel (%p121) target = $region20
      $region19: #{v3_loss_forward.4} parent=15 // pred_region
        %p124 = scmp.lt.s32.totalorder %s15, 1
        %s125 = scalar_select %p124, %s15, 1
        %p126 = scmp.lt.s32.totalorder %s16, 0
        %s127 = scalar_select %p126, %s16, 0
        %s128 = sadd.s32 %s127, %s125
        %s129 = smul.addr %s128, 4
        %s130 = scalar_lea.vmem %s0, %s129
      $region20: #{v3_loss_forward.4} parent=15 // pred_fallthru
        _
      // Predicated region
      $region21: #{v3_loss_forward.4} parent=15 // pred_check
        %p131 = pneg %p68
      $region22: #{v3_loss_forward.4} parent=15 // pred_check_branch
        %133 = sbr.rel (%p131) target = $region24
      $region23: #{v3_loss_forward.4} parent=15 // pred_region
        %p134 = scmp.lt.s32.totalorder %s15, 1
        %s135 = scalar_select %p134, %s15, 1
        %s136 = smul.addr %s135, 7
        %s137 = smul.addr %s136, 8
        %s138 = scalar_lea.vmem %s1, %s137
      $region24: #{v3_loss_forward.4} parent=15 // pred_fallthru
        _
    $region16: #{v3_loss_forward.4} parent=5 // pred_fallthru
      _
    %p139 = scmp.le.s32.totalorder 1, %s8
    %p140 = scmp.lt.s32.totalorder %s8, 3
    %p141 = pnand %p139, %p140
    %p142 = pneg %p141
    // Predicated region
    $region25: #{v3_loss_forward.4} parent=5 // pred_check
      _
    $region26: #{v3_loss_forward.4} parent=5 // pred_check_branch
      %144 = sbr.rel (%p141) target = $region28
    $region27: #{v3_loss_forward.4} parent=5 // pred_region
      %s145 = ssub.s32 %s8, 1
      %p146 = scmp.lt.s32.totalorder %s17, 1
      %s147 = scalar_select %p146, %s17, 1
      %p148 = scmp.lt.s32.totalorder %s18, 0
      %s149 = scalar_select %p148, %s18, 0
      %s150 = sadd.s32 %s149, %s147
      %s151 = smul.addr %s150, 4
      %s152 = scalar_lea.vmem %s0, %s151
      %p153 = pneg %p48
      %p154 = pneg %p45
      %p155 = scmp.lt.s32.totalorder %s17, 1
      %s156 = scalar_select %p155, %s17, 1
      %s157 = smul.addr %s156, 7
      %s158 = smul.addr %s157, 8
      %s159 = scalar_lea.vmem %s1, %s158
      %p160 = pneg %p74
      %p161 = pneg %p71
      %p162 = pneg %p102
      %p163 = pneg %p99
      %p164 = scmp.lt.s32.totalorder %s17, 1
      %s165 = scalar_select %p164, %s17, 1
      %p166 = scmp.lt.s32.totalorder %s18, 0
      %s167 = scalar_select %p166, %s18, 0
      %s168 = sadd.s32 %s167, %s165
      %s169 = scalar_lea.vmem %s2, %s168
      %p170 = scmp.lt.s32.totalorder %s17, 1
      %s171 = scalar_select %p170, %s17, 1
      %p172 = scmp.lt.s32.totalorder %s18, 0
      %s173 = scalar_select %p172, %s18, 0
      %s174 = sadd.s32 %s173, %s171
      %s175 = smul.addr %s174, 4
      %s176 = scalar_lea.vmem %s0, %s175
      %p177 = scmp.lt.s32.totalorder %s17, 1
      %s178 = scalar_select %p177, %s17, 1
      %s179 = smul.addr %s178, 7
      %s180 = smul.addr %s179, 8
      %s181 = scalar_lea.vmem %s1, %s180
      %p182 = scmp.lt.s32.totalorder %s17, 1
      %s183 = scalar_select %p182, %s17, 1
      %p184 = scmp.lt.s32.totalorder %s18, 0
      %s185 = scalar_select %p184, %s18, 0
      %s186 = sadd.s32 %s185, %s183
      %s187 = scalar_lea.vmem %s2, %s186
      %v188 = vld [vmem:[%s176] sm:$0x1]
      %v189 = vld [vmem:[%s176 + $0x1] sm:$0x1]
      %v190 = vld [vmem:[%s176 + $0x2] sm:$0x1]
      %v191 = vld [vmem:[%s176 + $0x3] sm:$0x1]
      %v192 = vmul.f32 %v190, 0.5
      %v193 = vsub.f32 %v188, %v192
      %v194 = vadd.f32 %v188, %v192
      %v195 = vmul.f32 %v191, 0.5
      %v196 = vsub.f32 %v189, %v195
      %v197 = vadd.f32 %v189, %v195
      %v198 = vmul.f32 %v190, %v191
      %v199 = vld [vmem:[%s181] sm:$0xff]
      %v200 = vlaneseq
      %v201 = vshrl.u32 %v200, 7
      %v202 = vsub.s32 0, %v201
      %v203 = vrot.slane %v194, %v202
      %205 = vset.pattern.permute.xlu0 1
      %206 = vperm.xlu0 %205, %v199
      %v207 = vpop.permute.xlu0 %206
      %v209 = vmin.f32 %v203, %v207
      %v210 = vlaneseq
      %v211 = vshrl.u32 %v210, 7
      %v212 = vsub.s32 0, %v211
      %v213 = vrot.slane %v193, %v212
      %214 = vset.pattern.permute.xlu0 0
      %215 = vperm.xlu0 %214, %v199
      %v216 = vpop.permute.xlu0 %215
      %v218 = vmax.f32 %v213, %v216
      %v219 = vsub.f32 %v209, %v218
      %v220 = vmax.f32 %v219, 0.0
      %v221 = vlaneseq
      %v222 = vshrl.u32 %v221, 7
      %v223 = vsub.s32 0, %v222
      %v224 = vrot.slane %v197, %v223
      %225 = vset.pattern.permute.xlu0 3
      %226 = vperm.xlu0 %225, %v199
      %v227 = vpop.permute.xlu0 %226
      %v229 = vmin.f32 %v224, %v227
      %v230 = vlaneseq
      %v231 = vshrl.u32 %v230, 7
      %v232 = vsub.s32 0, %v231
      %v233 = vrot.slane %v196, %v232
      %234 = vset.pattern.permute.xlu0 2
      %235 = vperm.xlu0 %234, %v199
      %v236 = vpop.permute.xlu0 %235
      %v238 = vmax.f32 %v233, %v236
      %v239 = vsub.f32 %v229, %v238
      %v240 = vmax.f32 %v239, 0.0
      %v241 = vmul.f32 %v220, %v240
      %v242 = vlaneseq
      %v243 = vshrl.u32 %v242, 7
      %v244 = vsub.s32 0, %v243
      %v245 = vrot.slane %v198, %v244
      %246 = vset.pattern.permute.xlu0 4
      %247 = vperm.xlu0 %246, %v199
      %v248 = vpop.permute.xlu0 %247
      %v250 = vadd.f32 %v245, %v248
      %v251 = vsub.f32 %v250, %v241
      %v252 = vmax.f32 %v251, 1e-12
      %v253 = vrcp.pop %v252
      %v254 = vmul.f32 %v241, %v253
      %vm255 = vcmp.gt.f32.partialorder %v199, 0.0
      %v256 = vsel %vm255, 1, 0
      %257 = vset.pattern.permute.xlu0 5
      %258 = vperm.xlu0 %257, %v256
      %v259 = vpop.permute.xlu0 %258
      %vm260 = vcmp.eq.s32.totalorder %v259, 1
      %v261 = vsel %vm260, %v254, 0.0
      %v262 = vrot.slane %v261, 4
      %v263 = vmax.f32 %v261, %v262
      %v264 = vrot.slane %v263, 2
      %v265 = vmax.f32 %v263, %v264
      %v266 = vrot.slane %v265, 1
      %v267 = vmax.f32 %v265, %v266
      %v268 = vmax.f32 %v267, 0.0
      %v269 = vld [vmem:[%s181 + $0x8] sm:$0xff]
      %271 = vset.pattern.permute.xlu0 1
      %272 = vperm.xlu0 %271, %v269
      %v273 = vpop.permute.xlu0 %272
      %v275 = vmin.f32 %v203, %v273
      %276 = vset.pattern.permute.xlu0 0
      %277 = vperm.xlu0 %276, %v269
      %v278 = vpop.permute.xlu0 %277
      %v280 = vmax.f32 %v213, %v278
      %v281 = vsub.f32 %v275, %v280
      %v282 = vmax.f32 %v281, 0.0
      %283 = vset.pattern.permute.xlu0 3
      %284 = vperm.xlu0 %283, %v269
      %v285 = vpop.permute.xlu0 %284
      %v287 = vmin.f32 %v224, %v285
      %288 = vset.pattern.permute.xlu0 2
      %289 = vperm.xlu0 %288, %v269
      %v290 = vpop.permute.xlu0 %289
      %v292 = vmax.f32 %v233, %v290
      %v293 = vsub.f32 %v287, %v292
      %v294 = vmax.f32 %v293, 0.0
      %v295 = vmul.f32 %v282, %v294
      %296 = vset.pattern.permute.xlu0 4
      %297 = vperm.xlu0 %296, %v269
      %v298 = vpop.permute.xlu0 %297
      %v300 = vadd.f32 %v245, %v298
      %v301 = vsub.f32 %v300, %v295
      %v302 = vmax.f32 %v301, 1e-12
      %v303 = vrcp.pop %v302
      %v304 = vmul.f32 %v295, %v303
      %vm305 = vcmp.gt.f32.partialorder %v269, 0.0
      %v306 = vsel %vm305, 1, 0
      %307 = vset.pattern.permute.xlu0 5
      %308 = vperm.xlu0 %307, %v306
      %v309 = vpop.permute.xlu0 %308
      %vm310 = vcmp.eq.s32.totalorder %v309, 1
      %v311 = vsel %vm310, %v304, 0.0
      %v312 = vrot.slane %v311, 4
      %v313 = vmax.f32 %v311, %v312
      %v314 = vrot.slane %v313, 2
      %v315 = vmax.f32 %v313, %v314
      %v316 = vrot.slane %v315, 1
      %v317 = vmax.f32 %v315, %v316
      %v318 = vmax.f32 %v268, %v317
      %v319 = vld [vmem:[%s181 + $0x10] sm:$0xff]
      %321 = vset.pattern.permute.xlu0 1
      %322 = vperm.xlu0 %321, %v319
      %v323 = vpop.permute.xlu0 %322
      %v325 = vmin.f32 %v203, %v323
      %326 = vset.pattern.permute.xlu0 0
      %327 = vperm.xlu0 %326, %v319
      %v328 = vpop.permute.xlu0 %327
      %v330 = vmax.f32 %v213, %v328
      %v331 = vsub.f32 %v325, %v330
      %v332 = vmax.f32 %v331, 0.0
      %333 = vset.pattern.permute.xlu0 3
      %334 = vperm.xlu0 %333, %v319
      %v335 = vpop.permute.xlu0 %334
      %v337 = vmin.f32 %v224, %v335
      %338 = vset.pattern.permute.xlu0 2
      %339 = vperm.xlu0 %338, %v319
      %v340 = vpop.permute.xlu0 %339
      %v342 = vmax.f32 %v233, %v340
      %v343 = vsub.f32 %v337, %v342
      %v344 = vmax.f32 %v343, 0.0
      %v345 = vmul.f32 %v332, %v344
      %346 = vset.pattern.permute.xlu0 4
      %347 = vperm.xlu0 %346, %v319
      %v348 = vpop.permute.xlu0 %347
      %v350 = vadd.f32 %v245, %v348
      %v351 = vsub.f32 %v350, %v345
      %v352 = vmax.f32 %v351, 1e-12
      %v353 = vrcp.pop %v352
      %v354 = vmul.f32 %v345, %v353
      %vm355 = vcmp.gt.f32.partialorder %v319, 0.0
      %v356 = vsel %vm355, 1, 0
      %357 = vset.pattern.permute.xlu0 5
      %358 = vperm.xlu0 %357, %v356
      %v359 = vpop.permute.xlu0 %358
      %vm360 = vcmp.eq.s32.totalorder %v359, 1
      %v361 = vsel %vm360, %v354, 0.0
      %v362 = vrot.slane %v361, 4
      %v363 = vmax.f32 %v361, %v362
      %v364 = vrot.slane %v363, 2
      %v365 = vmax.f32 %v363, %v364
      %v366 = vrot.slane %v365, 1
      %v367 = vmax.f32 %v365, %v366
      %v368 = vmax.f32 %v318, %v367
      %v369 = vld [vmem:[%s181 + $0x18] sm:$0xff]
      %371 = vset.pattern.permute.xlu0 1
      %372 = vperm.xlu0 %371, %v369
      %v373 = vpop.permute.xlu0 %372
      %v375 = vmin.f32 %v203, %v373
      %376 = vset.pattern.permute.xlu0 0
      %377 = vperm.xlu0 %376, %v369
      %v378 = vpop.permute.xlu0 %377
      %v380 = vmax.f32 %v213, %v378
      %v381 = vsub.f32 %v375, %v380
      %v382 = vmax.f32 %v381, 0.0
      %383 = vset.pattern.permute.xlu0 3
      %384 = vperm.xlu0 %383, %v369
      %v385 = vpop.permute.xlu0 %384
      %v387 = vmin.f32 %v224, %v385
      %388 = vset.pattern.permute.xlu0 2
      %389 = vperm.xlu0 %388, %v369
      %v390 = vpop.permute.xlu0 %389
      %v392 = vmax.f32 %v233, %v390
      %v393 = vsub.f32 %v387, %v392
      %v394 = vmax.f32 %v393, 0.0
      %v395 = vmul.f32 %v382, %v394
      %396 = vset.pattern.permute.xlu0 4
      %397 = vperm.xlu0 %396, %v369
      %v398 = vpop.permute.xlu0 %397
      %v400 = vadd.f32 %v245, %v398
      %v401 = vsub.f32 %v400, %v395
      %v402 = vmax.f32 %v401, 1e-12
      %v403 = vrcp.pop %v402
      %v404 = vmul.f32 %v395, %v403
      %vm405 = vcmp.gt.f32.partialorder %v369, 0.0
      %v406 = vsel %vm405, 1, 0
      %407 = vset.pattern.permute.xlu0 5
      %408 = vperm.xlu0 %407, %v406
      %v409 = vpop.permute.xlu0 %408
      %vm410 = vcmp.eq.s32.totalorder %v409, 1
      %v411 = vsel %vm410, %v404, 0.0
      %v412 = vrot.slane %v411, 4
      %v413 = vmax.f32 %v411, %v412
      %v414 = vrot.slane %v413, 2
      %v415 = vmax.f32 %v413, %v414
      %v416 = vrot.slane %v415, 1
      %v417 = vmax.f32 %v415, %v416
      %v418 = vmax.f32 %v368, %v417
      %v419 = vld [vmem:[%s181 + $0x20] sm:$0xff]
      %421 = vset.pattern.permute.xlu0 1
      %422 = vperm.xlu0 %421, %v419
      %v423 = vpop.permute.xlu0 %422
      %v425 = vmin.f32 %v203, %v423
      %426 = vset.pattern.permute.xlu0 0
      %427 = vperm.xlu0 %426, %v419
      %v428 = vpop.permute.xlu0 %427
      %v430 = vmax.f32 %v213, %v428
      %v431 = vsub.f32 %v425, %v430
      %v432 = vmax.f32 %v431, 0.0
      %433 = vset.pattern.permute.xlu0 3
      %434 = vperm.xlu0 %433, %v419
      %v435 = vpop.permute.xlu0 %434
      %v437 = vmin.f32 %v224, %v435
      %438 = vset.pattern.permute.xlu0 2
      %439 = vperm.xlu0 %438, %v419
      %v440 = vpop.permute.xlu0 %439
      %v442 = vmax.f32 %v233, %v440
      %v443 = vsub.f32 %v437, %v442
      %v444 = vmax.f32 %v443, 0.0
      %v445 = vmul.f32 %v432, %v444
      %446 = vset.pattern.permute.xlu0 4
      %447 = vperm.xlu0 %446, %v419
      %v448 = vpop.permute.xlu0 %447
      %v450 = vadd.f32 %v245, %v448
      %v451 = vsub.f32 %v450, %v445
      %v452 = vmax.f32 %v451, 1e-12
      %v453 = vrcp.pop %v452
      %v454 = vmul.f32 %v445, %v453
      %vm455 = vcmp.gt.f32.partialorder %v419, 0.0
      %v456 = vsel %vm455, 1, 0
      %457 = vset.pattern.permute.xlu0 5
      %458 = vperm.xlu0 %457, %v456
      %v459 = vpop.permute.xlu0 %458
      %vm460 = vcmp.eq.s32.totalorder %v459, 1
      %v461 = vsel %vm460, %v454, 0.0
      %v462 = vrot.slane %v461, 4
      %v463 = vmax.f32 %v461, %v462
      %v464 = vrot.slane %v463, 2
      %v465 = vmax.f32 %v463, %v464
      %v466 = vrot.slane %v465, 1
      %v467 = vmax.f32 %v465, %v466
      %v468 = vmax.f32 %v418, %v467
      %v469 = vld [vmem:[%s181 + $0x28] sm:$0xff]
      %471 = vset.pattern.permute.xlu0 1
      %472 = vperm.xlu0 %471, %v469
      %v473 = vpop.permute.xlu0 %472
      %v475 = vmin.f32 %v203, %v473
      %476 = vset.pattern.permute.xlu0 0
      %477 = vperm.xlu0 %476, %v469
      %v478 = vpop.permute.xlu0 %477
      %v480 = vmax.f32 %v213, %v478
      %v481 = vsub.f32 %v475, %v480
      %v482 = vmax.f32 %v481, 0.0
      %483 = vset.pattern.permute.xlu0 3
      %484 = vperm.xlu0 %483, %v469
      %v485 = vpop.permute.xlu0 %484
      %v487 = vmin.f32 %v224, %v485
      %488 = vset.pattern.permute.xlu0 2
      %489 = vperm.xlu0 %488, %v469
      %v490 = vpop.permute.xlu0 %489
      %v492 = vmax.f32 %v233, %v490
      %v493 = vsub.f32 %v487, %v492
      %v494 = vmax.f32 %v493, 0.0
      %v495 = vmul.f32 %v482, %v494
      %496 = vset.pattern.permute.xlu0 4
      %497 = vperm.xlu0 %496, %v469
      %v498 = vpop.permute.xlu0 %497
      %v500 = vadd.f32 %v245, %v498
      %v501 = vsub.f32 %v500, %v495
      %v502 = vmax.f32 %v501, 1e-12
      %v503 = vrcp.pop %v502
      %v504 = vmul.f32 %v495, %v503
      %vm505 = vcmp.gt.f32.partialorder %v469, 0.0
      %v506 = vsel %vm505, 1, 0
      %507 = vset.pattern.permute.xlu0 5
      %508 = vperm.xlu0 %507, %v506
      %v509 = vpop.permute.xlu0 %508
      %vm510 = vcmp.eq.s32.totalorder %v509, 1
      %v511 = vsel %vm510, %v504, 0.0
      %v512 = vrot.slane %v511, 4
      %v513 = vmax.f32 %v511, %v512
      %v514 = vrot.slane %v513, 2
      %v515 = vmax.f32 %v513, %v514
      %v516 = vrot.slane %v515, 1
      %v517 = vmax.f32 %v515, %v516
      %v518 = vmax.f32 %v468, %v517
      %v519 = vld [vmem:[%s181 + $0x30] sm:$0xff]
      %521 = vset.pattern.permute.xlu0 1
      %522 = vperm.xlu0 %521, %v519
      %v523 = vpop.permute.xlu0 %522
      %v525 = vmin.f32 %v203, %v523
      %526 = vset.pattern.permute.xlu0 0
      %527 = vperm.xlu0 %526, %v519
      %v528 = vpop.permute.xlu0 %527
      %v530 = vmax.f32 %v213, %v528
      %v531 = vsub.f32 %v525, %v530
      %v532 = vmax.f32 %v531, 0.0
      %533 = vset.pattern.permute.xlu0 3
      %534 = vperm.xlu0 %533, %v519
      %v535 = vpop.permute.xlu0 %534
      %v537 = vmin.f32 %v224, %v535
      %538 = vset.pattern.permute.xlu0 2
      %539 = vperm.xlu0 %538, %v519
      %v540 = vpop.permute.xlu0 %539
      %v542 = vmax.f32 %v233, %v540
      %v543 = vsub.f32 %v537, %v542
      %v544 = vmax.f32 %v543, 0.0
      %v545 = vmul.f32 %v532, %v544
      %546 = vset.pattern.permute.xlu0 4
      %547 = vperm.xlu0 %546, %v519
      %v548 = vpop.permute.xlu0 %547
      %v550 = vadd.f32 %v245, %v548
      %v551 = vsub.f32 %v550, %v545
      %v552 = vmax.f32 %v551, 1e-12
      %v553 = vrcp.pop %v552
      %v554 = vmul.f32 %v545, %v553
      %vm555 = vcmp.gt.f32.partialorder %v519, 0.0
      %v556 = vsel %vm555, 1, 0
      %557 = vset.pattern.permute.xlu0 5
      %558 = vperm.xlu0 %557, %v556
      %v559 = vpop.permute.xlu0 %558
      %vm560 = vcmp.eq.s32.totalorder %v559, 1
      %v561 = vsel %vm560, %v554, 0.0
      %v562 = vrot.slane %v561, 4
      %v563 = vmax.f32 %v561, %v562
      %v564 = vrot.slane %v563, 2
      %v565 = vmax.f32 %v563, %v564
      %v566 = vrot.slane %v565, 1
      %v567 = vmax.f32 %v565, %v566
      %v568 = vmax.f32 %v518, %v567
      %569 = vst [vmem:[%s187] sm:$0x1] %v568
      %p570 = scmp.lt.s32.totalorder %s17, 1
      %s571 = scalar_select %p570, %s17, 1
      %p572 = scmp.lt.s32.totalorder %s18, 0
      %s573 = scalar_select %p572, %s18, 0
      %s574 = sadd.s32 %s573, %s571
      %s575 = scalar_lea.vmem %s2, %s574
      // Predicated region
      $region29: #{v3_loss_forward.4} parent=27 // pred_check
        %p576 = pneg %p99
      $region30: #{v3_loss_forward.4} parent=27 // pred_check_branch
        %578 = sbr.rel (%p576) target = $region32
      $region31: #{v3_loss_forward.4} parent=27 // pred_region
        _
      $region32: #{v3_loss_forward.4} parent=27 // pred_fallthru
        _
    $region28: #{v3_loss_forward.4} parent=5 // pred_fallthru
      _
    %p579 = scmp.le.s32.totalorder 2, %s8
    // Predicated region
    $region33: #{v3_loss_forward.4} parent=5 // pred_check
      %p580 = pneg %p579
    $region34: #{v3_loss_forward.4} parent=5 // pred_check_branch
      %582 = sbr.rel (%p580) target = $region36
    $region35: #{v3_loss_forward.4} parent=5 // pred_region
      %s583 = ssub.s32 %s8, 2
      // Predicated region
      $region37: #{v3_loss_forward.4} parent=35 // pred_check
        %p584 = pneg %p105
      $region38: #{v3_loss_forward.4} parent=35 // pred_check_branch
        %586 = sbr.rel (%p584) target = $region40
      $region39: #{v3_loss_forward.4} parent=35 // pred_region
        %p587 = scmp.lt.s32.totalorder %s19, 1
        %s588 = scalar_select %p587, %s19, 1
        %p589 = scmp.lt.s32.totalorder %s20, 0
        %s590 = scalar_select %p589, %s20, 0
        %s591 = sadd.s32 %s590, %s588
        %s592 = scalar_lea.vmem %s2, %s591
      $region40: #{v3_loss_forward.4} parent=35 // pred_fallthru
        _
    $region36: #{v3_loss_forward.4} parent=5 // pred_fallthru
      _
  $region6: #{v3_loss_forward.4} parent=0 // loop_footer
    %s12 = sadd.s32 1, %s8
  $region7: #{v3_loss_forward.4} parent=0 // loop_footer_branch
    %7 = sbr.rel target = $region3
  $region8: #{v3_loss_forward.4} parent=0 // loop_exit
    _

// kernel: v3_loss_forward.5
$region0: #{v3_loss_forward.5}
  #allocation0 [shape = 'u32[]', space=smem, size = 0x4, offset = 0x4, fixed_abs, tag = 'smem constant byte address 0x4 - core index']
  #allocation1 [shape = 'u32[144,128]{1,0:T(1,128)}', space=vmem, size = 0x12000, scoped, tag = 'internal scratch']
  %s0 = inlined_call_operand.vmem [shape: f32[2,8,128], index: 0, kind: input, shape index: {}]
  %s1 = inlined_call_operand.vmem [shape: f32[2,4,128], index: 1, kind: input, shape index: {}]
  %s2 = inlined_call_operand.vmem [shape: f32[2,3,128], index: 2, kind: input, shape index: {}]
  %s3 = inlined_call_operand.vmem [shape: f32[1,1,128], index: 3, kind: output, shape index: {}]
  %s4 = sld [smem:[#allocation0]]
  $region22: #{v3_loss_forward.5} parent=0
    _
  %s6 = ssub.s32 1, %s4
  %s7 = scalar_select 0, %s6, %s4
  // Predicated region
  $region2: #{v3_loss_forward.5} parent=0 // pred_check
    _
  $region3: #{v3_loss_forward.5} parent=0 // pred_check_branch
    %9 = sbr.rel (0) target = $region5
  $region4: #{v3_loss_forward.5} parent=0 // pred_region
    _
  $region5: #{v3_loss_forward.5} parent=0 // pred_fallthru
    _
  // Predicated region
  $region6: #{v3_loss_forward.5} parent=0 // pred_check
    _
  $region7: #{v3_loss_forward.5} parent=0 // pred_check_branch
    %11 = sbr.rel (0) target = $region9
  $region8: #{v3_loss_forward.5} parent=0 // pred_region
    _
  $region9: #{v3_loss_forward.5} parent=0 // pred_fallthru
    _
  // Predicated region
  $region10: #{v3_loss_forward.5} parent=0 // pred_check
    _
  $region11: #{v3_loss_forward.5} parent=0 // pred_check_branch
    %13 = sbr.rel (0) target = $region13
  $region12: #{v3_loss_forward.5} parent=0 // pred_region
    _
  $region13: #{v3_loss_forward.5} parent=0 // pred_fallthru
    _
  %v14 = vld [vmem:[%s0] sm:$0xff]
  %v15 = vld [vmem:[%s0 + $0x8] sm:$0xff]
  %v16 = vld [vmem:[%s1] sm:$0xf]
  %v17 = vld [vmem:[%s1 + $0x4] sm:$0xf]
  %v20 = vrot.slane %v14, 4
  %v21 = vrot.slane %v15, 4
  %v24 = vsub.f32 %v14, %v20
  %v25 = vsub.f32 %v15, %v21
  %v26 = vlaneseq
  %v27 = vshrl.u32 %v26, 7
  %v28 = vsub.s32 2, %v27
  %v29 = vrot.slane %v16, %v28
  %v30 = vlaneseq
  %v31 = vshrl.u32 %v30, 7
  %v32 = vsub.s32 2, %v31
  %v33 = vrot.slane %v17, %v32
  %v34 = vmul.f32 %v24, %v29
  %v35 = vmul.f32 %v25, %v33
  %v38 = vrot.slane %v16, 1
  %v39 = vrot.slane %v17, 1
  %v42 = vsub.f32 %v16, %v38
  %v43 = vsub.f32 %v17, %v39
  %v44 = vrot.slane %v16, 3
  %v45 = vrot.slane %v17, 3
  %v48 = vmul.f32 %v42, %v44
  %v49 = vmul.f32 %v43, %v45
  %v50 = vmul.f32 %v34, %v34
  %v51 = vmul.f32 %v35, %v35
  %vm52 = vcmask 1043456
  %v53 = vsel %vm52, %v50, 0.0
  %v54 = vsel %vm52, %v51, 0.0
  %v55 = vadd.f32 %v53, %v54
  %v56 = vrot.slane %v55, 4
  %v57 = vadd.f32 %v55, %v56
  %v58 = vrot.slane %v57, 2
  %v59 = vadd.f32 %v57, %v58
  %v60 = vrot.slane %v59, 1
  %v61 = vadd.f32 %v59, %v60
  %v62 = vmul.f32 %v48, %v48
  %v63 = vmul.f32 %v49, %v49
  %vm64 = vcmask 1040384
  %v65 = vsel %vm64, %v62, 0.0
  %v66 = vsel %vm64, %v63, 0.0
  %v67 = vadd.f32 %v65, %v66
  %v68 = vrot.slane %v67, 4
  %v69 = vadd.f32 %v67, %v68
  %v70 = vrot.slane %v69, 2
  %v71 = vadd.f32 %v69, %v70
  %v72 = vrot.slane %v71, 1
  %v73 = vadd.f32 %v71, %v72
  %v74 = vadd.f32 %v61, %v73
  %v75 = vmul.f32 %v74, 0.5
  %v76 = vld [vmem:[%s2] sm:$0x7]
  %v77 = vld [vmem:[%s2 + $0x4] sm:$0x7]
  %v78 = vsub.f32 1.0, %v76
  %v79 = vsub.f32 1.0, %v77
  %v80 = vlog2.pop %v78
  %v81 = vmul.f32 %v80, 0.6931472
  %v82 = vlog2.pop %v79
  %v83 = vmul.f32 %v82, 0.6931472
  %v84 = vmax.f32 %v81, -100.0
  %v85 = vmax.f32 %v83, -100.0
  %vm86 = vcmask 1042432
  %v87 = vsel %vm86, %v84, 0.0
  %v88 = vsel %vm86, %v85, 0.0
  %v89 = vadd.f32 %v87, %v88
  %v90 = vrot.slane %v89, 4
  %v91 = vadd.f32 %v89, %v90
  %v92 = vrot.slane %v91, 2
  %v93 = vadd.f32 %v91, %v92
  %v94 = vrot.slane %v93, 1
  %v95 = vadd.f32 %v93, %v94
  %v96 = vsub.f32 %v75, %v95
  %97 = vst [vmem:[%s3] sm:$0x1] %v96
  // Predicated region
  $region14: #{v3_loss_forward.5} parent=0 // pred_check
    _
  $region15: #{v3_loss_forward.5} parent=0 // pred_check_branch
    %99 = sbr.rel (0) target = $region17
  $region16: #{v3_loss_forward.5} parent=0 // pred_region
    _
  $region17: #{v3_loss_forward.5} parent=0 // pred_fallthru
    _
  // Predicated region
  $region18: #{v3_loss_forward.5} parent=0 // pred_check
    _
  $region19: #{v3_loss_forward.5} parent=0 // pred_check_branch
    %101 = sbr.rel (0) target = $region21
  $region20: #{v3_loss_forward.5} parent=0 // pred_region
    _
  $region21: #{v3_loss_forward.5} parent=0 // pred_fallthru
    _

</llo_original>
